<compile_context>
chip_gen: v7x
topology: tpu7x:2x2x1
jax: 0.10.0
libtpu: 0.0.40
codegen_flags: <defaults>
</compile_context>

<pallas_src>
import functools

import jax
import jax.numpy as jnp
import numpy as np
from jax.experimental import pallas as pl
from jax.experimental.pallas import tpu as pltpu


# ----------------------------------------------------------------------------
# Fused residual branch + ECA attention (shared by the three shortcut variants)
#   [1x1 conv + BN1 + ReLU] -> [3x3 conv (stride) + BN2 + ReLU]
#   -> [1x1 conv + BN3 + ReLU] -> ECA (pool -> 3-tap channel conv -> sigmoid)
# ----------------------------------------------------------------------------
def _residual_and_attention(x_ref, w1_ref, s1_ref, b1_ref, w2_ref, s2_ref, b2_ref,
                            w3_ref, s3_ref, b3_ref, we_ref, tpad_ref,
                            *, h, w, ho, wo, stride, cmid, cexp):
    # ---- 1x1 conv + BN1 + ReLU on the UNPADDED image (no wasted border work) ----
    x = x_ref[0].astype(jnp.bfloat16)                                    # (h*w, cin)
    t = jnp.dot(x, w1_ref[...], preferred_element_type=jnp.float32)      # (h*w, cmid)
    t = jnp.maximum(t * s1_ref[...] + b1_ref[...], 0.0)

    # ---- in-kernel zero padding for the 3x3 conv (padding applies AFTER conv1) ----
    # f32 VMEM scratch: zero the whole (hp, wp, cmid) buffer, then store the interior.
    tpad_ref[...] = jnp.zeros_like(tpad_ref)
    tpad_ref[1:1 + h, 1:1 + w, :] = t.reshape(h, w, cmid)

    # ---- 3x3 conv with stride: 9 per-tap matmuls accumulated in f32 ----
    # (replaces the lane-axis im2col concatenate; each tap is a plain ref slice load)
    acc = jnp.zeros((ho * wo, cmid), jnp.float32)
    for k in range(9):
        dy, dx = divmod(k, 3)
        if stride == 1:
            piece = tpad_ref[dy:dy + ho, dx:dx + wo, :]                  # (ho, wo, cmid)
        else:
            # TODO(synk): strided-window ref load (stride>1 downsampling blocks);
            #             not exercised by the smoke test below.
            piece = tpad_ref[pl.ds(dy, ho, stride=stride),
                             pl.ds(dx, wo, stride=stride), :]
        acc += jnp.dot(piece.reshape(ho * wo, cmid).astype(jnp.bfloat16),
                       w2_ref[k], preferred_element_type=jnp.float32)
    r2 = jnp.maximum(acc * s2_ref[...] + b2_ref[...], 0.0).astype(jnp.bfloat16)

    # ---- 1x1 conv + BN3 + ReLU ----
    r3 = jnp.dot(r2, w3_ref[...], preferred_element_type=jnp.float32)    # (n, cexp)
    r3 = jnp.maximum(r3 * s3_ref[...] + b3_ref[...], 0.0)

    # ---- ECA: global avg pool -> 3-tap 1D channel conv (zero padded) -> sigmoid ----
    p = jnp.sum(r3, axis=0, keepdims=True) * (1.0 / (ho * wo))           # (1, cexp)
    left = jnp.roll(p, 1, axis=1)      # left[i]  = p[i-1]   (lane rotate, XLU)
    right = jnp.roll(p, -1, axis=1)    # right[i] = p[i+1]
    ch = jax.lax.broadcasted_iota(jnp.int32, (1, cexp), 1)
    left = jnp.where(ch == 0, 0.0, left)
    right = jnp.where(ch == cexp - 1, 0.0, right)
    z = we_ref[0] * left + we_ref[1] * p + we_ref[2] * right
    att = 1.0 / (1.0 + jnp.exp(-z))                                      # exp on the EUP
    return r3, att


# ----------------------------------------------------------------------------
# Kernel variants: identity shortcut / projection (stride=1) / projection (strided)
# ----------------------------------------------------------------------------
def _kernel_id(x_ref, w1_ref, s1_ref, b1_ref, w2_ref, s2_ref, b2_ref,
               w3_ref, s3_ref, b3_ref, we_ref,
               o_ref, tpad_ref, *, h, w, ho, wo, stride, cmid, cexp):
    r3, att = _residual_and_attention(
        x_ref, w1_ref, s1_ref, b1_ref, w2_ref, s2_ref, b2_ref,
        w3_ref, s3_ref, b3_ref, we_ref, tpad_ref,
        h=h, w=w, ho=ho, wo=wo, stride=stride, cmid=cmid, cexp=cexp)
    sc = x_ref[0]                      # identity shortcut (f32; stride==1, cin==cexp)
    o_ref[0] = jnp.maximum(r3 * att + sc, 0.0).astype(o_ref.dtype)


def _kernel_proj_s1(x_ref, w1_ref, s1_ref, b1_ref, w2_ref, s2_ref, b2_ref,
                    w3_ref, s3_ref, b3_ref, we_ref, ws_ref, ss_ref, bs_ref,
                    o_ref, tpad_ref, *, h, w, ho, wo, stride, cmid, cexp):
    r3, att = _residual_and_attention(
        x_ref, w1_ref, s1_ref, b1_ref, w2_ref, s2_ref, b2_ref,
        w3_ref, s3_ref, b3_ref, we_ref, tpad_ref,
        h=h, w=w, ho=ho, wo=wo, stride=stride, cmid=cmid, cexp=cexp)
    # shortcut 1x1 conv + BN reuses the already-resident x block (stride == 1)
    sc = jnp.dot(x_ref[0].astype(jnp.bfloat16), ws_ref[...],
                 preferred_element_type=jnp.float32)
    sc = sc * ss_ref[...] + bs_ref[...]
    o_ref[0] = jnp.maximum(r3 * att + sc, 0.0).astype(o_ref.dtype)


def _kernel_proj_strided(x_ref, w1_ref, s1_ref, b1_ref, w2_ref, s2_ref, b2_ref,
                         w3_ref, s3_ref, b3_ref, we_ref,
                         xs_ref, ws_ref, ss_ref, bs_ref,
                         o_ref, tpad_ref, *, h, w, ho, wo, stride, cmid, cexp):
    r3, att = _residual_and_attention(
        x_ref, w1_ref, s1_ref, b1_ref, w2_ref, s2_ref, b2_ref,
        w3_ref, s3_ref, b3_ref, we_ref, tpad_ref,
        h=h, w=w, ho=ho, wo=wo, stride=stride, cmid=cmid, cexp=cexp)
    # strided 1x1 shortcut conv == subsample (wrapper) + 1x1 conv + BN (here)
    sc = jnp.dot(xs_ref[0], ws_ref[...], preferred_element_type=jnp.float32)
    sc = sc * ss_ref[...] + bs_ref[...]
    o_ref[0] = jnp.maximum(r3 * att + sc, 0.0).astype(o_ref.dtype)


# ----------------------------------------------------------------------------
# Parameter setup (deterministic, synthetic) and the block forward wrapper
# ----------------------------------------------------------------------------
def fold_bn(gamma, beta, mean, var, eps=1e-5):
    scale = gamma / jnp.sqrt(var + eps)
    bias = beta - mean * scale
    return scale, bias


def init_params(key, in_channels, out_channels, k_size=3, expansion=4,
                with_shortcut=True):
    cexp = out_channels * expansion
    keys = jax.random.split(key, 24)

    def w_init(k, shape):
        return jax.random.normal(k, shape, jnp.float32) * 0.1

    def bn_init(kg, kb, km, kv, c):
        gamma = jax.random.uniform(kg, (c,), jnp.float32, 0.5, 1.5)
        beta = jax.random.normal(kb, (c,), jnp.float32) * 0.1
        mean = jax.random.normal(km, (c,), jnp.float32) * 0.1
        var = jax.random.uniform(kv, (c,), jnp.float32, 0.5, 1.5)
        return fold_bn(gamma, beta, mean, var)

    P = {}
    P['w1'] = w_init(keys[0], (in_channels, out_channels))          # 1x1 (Cin, Cmid)
    P['s1'], P['b1'] = bn_init(keys[1], keys[2], keys[3], keys[4], out_channels)
    P['w2'] = w_init(keys[5], (3, 3, out_channels, out_channels))   # 3x3 (kh, kw, I, O)
    P['s2'], P['b2'] = bn_init(keys[6], keys[7], keys[8], keys[9], out_channels)
    P['w3'] = w_init(keys[10], (out_channels, cexp))                # 1x1 (Cmid, Cexp)
    P['s3'], P['b3'] = bn_init(keys[11], keys[12], keys[13], keys[14], cexp)
    P['we'] = w_init(keys[15], (k_size,))                           # ECA 1D conv taps
    if with_shortcut:
        P['ws'] = w_init(keys[16], (in_channels, cexp))
        P['ss'], P['bs'] = bn_init(keys[17], keys[18], keys[19], keys[20], cexp)
    else:
        P['ws'] = None
    return P


def bottleneck_eca_forward(x_nchw, params, stride):
    x = jnp.transpose(x_nchw, (0, 2, 3, 1))          # NCHW -> NHWC (block boundary only)
    b, h, w, cin = x.shape
    cmid = params['w1'].shape[1]
    cexp = params['w3'].shape[1]
    ho = (h - 1) // stride + 1
    wo = (w - 1) // stride + 1
    hp = h + 2
    wp = -(-(w + 2) // 8) * 8                        # padded width, sublane multiple

    x_flat = x.reshape(b, h * w, cin)                # f32; bf16 cast happens in-kernel

    w1 = params['w1'].astype(jnp.bfloat16)
    w2 = params['w2'].reshape(9, cmid, cmid).astype(jnp.bfloat16)    # tap-major (dy, dx)
    w3 = params['w3'].astype(jnp.bfloat16)
    s1 = params['s1'].reshape(1, cmid); b1 = params['b1'].reshape(1, cmid)
    s2 = params['s2'].reshape(1, cmid); b2 = params['b2'].reshape(1, cmid)
    s3 = params['s3'].reshape(1, cexp); b3 = params['b3'].reshape(1, cexp)

    kw = dict(h=h, w=w, ho=ho, wo=wo, stride=stride, cmid=cmid, cexp=cexp)
    common_specs = [
        pl.BlockSpec((1, h * w, cin), lambda i: (i, 0, 0)),          # x (f32)
        pl.BlockSpec((cin, cmid), lambda i: (0, 0)),                 # w1 (bf16)
        pl.BlockSpec((1, cmid), lambda i: (0, 0)),                   # s1
        pl.BlockSpec((1, cmid), lambda i: (0, 0)),                   # b1
        pl.BlockSpec((9, cmid, cmid), lambda i: (0, 0, 0)),          # w2 (bf16, 9 taps)
        pl.BlockSpec((1, cmid), lambda i: (0, 0)),                   # s2
        pl.BlockSpec((1, cmid), lambda i: (0, 0)),                   # b2
        pl.BlockSpec((cmid, cexp), lambda i: (0, 0)),                # w3 (bf16)
        pl.BlockSpec((1, cexp), lambda i: (0, 0)),                   # s3
        pl.BlockSpec((1, cexp), lambda i: (0, 0)),                   # b3
        pl.BlockSpec(memory_space=pltpu.MemorySpace.SMEM),           # we: 3 ECA taps
    ]
    common_args = [x_flat, w1, s1, b1, w2, s2, b2, w3, s3, b3, params['we']]

    if params['ws'] is not None:
        ws = params['ws'].astype(jnp.bfloat16)
        ss = params['ss'].reshape(1, cexp); bs = params['bs'].reshape(1, cexp)
        proj_specs = [
            pl.BlockSpec((cin, cexp), lambda i: (0, 0)),             # ws (bf16)
            pl.BlockSpec((1, cexp), lambda i: (0, 0)),               # ss
            pl.BlockSpec((1, cexp), lambda i: (0, 0)),               # bs
        ]
        if stride == 1:
            kern = functools.partial(_kernel_proj_s1, **kw)
            in_specs = common_specs + proj_specs
            args = common_args + [ws, ss, bs]
        else:
            xs = x[:, ::stride, ::stride, :].reshape(b, ho * wo, cin).astype(jnp.bfloat16)
            kern = functools.partial(_kernel_proj_strided, **kw)
            in_specs = (common_specs
                        + [pl.BlockSpec((1, ho * wo, cin), lambda i: (i, 0, 0))]
                        + proj_specs)
            args = common_args + [xs, ws, ss, bs]
    else:
        assert stride == 1 and cin == cexp, "identity shortcut needs stride=1, cin=cexp"
        kern = functools.partial(_kernel_id, **kw)
        in_specs = common_specs
        args = common_args

    out = pl.pallas_call(
        kern,
        out_shape=jax.ShapeDtypeStruct((b, ho * wo, cexp), jnp.float32),
        grid=(b,),
        in_specs=in_specs,
        out_specs=pl.BlockSpec((1, ho * wo, cexp), lambda i: (i, 0, 0)),
        scratch_shapes=[pltpu.VMEM((hp, wp, cmid), jnp.float32)],    # padded conv1 out
        compiler_params=pltpu.CompilerParams(
            dimension_semantics=("parallel",),
            vmem_limit_bytes=32 * 1024 * 1024,
        ),
    )(*args)

    out = out.reshape(b, ho, wo, cexp)
    return jnp.transpose(out, (0, 3, 1, 2))          # NHWC -> NCHW


# ----------------------------------------------------------------------------
# Pure-JAX (XLA) reference for correctness checking (mirrors the bf16 cast points)
# ----------------------------------------------------------------------------
def ref_forward(x, P, stride):
    def conv2d(inp, wgt, s=1, pad=0):
        return jax.lax.conv_general_dilated(
            inp.astype(jnp.bfloat16), wgt.astype(jnp.bfloat16),
            window_strides=(s, s), padding=[(pad, pad), (pad, pad)],
            dimension_numbers=('NCHW', 'OIHW', 'NCHW'),
            preferred_element_type=jnp.float32)

    def affine(inp, sc, bi):
        return inp * sc[None, :, None, None] + bi[None, :, None, None]

    w1 = P['w1'].T[:, :, None, None]
    r = jnp.maximum(affine(conv2d(x, w1), P['s1'], P['b1']), 0.0)
    w2 = jnp.transpose(P['w2'], (3, 2, 0, 1))
    r = jnp.maximum(affine(conv2d(r, w2, s=stride, pad=1), P['s2'], P['b2']), 0.0)
    w3 = P['w3'].T[:, :, None, None]
    r = jnp.maximum(affine(conv2d(r, w3), P['s3'], P['b3']), 0.0)

    p = r.mean(axis=(2, 3))                          # (B, C) global avg pool
    pp = jnp.pad(p, ((0, 0), (1, 1)))
    we = P['we']
    z = we[0] * pp[:, :-2] + we[1] * pp[:, 1:-1] + we[2] * pp[:, 2:]
    att = 1.0 / (1.0 + jnp.exp(-z))
    r = r * att[:, :, None, None]

    if P['ws'] is not None:
        ws = P['ws'].T[:, :, None, None]
        sc = affine(conv2d(x, ws, s=stride), P['ss'], P['bs'])
    else:
        sc = x
    return jnp.maximum(r + sc, 0.0)


if __name__ == "__main__":
    # Config A: projection shortcut (cin != 4*out_ch), cexp = 128 -> lane-dense output.
    # Config B: identity shortcut (cin == 4*out_ch, stride == 1).
    # TODO(synk): stride=2 downsampling blocks use the strided-window ref-load path and
    #             are not exercised by this smoke test.
    configs = [
        # (B, CIN, OUT_CH, H, W, STRIDE)
        (4, 16, 32, 16, 16, 1),      # projection-shortcut path
        (2, 128, 32, 8, 8, 1),       # identity-shortcut path
    ]
    key = jax.random.PRNGKey(0)
    for (B, CIN, OUT_CH, H, W, STRIDE) in configs:
        key, kx, kp = jax.random.split(key, 3)
        x = jax.random.normal(kx, (B, CIN, H, W), jnp.float32)
        with_shortcut = (STRIDE != 1) or (CIN != OUT_CH * 4)
        P = init_params(kp, CIN, OUT_CH, with_shortcut=with_shortcut)

        out = jax.block_until_ready(bottleneck_eca_forward(x, P, STRIDE))
        ref = ref_forward(x, P, STRIDE)
        np.testing.assert_allclose(np.asarray(out), np.asarray(ref),
                                   rtol=1e-3, atol=1e-3)
    print("KERNEL_OK")
</pallas_src>

<mosaic_0001>
module attributes {stable_mosaic.version = 11 : i64} {
  func.func @_kernel_proj_s1(%arg0: i32, %arg1: memref<1x256x16xf32, #tpu.memory_space<vmem>>, %arg2: memref<16x32xbf16, #tpu.memory_space<vmem>>, %arg3: memref<1x32xf32, #tpu.memory_space<vmem>>, %arg4: memref<1x32xf32, #tpu.memory_space<vmem>>, %arg5: memref<9x32x32xbf16, #tpu.memory_space<vmem>>, %arg6: memref<1x32xf32, #tpu.memory_space<vmem>>, %arg7: memref<1x32xf32, #tpu.memory_space<vmem>>, %arg8: memref<32x128xbf16, #tpu.memory_space<vmem>>, %arg9: memref<1x128xf32, #tpu.memory_space<vmem>>, %arg10: memref<1x128xf32, #tpu.memory_space<vmem>>, %arg11: memref<3xf32, #tpu.memory_space<smem>>, %arg12: memref<16x128xbf16, #tpu.memory_space<vmem>>, %arg13: memref<1x128xf32, #tpu.memory_space<vmem>>, %arg14: memref<1x128xf32, #tpu.memory_space<vmem>>, %arg15: memref<1x256x128xf32, #tpu.memory_space<vmem>>, %arg16: memref<18x24x32xf32, #tpu.memory_space<vmem>>) attributes {dimension_semantics = [#tpu.dimension_semantics<parallel>], iteration_bounds = array<i64: 4>, scalar_prefetch = 0 : i64, scratch_operands = 1 : i64, tpu.core_type = #tpu.core_type<tc>, window_params = [{transform_indices = @transform_0, window_bounds = array<i64: 1, 256, 16>}, {pipeline_mode = #tpu.pipeline_mode<synchronous>, transform_indices = @transform_1, window_bounds = array<i64: 16, 32>}, {pipeline_mode = #tpu.pipeline_mode<synchronous>, transform_indices = @transform_2, window_bounds = array<i64: 1, 32>}, {pipeline_mode = #tpu.pipeline_mode<synchronous>, transform_indices = @transform_3, window_bounds = array<i64: 1, 32>}, {pipeline_mode = #tpu.pipeline_mode<synchronous>, transform_indices = @transform_4, window_bounds = array<i64: 9, 32, 32>}, {pipeline_mode = #tpu.pipeline_mode<synchronous>, transform_indices = @transform_5, window_bounds = array<i64: 1, 32>}, {pipeline_mode = #tpu.pipeline_mode<synchronous>, transform_indices = @transform_6, window_bounds = array<i64: 1, 32>}, {pipeline_mode = #tpu.pipeline_mode<synchronous>, transform_indices = @transform_7, window_bounds = array<i64: 32, 128>}, {pipeline_mode = #tpu.pipeline_mode<synchronous>, transform_indices = @transform_8, window_bounds = array<i64: 1, 128>}, {pipeline_mode = #tpu.pipeline_mode<synchronous>, transform_indices = @transform_9, window_bounds = array<i64: 1, 128>}, {transform_indices = @transform_10, window_bounds = array<i64: 3>}, {pipeline_mode = #tpu.pipeline_mode<synchronous>, transform_indices = @transform_11, window_bounds = array<i64: 16, 128>}, {pipeline_mode = #tpu.pipeline_mode<synchronous>, transform_indices = @transform_12, window_bounds = array<i64: 1, 128>}, {pipeline_mode = #tpu.pipeline_mode<synchronous>, transform_indices = @transform_13, window_bounds = array<i64: 1, 128>}, {transform_indices = @transform_14, window_bounds = array<i64: 1, 256, 128>}]} {
    %c0 = arith.constant 0 : index
    %c0_0 = arith.constant 0 : index
    %c0_1 = arith.constant 0 : index
    %0 = vector.load %arg1[%c0, %c0_0, %c0_1] : memref<1x256x16xf32, #tpu.memory_space<vmem>>, vector<1x256x16xf32>
    %1 = vector.shape_cast %0 : vector<1x256x16xf32> to vector<256x16xf32>
    %2 = arith.truncf %1 : vector<256x16xf32> to vector<256x16xbf16>
    %c0_2 = arith.constant 0 : index
    %c0_3 = arith.constant 0 : index
    %3 = vector.load %arg2[%c0_2, %c0_3] : memref<16x32xbf16, #tpu.memory_space<vmem>>, vector<16x32xbf16>
    %cst = arith.constant dense<0.000000e+00> : vector<256x32xf32>
    %4 = tpu.matmul %2, %3, %cst {dimension_numbers = #tpu.dot_dimension_numbers<[1], [0], [0], [1], [0, 0, 1, 1], [], []>} : vector<256x16xbf16>, vector<16x32xbf16>, vector<256x32xf32> -> vector<256x32xf32>
    %c0_4 = arith.constant 0 : index
    %c0_5 = arith.constant 0 : index
    %5 = vector.load %arg3[%c0_4, %c0_5] : memref<1x32xf32, #tpu.memory_space<vmem>>, vector<1x32xf32>
    %6 = vector.broadcast %5 : vector<1x32xf32> to vector<256x32xf32>
    %7 = arith.mulf %4, %6 : vector<256x32xf32>
    %c0_6 = arith.constant 0 : index
    %c0_7 = arith.constant 0 : index
    %8 = vector.load %arg4[%c0_6, %c0_7] : memref<1x32xf32, #tpu.memory_space<vmem>>, vector<1x32xf32>
    %9 = vector.broadcast %8 : vector<1x32xf32> to vector<256x32xf32>
    %10 = arith.addf %7, %9 : vector<256x32xf32>
    %cst_8 = arith.constant 0.000000e+00 : f32
    %11 = vector.broadcast %cst_8 : f32 to vector<256x32xf32>
    %12 = arith.maximumf %10, %11 : vector<256x32xf32>
    %cst_9 = arith.constant 0.000000e+00 : f32
    %13 = vector.broadcast %cst_9 : f32 to vector<18x24x32xf32>
    %c0_10 = arith.constant 0 : index
    %c0_11 = arith.constant 0 : index
    %c0_12 = arith.constant 0 : index
    %14 = vector.load %arg16[%c0_10, %c0_11, %c0_12] : memref<18x24x32xf32, #tpu.memory_space<vmem>>, vector<18x24x32xf32>
    tpu.vector_store %arg16[%c0_10, %c0_11, %c0_12], %13 {strides = array<i32>} : memref<18x24x32xf32, #tpu.memory_space<vmem>>, vector<18x24x32xf32>,
    %15 = vector.shape_cast %12 : vector<256x32xf32> to vector<16x16x32xf32>
    %c1 = arith.constant 1 : index
    %c1_13 = arith.constant 1 : index
    %c0_14 = arith.constant 0 : index
    %16 = vector.load %arg16[%c1, %c1_13, %c0_14] : memref<18x24x32xf32, #tpu.memory_space<vmem>>, vector<16x16x32xf32>
    tpu.vector_store %arg16[%c1, %c1_13, %c0_14], %15 {strides = array<i32>} : memref<18x24x32xf32, #tpu.memory_space<vmem>>, vector<16x16x32xf32>,
    %cst_15 = arith.constant 0.000000e+00 : f32
    %17 = vector.broadcast %cst_15 : f32 to vector<256x32xf32>
    %c0_16 = arith.constant 0 : index
    %c0_17 = arith.constant 0 : index
    %c0_18 = arith.constant 0 : index
    %18 = vector.load %arg16[%c0_16, %c0_17, %c0_18] : memref<18x24x32xf32, #tpu.memory_space<vmem>>, vector<16x16x32xf32>
    %19 = vector.shape_cast %18 : vector<16x16x32xf32> to vector<256x32xf32>
    %20 = arith.truncf %19 : vector<256x32xf32> to vector<256x32xbf16>
    %c0_19 = arith.constant 0 : index
    %c0_20 = arith.constant 0 : index
    %c0_21 = arith.constant 0 : index
    %21 = vector.load %arg5[%c0_19, %c0_20, %c0_21] : memref<9x32x32xbf16, #tpu.memory_space<vmem>>, vector<1x32x32xbf16>
    %22 = vector.shape_cast %21 : vector<1x32x32xbf16> to vector<32x32xbf16>
    %cst_22 = arith.constant dense<0.000000e+00> : vector<256x32xf32>
    %23 = tpu.matmul %20, %22, %cst_22 {dimension_numbers = #tpu.dot_dimension_numbers<[1], [0], [0], [1], [0, 0, 1, 1], [], []>} : vector<256x32xbf16>, vector<32x32xbf16>, vector<256x32xf32> -> vector<256x32xf32>
    %24 = arith.addf %17, %23 : vector<256x32xf32>
    %c0_23 = arith.constant 0 : index
    %c1_24 = arith.constant 1 : index
    %c0_25 = arith.constant 0 : index
    %25 = vector.load %arg16[%c0_23, %c1_24, %c0_25] : memref<18x24x32xf32, #tpu.memory_space<vmem>>, vector<16x16x32xf32>
    %26 = vector.shape_cast %25 : vector<16x16x32xf32> to vector<256x32xf32>
    %27 = arith.truncf %26 : vector<256x32xf32> to vector<256x32xbf16>
    %c1_26 = arith.constant 1 : index
    %c0_27 = arith.constant 0 : index
    %c0_28 = arith.constant 0 : index
    %28 = vector.load %arg5[%c1_26, %c0_27, %c0_28] : memref<9x32x32xbf16, #tpu.memory_space<vmem>>, vector<1x32x32xbf16>
    %29 = vector.shape_cast %28 : vector<1x32x32xbf16> to vector<32x32xbf16>
    %cst_29 = arith.constant dense<0.000000e+00> : vector<256x32xf32>
    %30 = tpu.matmul %27, %29, %cst_29 {dimension_numbers = #tpu.dot_dimension_numbers<[1], [0], [0], [1], [0, 0, 1, 1], [], []>} : vector<256x32xbf16>, vector<32x32xbf16>, vector<256x32xf32> -> vector<256x32xf32>
    %31 = arith.addf %24, %30 : vector<256x32xf32>
    %c0_30 = arith.constant 0 : index
    %c2 = arith.constant 2 : index
    %c0_31 = arith.constant 0 : index
    %32 = vector.load %arg16[%c0_30, %c2, %c0_31] : memref<18x24x32xf32, #tpu.memory_space<vmem>>, vector<16x16x32xf32>
    %33 = vector.shape_cast %32 : vector<16x16x32xf32> to vector<256x32xf32>
    %34 = arith.truncf %33 : vector<256x32xf32> to vector<256x32xbf16>
    %c2_32 = arith.constant 2 : index
    %c0_33 = arith.constant 0 : index
    %c0_34 = arith.constant 0 : index
    %35 = vector.load %arg5[%c2_32, %c0_33, %c0_34] : memref<9x32x32xbf16, #tpu.memory_space<vmem>>, vector<1x32x32xbf16>
    %36 = vector.shape_cast %35 : vector<1x32x32xbf16> to vector<32x32xbf16>
    %cst_35 = arith.constant dense<0.000000e+00> : vector<256x32xf32>
    %37 = tpu.matmul %34, %36, %cst_35 {dimension_numbers = #tpu.dot_dimension_numbers<[1], [0], [0], [1], [0, 0, 1, 1], [], []>} : vector<256x32xbf16>, vector<32x32xbf16>, vector<256x32xf32> -> vector<256x32xf32>
    %38 = arith.addf %31, %37 : vector<256x32xf32>
    %c1_36 = arith.constant 1 : index
    %c0_37 = arith.constant 0 : index
    %c0_38 = arith.constant 0 : index
    %39 = vector.load %arg16[%c1_36, %c0_37, %c0_38] : memref<18x24x32xf32, #tpu.memory_space<vmem>>, vector<16x16x32xf32>
    %40 = vector.shape_cast %39 : vector<16x16x32xf32> to vector<256x32xf32>
    %41 = arith.truncf %40 : vector<256x32xf32> to vector<256x32xbf16>
    %c3 = arith.constant 3 : index
    %c0_39 = arith.constant 0 : index
    %c0_40 = arith.constant 0 : index
    %42 = vector.load %arg5[%c3, %c0_39, %c0_40] : memref<9x32x32xbf16, #tpu.memory_space<vmem>>, vector<1x32x32xbf16>
    %43 = vector.shape_cast %42 : vector<1x32x32xbf16> to vector<32x32xbf16>
    %cst_41 = arith.constant dense<0.000000e+00> : vector<256x32xf32>
    %44 = tpu.matmul %41, %43, %cst_41 {dimension_numbers = #tpu.dot_dimension_numbers<[1], [0], [0], [1], [0, 0, 1, 1], [], []>} : vector<256x32xbf16>, vector<32x32xbf16>, vector<256x32xf32> -> vector<256x32xf32>
    %45 = arith.addf %38, %44 : vector<256x32xf32>
    %c1_42 = arith.constant 1 : index
    %c1_43 = arith.constant 1 : index
    %c0_44 = arith.constant 0 : index
    %46 = vector.load %arg16[%c1_42, %c1_43, %c0_44] : memref<18x24x32xf32, #tpu.memory_space<vmem>>, vector<16x16x32xf32>
    %47 = vector.shape_cast %46 : vector<16x16x32xf32> to vector<256x32xf32>
    %48 = arith.truncf %47 : vector<256x32xf32> to vector<256x32xbf16>
    %c4 = arith.constant 4 : index
    %c0_45 = arith.constant 0 : index
    %c0_46 = arith.constant 0 : index
    %49 = vector.load %arg5[%c4, %c0_45, %c0_46] : memref<9x32x32xbf16, #tpu.memory_space<vmem>>, vector<1x32x32xbf16>
    %50 = vector.shape_cast %49 : vector<1x32x32xbf16> to vector<32x32xbf16>
    %cst_47 = arith.constant dense<0.000000e+00> : vector<256x32xf32>
    %51 = tpu.matmul %48, %50, %cst_47 {dimension_numbers = #tpu.dot_dimension_numbers<[1], [0], [0], [1], [0, 0, 1, 1], [], []>} : vector<256x32xbf16>, vector<32x32xbf16>, vector<256x32xf32> -> vector<256x32xf32>
    %52 = arith.addf %45, %51 : vector<256x32xf32>
    %c1_48 = arith.constant 1 : index
    %c2_49 = arith.constant 2 : index
    %c0_50 = arith.constant 0 : index
    %53 = vector.load %arg16[%c1_48, %c2_49, %c0_50] : memref<18x24x32xf32, #tpu.memory_space<vmem>>, vector<16x16x32xf32>
    %54 = vector.shape_cast %53 : vector<16x16x32xf32> to vector<256x32xf32>
    %55 = arith.truncf %54 : vector<256x32xf32> to vector<256x32xbf16>
    %c5 = arith.constant 5 : index
    %c0_51 = arith.constant 0 : index
    %c0_52 = arith.constant 0 : index
    %56 = vector.load %arg5[%c5, %c0_51, %c0_52] : memref<9x32x32xbf16, #tpu.memory_space<vmem>>, vector<1x32x32xbf16>
    %57 = vector.shape_cast %56 : vector<1x32x32xbf16> to vector<32x32xbf16>
    %cst_53 = arith.constant dense<0.000000e+00> : vector<256x32xf32>
    %58 = tpu.matmul %55, %57, %cst_53 {dimension_numbers = #tpu.dot_dimension_numbers<[1], [0], [0], [1], [0, 0, 1, 1], [], []>} : vector<256x32xbf16>, vector<32x32xbf16>, vector<256x32xf32> -> vector<256x32xf32>
    %59 = arith.addf %52, %58 : vector<256x32xf32>
    %c2_54 = arith.constant 2 : index
    %c0_55 = arith.constant 0 : index
    %c0_56 = arith.constant 0 : index
    %60 = vector.load %arg16[%c2_54, %c0_55, %c0_56] : memref<18x24x32xf32, #tpu.memory_space<vmem>>, vector<16x16x32xf32>
    %61 = vector.shape_cast %60 : vector<16x16x32xf32> to vector<256x32xf32>
    %62 = arith.truncf %61 : vector<256x32xf32> to vector<256x32xbf16>
    %c6 = arith.constant 6 : index
    %c0_57 = arith.constant 0 : index
    %c0_58 = arith.constant 0 : index
    %63 = vector.load %arg5[%c6, %c0_57, %c0_58] : memref<9x32x32xbf16, #tpu.memory_space<vmem>>, vector<1x32x32xbf16>
    %64 = vector.shape_cast %63 : vector<1x32x32xbf16> to vector<32x32xbf16>
    %cst_59 = arith.constant dense<0.000000e+00> : vector<256x32xf32>
    %65 = tpu.matmul %62, %64, %cst_59 {dimension_numbers = #tpu.dot_dimension_numbers<[1], [0], [0], [1], [0, 0, 1, 1], [], []>} : vector<256x32xbf16>, vector<32x32xbf16>, vector<256x32xf32> -> vector<256x32xf32>
    %66 = arith.addf %59, %65 : vector<256x32xf32>
    %c2_60 = arith.constant 2 : index
    %c1_61 = arith.constant 1 : index
    %c0_62 = arith.constant 0 : index
    %67 = vector.load %arg16[%c2_60, %c1_61, %c0_62] : memref<18x24x32xf32, #tpu.memory_space<vmem>>, vector<16x16x32xf32>
    %68 = vector.shape_cast %67 : vector<16x16x32xf32> to vector<256x32xf32>
    %69 = arith.truncf %68 : vector<256x32xf32> to vector<256x32xbf16>
    %c7 = arith.constant 7 : index
    %c0_63 = arith.constant 0 : index
    %c0_64 = arith.constant 0 : index
    %70 = vector.load %arg5[%c7, %c0_63, %c0_64] : memref<9x32x32xbf16, #tpu.memory_space<vmem>>, vector<1x32x32xbf16>
    %71 = vector.shape_cast %70 : vector<1x32x32xbf16> to vector<32x32xbf16>
    %cst_65 = arith.constant dense<0.000000e+00> : vector<256x32xf32>
    %72 = tpu.matmul %69, %71, %cst_65 {dimension_numbers = #tpu.dot_dimension_numbers<[1], [0], [0], [1], [0, 0, 1, 1], [], []>} : vector<256x32xbf16>, vector<32x32xbf16>, vector<256x32xf32> -> vector<256x32xf32>
    %73 = arith.addf %66, %72 : vector<256x32xf32>
    %c2_66 = arith.constant 2 : index
    %c2_67 = arith.constant 2 : index
    %c0_68 = arith.constant 0 : index
    %74 = vector.load %arg16[%c2_66, %c2_67, %c0_68] : memref<18x24x32xf32, #tpu.memory_space<vmem>>, vector<16x16x32xf32>
    %75 = vector.shape_cast %74 : vector<16x16x32xf32> to vector<256x32xf32>
    %76 = arith.truncf %75 : vector<256x32xf32> to vector<256x32xbf16>
    %c8 = arith.constant 8 : index
    %c0_69 = arith.constant 0 : index
    %c0_70 = arith.constant 0 : index
    %77 = vector.load %arg5[%c8, %c0_69, %c0_70] : memref<9x32x32xbf16, #tpu.memory_space<vmem>>, vector<1x32x32xbf16>
    %78 = vector.shape_cast %77 : vector<1x32x32xbf16> to vector<32x32xbf16>
    %cst_71 = arith.constant dense<0.000000e+00> : vector<256x32xf32>
    %79 = tpu.matmul %76, %78, %cst_71 {dimension_numbers = #tpu.dot_dimension_numbers<[1], [0], [0], [1], [0, 0, 1, 1], [], []>} : vector<256x32xbf16>, vector<32x32xbf16>, vector<256x32xf32> -> vector<256x32xf32>
    %80 = arith.addf %73, %79 : vector<256x32xf32>
    %c0_72 = arith.constant 0 : index
    %c0_73 = arith.constant 0 : index
    %81 = vector.load %arg6[%c0_72, %c0_73] : memref<1x32xf32, #tpu.memory_space<vmem>>, vector<1x32xf32>
    %82 = vector.broadcast %81 : vector<1x32xf32> to vector<256x32xf32>
    %83 = arith.mulf %80, %82 : vector<256x32xf32>
    %c0_74 = arith.constant 0 : index
    %c0_75 = arith.constant 0 : index
    %84 = vector.load %arg7[%c0_74, %c0_75] : memref<1x32xf32, #tpu.memory_space<vmem>>, vector<1x32xf32>
    %85 = vector.broadcast %84 : vector<1x32xf32> to vector<256x32xf32>
    %86 = arith.addf %83, %85 : vector<256x32xf32>
    %cst_76 = arith.constant 0.000000e+00 : f32
    %87 = vector.broadcast %cst_76 : f32 to vector<256x32xf32>
    %88 = arith.maximumf %86, %87 : vector<256x32xf32>
    %89 = arith.truncf %88 : vector<256x32xf32> to vector<256x32xbf16>
    %c0_77 = arith.constant 0 : index
    %c0_78 = arith.constant 0 : index
    %90 = vector.load %arg8[%c0_77, %c0_78] : memref<32x128xbf16, #tpu.memory_space<vmem>>, vector<32x128xbf16>
    %cst_79 = arith.constant dense<0.000000e+00> : vector<256x128xf32>
    %91 = tpu.matmul %89, %90, %cst_79 {dimension_numbers = #tpu.dot_dimension_numbers<[1], [0], [0], [1], [0, 0, 1, 1], [], []>} : vector<256x32xbf16>, vector<32x128xbf16>, vector<256x128xf32> -> vector<256x128xf32>
    %c0_80 = arith.constant 0 : index
    %c0_81 = arith.constant 0 : index
    %92 = vector.load %arg9[%c0_80, %c0_81] : memref<1x128xf32, #tpu.memory_space<vmem>>, vector<1x128xf32>
    %93 = vector.broadcast %92 : vector<1x128xf32> to vector<256x128xf32>
    %94 = arith.mulf %91, %93 : vector<256x128xf32>
    %c0_82 = arith.constant 0 : index
    %c0_83 = arith.constant 0 : index
    %95 = vector.load %arg10[%c0_82, %c0_83] : memref<1x128xf32, #tpu.memory_space<vmem>>, vector<1x128xf32>
    %96 = vector.broadcast %95 : vector<1x128xf32> to vector<256x128xf32>
    %97 = arith.addf %94, %96 : vector<256x128xf32>
    %cst_84 = arith.constant 0.000000e+00 : f32
    %98 = vector.broadcast %cst_84 : f32 to vector<256x128xf32>
    %99 = arith.maximumf %97, %98 : vector<256x128xf32>
    %cst_85 = arith.constant dense<0.000000e+00> : vector<128xf32>
    %100 = vector.multi_reduction <add>, %99, %cst_85 [0] : vector<256x128xf32> to vector<128xf32>
    %101 = vector.shape_cast %100 : vector<128xf32> to vector<1x128xf32>
    %cst_86 = arith.constant 3.906250e-03 : f32
    %102 = vector.broadcast %cst_86 : f32 to vector<1x128xf32>
    %103 = arith.mulf %101, %102 : vector<1x128xf32>
    %104 = vector.extract_strided_slice %103 {offsets = [0, 127], sizes = [1, 1], strides = [1, 1]} : vector<1x128xf32> to vector<1x1xf32>
    %105 = vector.extract_strided_slice %103 {offsets = [0, 0], sizes = [1, 127], strides = [1, 1]} : vector<1x128xf32> to vector<1x127xf32>
    %106 = tpu.concatenate %104, %105 in 1 : vector<1x1xf32>, vector<1x127xf32> -> vector<1x128xf32>
    %107 = vector.extract_strided_slice %103 {offsets = [0, 1], sizes = [1, 127], strides = [1, 1]} : vector<1x128xf32> to vector<1x127xf32>
    %108 = vector.extract_strided_slice %103 {offsets = [0, 0], sizes = [1, 1], strides = [1, 1]} : vector<1x128xf32> to vector<1x1xf32>
    %109 = tpu.concatenate %107, %108 in 1 : vector<1x127xf32>, vector<1x1xf32> -> vector<1x128xf32>
    %110 = tpu.iota {dimensions = array<i32: 1>} : vector<1x128xi32>
    %c0_i32 = arith.constant 0 : i32
    %111 = vector.broadcast %c0_i32 : i32 to vector<1x128xi32>
    %112 = arith.cmpi eq, %110, %111 : vector<1x128xi32>
    %cst_87 = arith.constant 0.000000e+00 : f32
    %113 = vector.broadcast %cst_87 : f32 to vector<1x128xf32>
    %114 = arith.select %112, %113, %106 : vector<1x128xi1>, vector<1x128xf32>
    %c127_i32 = arith.constant 127 : i32
    %115 = vector.broadcast %c127_i32 : i32 to vector<1x128xi32>
    %116 = arith.cmpi eq, %110, %115 : vector<1x128xi32>
    %cst_88 = arith.constant 0.000000e+00 : f32
    %117 = vector.broadcast %cst_88 : f32 to vector<1x128xf32>
    %118 = arith.select %116, %117, %109 : vector<1x128xi1>, vector<1x128xf32>
    %c0_89 = arith.constant 0 : index
    %119 = memref.load %arg11[%c0_89] : memref<3xf32, #tpu.memory_space<smem>>
    %120 = vector.broadcast %119 : f32 to vector<1x128xf32>
    %121 = arith.mulf %120, %114 : vector<1x128xf32>
    %c1_90 = arith.constant 1 : index
    %122 = memref.load %arg11[%c1_90] : memref<3xf32, #tpu.memory_space<smem>>
    %123 = vector.broadcast %122 : f32 to vector<1x128xf32>
    %124 = arith.mulf %123, %103 : vector<1x128xf32>
    %125 = arith.addf %121, %124 : vector<1x128xf32>
    %c2_91 = arith.constant 2 : index
    %126 = memref.load %arg11[%c2_91] : memref<3xf32, #tpu.memory_space<smem>>
    %127 = vector.broadcast %126 : f32 to vector<1x128xf32>
    %128 = arith.mulf %127, %118 : vector<1x128xf32>
    %129 = arith.addf %125, %128 : vector<1x128xf32>
    %cst_92 = arith.constant 0.000000e+00 : f32
    %130 = vector.broadcast %cst_92 : f32 to vector<1x128xf32>
    %131 = arith.subf %130, %129 : vector<1x128xf32>
    %132 = math.exp %131 : vector<1x128xf32>
    %cst_93 = arith.constant 1.000000e+00 : f32
    %133 = vector.broadcast %cst_93 : f32 to vector<1x128xf32>
    %134 = arith.addf %133, %132 : vector<1x128xf32>
    %cst_94 = arith.constant 1.000000e+00 : f32
    %135 = vector.broadcast %cst_94 : f32 to vector<1x128xf32>
    %136 = arith.divf %135, %134 : vector<1x128xf32>
    %c0_95 = arith.constant 0 : index
    %c0_96 = arith.constant 0 : index
    %c0_97 = arith.constant 0 : index
    %137 = vector.load %arg1[%c0_95, %c0_96, %c0_97] : memref<1x256x16xf32, #tpu.memory_space<vmem>>, vector<1x256x16xf32>
    %138 = vector.shape_cast %137 : vector<1x256x16xf32> to vector<256x16xf32>
    %139 = arith.truncf %138 : vector<256x16xf32> to vector<256x16xbf16>
    %c0_98 = arith.constant 0 : index
    %c0_99 = arith.constant 0 : index
    %140 = vector.load %arg12[%c0_98, %c0_99] : memref<16x128xbf16, #tpu.memory_space<vmem>>, vector<16x128xbf16>
    %cst_100 = arith.constant dense<0.000000e+00> : vector<256x128xf32>
    %141 = tpu.matmul %139, %140, %cst_100 {dimension_numbers = #tpu.dot_dimension_numbers<[1], [0], [0], [1], [0, 0, 1, 1], [], []>} : vector<256x16xbf16>, vector<16x128xbf16>, vector<256x128xf32> -> vector<256x128xf32>
    %c0_101 = arith.constant 0 : index
    %c0_102 = arith.constant 0 : index
    %142 = vector.load %arg13[%c0_101, %c0_102] : memref<1x128xf32, #tpu.memory_space<vmem>>, vector<1x128xf32>
    %143 = vector.broadcast %142 : vector<1x128xf32> to vector<256x128xf32>
    %144 = arith.mulf %141, %143 : vector<256x128xf32>
    %c0_103 = arith.constant 0 : index
    %c0_104 = arith.constant 0 : index
    %145 = vector.load %arg14[%c0_103, %c0_104] : memref<1x128xf32, #tpu.memory_space<vmem>>, vector<1x128xf32>
    %146 = vector.broadcast %145 : vector<1x128xf32> to vector<256x128xf32>
    %147 = arith.addf %144, %146 : vector<256x128xf32>
    %148 = vector.broadcast %136 : vector<1x128xf32> to vector<256x128xf32>
    %149 = arith.mulf %99, %148 : vector<256x128xf32>
    %150 = arith.addf %149, %147 : vector<256x128xf32>
    %cst_105 = arith.constant 0.000000e+00 : f32
    %151 = vector.broadcast %cst_105 : f32 to vector<256x128xf32>
    %152 = arith.maximumf %150, %151 : vector<256x128xf32>
    %c0_106 = arith.constant 0 : index
    %c0_107 = arith.constant 0 : index
    %c0_108 = arith.constant 0 : index
    %153 = vector.load %arg15[%c0_106, %c0_107, %c0_108] : memref<1x256x128xf32, #tpu.memory_space<vmem>>, vector<1x256x128xf32>
    %154 = vector.shape_cast %153 : vector<1x256x128xf32> to vector<256x128xf32>
    %155 = vector.shape_cast %152 : vector<256x128xf32> to vector<1x256x128xf32>
    tpu.vector_store %arg15[%c0_106, %c0_107, %c0_108], %155 {strides = array<i32>} : memref<1x256x128xf32, #tpu.memory_space<vmem>>, vector<1x256x128xf32>,
    return
  }
  func.func @transform_0(%arg0: i32) -> (i32, i32, i32) {
    %c0_i32 = arith.constant 0 : i32
    %c0_i32_0 = arith.constant 0 : i32
    %c0_i32_1 = arith.constant 0 : i32
    return %arg0, %c0_i32, %c0_i32_0 : i32, i32, i32
  }
  func.func @transform_1(%arg0: i32) -> (i32, i32) {
    %c0_i32 = arith.constant 0 : i32
    %c0_i32_0 = arith.constant 0 : i32
    %c0_i32_1 = arith.constant 0 : i32
    return %c0_i32, %c0_i32_0 : i32, i32
  }
  func.func @transform_2(%arg0: i32) -> (i32, i32) {
    %c0_i32 = arith.constant 0 : i32
    %c0_i32_0 = arith.constant 0 : i32
    %c0_i32_1 = arith.constant 0 : i32
    return %c0_i32, %c0_i32_0 : i32, i32
  }
  func.func @transform_3(%arg0: i32) -> (i32, i32) {
    %c0_i32 = arith.constant 0 : i32
    %c0_i32_0 = arith.constant 0 : i32
    %c0_i32_1 = arith.constant 0 : i32
    return %c0_i32, %c0_i32_0 : i32, i32
  }
  func.func @transform_4(%arg0: i32) -> (i32, i32, i32) {
    %c0_i32 = arith.constant 0 : i32
    %c0_i32_0 = arith.constant 0 : i32
    %c0_i32_1 = arith.constant 0 : i32
    %c0_i32_2 = arith.constant 0 : i32
    return %c0_i32, %c0_i32_0, %c0_i32_1 : i32, i32, i32
  }
  func.func @transform_5(%arg0: i32) -> (i32, i32) {
    %c0_i32 = arith.constant 0 : i32
    %c0_i32_0 = arith.constant 0 : i32
    %c0_i32_1 = arith.constant 0 : i32
    return %c0_i32, %c0_i32_0 : i32, i32
  }
  func.func @transform_6(%arg0: i32) -> (i32, i32) {
    %c0_i32 = arith.constant 0 : i32
    %c0_i32_0 = arith.constant 0 : i32
    %c0_i32_1 = arith.constant 0 : i32
    return %c0_i32, %c0_i32_0 : i32, i32
  }
  func.func @transform_7(%arg0: i32) -> (i32, i32) {
    %c0_i32 = arith.constant 0 : i32
    %c0_i32_0 = arith.constant 0 : i32
    %c0_i32_1 = arith.constant 0 : i32
    return %c0_i32, %c0_i32_0 : i32, i32
  }
  func.func @transform_8(%arg0: i32) -> (i32, i32) {
    %c0_i32 = arith.constant 0 : i32
    %c0_i32_0 = arith.constant 0 : i32
    %c0_i32_1 = arith.constant 0 : i32
    return %c0_i32, %c0_i32_0 : i32, i32
  }
  func.func @transform_9(%arg0: i32) -> (i32, i32) {
    %c0_i32 = arith.constant 0 : i32
    %c0_i32_0 = arith.constant 0 : i32
    %c0_i32_1 = arith.constant 0 : i32
    return %c0_i32, %c0_i32_0 : i32, i32
  }
  func.func @transform_10(%arg0: i32) -> i32 {
    %c0_i32 = arith.constant 0 : i32
    %c0_i32_0 = arith.constant 0 : i32
    return %c0_i32 : i32
  }
  func.func @transform_11(%arg0: i32) -> (i32, i32) {
    %c0_i32 = arith.constant 0 : i32
    %c0_i32_0 = arith.constant 0 : i32
    %c0_i32_1 = arith.constant 0 : i32
    return %c0_i32, %c0_i32_0 : i32, i32
  }
  func.func @transform_12(%arg0: i32) -> (i32, i32) {
    %c0_i32 = arith.constant 0 : i32
    %c0_i32_0 = arith.constant 0 : i32
    %c0_i32_1 = arith.constant 0 : i32
    return %c0_i32, %c0_i32_0 : i32, i32
  }
  func.func @transform_13(%arg0: i32) -> (i32, i32) {
    %c0_i32 = arith.constant 0 : i32
    %c0_i32_0 = arith.constant 0 : i32
    %c0_i32_1 = arith.constant 0 : i32
    return %c0_i32, %c0_i32_0 : i32, i32
  }
  func.func @transform_14(%arg0: i32) -> (i32, i32, i32) {
    %c0_i32 = arith.constant 0 : i32
    %c0_i32_0 = arith.constant 0 : i32
    %c0_i32_1 = arith.constant 0 : i32
    return %arg0, %c0_i32, %c0_i32_0 : i32, i32, i32
  }
}

</mosaic_0001>

<llo_original>
// kernel: tpu_custom_call.1
$region0: #{tpu_custom_call.1}
  #allocation0 [shape = 'u32[]', space=smem, size = 0x4, offset = 0x4, fixed_abs, tag = 'smem constant byte address 0x4 - core index']
  #allocation1 [shape = 'u32[144,128]{1,0:T(1,128)}', space=vmem, size = 0x12000, scoped, tag = 'internal scratch']
  #allocation2 [shape = 'f32[18,24,32]{2,1,0:T(8,128)}', space=vmem, size = 0x36000, scoped, tag = 'scratch operand']
  %s0 = inlined_call_operand.vmem [shape: f32[4,256,16], index: 0, kind: input, shape index: {}]
  %s1 = inlined_call_operand.vmem [shape: bf16[16,32], index: 1, kind: input, shape index: {}]
  %s2 = inlined_call_operand.vmem [shape: f32[1,32], index: 2, kind: input, shape index: {}]
  %s3 = inlined_call_operand.vmem [shape: f32[1,32], index: 3, kind: input, shape index: {}]
  %s4 = inlined_call_operand.vmem [shape: bf16[9,32,32], index: 4, kind: input, shape index: {}]
  %s5 = inlined_call_operand.vmem [shape: f32[1,32], index: 5, kind: input, shape index: {}]
  %s6 = inlined_call_operand.vmem [shape: f32[1,32], index: 6, kind: input, shape index: {}]
  %s7 = inlined_call_operand.vmem [shape: bf16[32,128], index: 7, kind: input, shape index: {}]
  %s8 = inlined_call_operand.vmem [shape: f32[1,128], index: 8, kind: input, shape index: {}]
  %s9 = inlined_call_operand.vmem [shape: f32[1,128], index: 9, kind: input, shape index: {}]
  %s10 = inlined_call_operand.vmem [shape: f32[3], index: 10, kind: input, shape index: {}]
  %s11 = inlined_call_operand.vmem [shape: bf16[16,128], index: 11, kind: input, shape index: {}]
  %s12 = inlined_call_operand.vmem [shape: f32[1,128], index: 12, kind: input, shape index: {}]
  %s13 = inlined_call_operand.vmem [shape: f32[1,128], index: 13, kind: input, shape index: {}]
  %s14 = inlined_call_operand.hbm [shape: f32[4,256,128], index: 14, kind: output, shape index: {}]
  %s15 = sld [smem:[#allocation0]]
  $region93: #{tpu_custom_call.1} parent=0
    _
  %s17 = ssub.s32 1, %s15
  %s18 = scalar_select 0, %s17, %s15
  $region1: #{tpu_custom_call.1} parent=0
    #allocation3 [shape = 'u8[512]{0}', space=smem, size = 0x200, scoped, tag = 'input window, operand 10, single buffered']
    #allocation4 [shape = 's32[2]{0}', space=sflag, size = 0x8, scoped, tag = 'scoped memory for tpu_custom_call.1']
    #allocation5 [shape = 's32[2]{0}', space=sflag, size = 0x8, scoped, tag = 'scoped memory for tpu_custom_call.1']
    #allocation6 [shape = 'u8[262144]{0}', space=vmem, size = 0x40000, scoped, tag = 'output window, operand 0']
    %19 = vsyncpa [#allocation5], 0
    %20 = vsyncpa [#allocation4], 0
    %s21 = scalar_lea.sflag [#allocation4], 1
    %22 = vsyncpa %s21, 0
    loop: start=0, step=1, limit=6
    $region2: #{tpu_custom_call.1} parent=1 // loop_pre_header
      _
    $region3: #{tpu_custom_call.1} parent=1 // loop_header
      %s24 = sphi 0, %s28
      %p25 = scmp.ge.s32.totalorder %s24, 6
      %s34 = sphi 0, %s36
      %s37 = sphi 0, %s34
      %s38 = sphi 0, %s37
      %s54 = sphi 0, %s38
      %s58 = sphi 0, %s58
      %s60 = sphi 0, %s58
      %s61 = sphi 0, %s60
      %s75 = sphi 0, %s61
      %s79 = sphi 0, %s79
      %s81 = sphi 0, %s79
      %s82 = sphi 0, %s81
      %s96 = sphi 0, %s82
      %s100 = sphi 0, %s100
      %s102 = sphi 0, %s100
      %s103 = sphi 0, %s102
      %s117 = sphi 0, %s103
      %s121 = sphi 0, %s121
      %s123 = sphi 0, %s121
      %s124 = sphi 0, %s123
      %s138 = sphi 0, %s124
      %s142 = sphi 0, %s142
      %s144 = sphi 0, %s142
      %s145 = sphi 0, %s144
      %s159 = sphi 0, %s145
      %s163 = sphi 0, %s163
      %s165 = sphi 0, %s163
      %s166 = sphi 0, %s165
      %s180 = sphi 0, %s166
      %s184 = sphi 0, %s184
      %s186 = sphi 0, %s184
      %s187 = sphi 0, %s186
      %s201 = sphi 0, %s187
      %s205 = sphi 0, %s205
      %s207 = sphi 0, %s205
      %s208 = sphi 0, %s207
      %s222 = sphi 0, %s208
      %s226 = sphi 0, %s226
      %s228 = sphi 0, %s226
      %s229 = sphi 0, %s228
      %s243 = sphi 0, %s229
      %s247 = sphi 0, %s247
      %s249 = sphi 0, %s247
      %s250 = sphi 0, %s249
      %s264 = sphi 0, %s250
      %s268 = sphi 0, %s268
      %s270 = sphi 0, %s268
      %s271 = sphi 0, %s270
      %s285 = sphi 0, %s271
      %s289 = sphi 0, %s289
      %s291 = sphi 0, %s289
      %s292 = sphi 0, %s291
      %s306 = sphi 0, %s292
      %s310 = sphi 0, %s310
      %s312 = sphi 0, %s310
      %s313 = sphi 0, %s312
      %s327 = sphi 0, %s313
      %s333 = sphi 0, %s335
      %s336 = sphi 0, %s333
      %s337 = sphi 0, %s336
      %s353 = sphi 0, %s337
    $region4: #{tpu_custom_call.1} parent=1 // loop_header_branch
      %27 = sbr.rel (%p25) target = $region8
    $region5: #{tpu_custom_call.1} parent=1 // loop_body
      %s29 = ssub.s32 %s24, 1
      %s30 = ssub.s32 %s24, 2
      %s31 = sadd.s32 %s24, 1
      %s32 = ssub.s32 %s24, %s31
      %p33 = scmp.eq.s32.totalorder %s32, 0
      %s35 = sadd.s32 %s34, 1
      %s36 = scalar_select %p33, %s34, %s35
      %p39 = pneg %p33
      %p40 = scmp.eq.s32.totalorder %s24, 3
      %p41 = por %p39, %p40
      %p42 = scmp.ne.s32.totalorder %s34, %s37
      %p43 = scmp.eq.s32.totalorder %s24, 0
      %p44 = por %p42, %p43
      %p45 = scmp.ne.s32.totalorder %s34, %s37
      %p46 = scmp.eq.s32.totalorder %s29, 3
      %p47 = por %p45, %p46
      %p48 = scmp.ne.s32.totalorder %s37, %s38
      %p49 = scmp.eq.s32.totalorder %s29, 0
      %p50 = por %p48, %p49
      %p51 = scmp.ne.s32.totalorder %s37, %s38
      %p52 = scmp.eq.s32.totalorder %s30, 3
      %p53 = por %p51, %p52
      %p55 = scmp.ne.s32.totalorder %s38, %s54
      %p56 = scmp.eq.s32.totalorder %s30, 0
      %p57 = por %p55, %p56
      %s59 = sadd.s32 %s58, 1
      %p62 = scmp.eq.s32.totalorder %s24, 3
      %p63 = scmp.ne.s32.totalorder %s58, %s60
      %p64 = scmp.eq.s32.totalorder %s24, 0
      %p65 = por %p63, %p64
      %p66 = scmp.ne.s32.totalorder %s58, %s60
      %p67 = scmp.eq.s32.totalorder %s29, 3
      %p68 = por %p66, %p67
      %p69 = scmp.ne.s32.totalorder %s60, %s61
      %p70 = scmp.eq.s32.totalorder %s29, 0
      %p71 = por %p69, %p70
      %p72 = scmp.ne.s32.totalorder %s60, %s61
      %p73 = scmp.eq.s32.totalorder %s30, 3
      %p74 = por %p72, %p73
      %p76 = scmp.ne.s32.totalorder %s61, %s75
      %p77 = scmp.eq.s32.totalorder %s30, 0
      %p78 = por %p76, %p77
      %s80 = sadd.s32 %s79, 1
      %p83 = scmp.eq.s32.totalorder %s24, 3
      %p84 = scmp.ne.s32.totalorder %s79, %s81
      %p85 = scmp.eq.s32.totalorder %s24, 0
      %p86 = por %p84, %p85
      %p87 = scmp.ne.s32.totalorder %s79, %s81
      %p88 = scmp.eq.s32.totalorder %s29, 3
      %p89 = por %p87, %p88
      %p90 = scmp.ne.s32.totalorder %s81, %s82
      %p91 = scmp.eq.s32.totalorder %s29, 0
      %p92 = por %p90, %p91
      %p93 = scmp.ne.s32.totalorder %s81, %s82
      %p94 = scmp.eq.s32.totalorder %s30, 3
      %p95 = por %p93, %p94
      %p97 = scmp.ne.s32.totalorder %s82, %s96
      %p98 = scmp.eq.s32.totalorder %s30, 0
      %p99 = por %p97, %p98
      %s101 = sadd.s32 %s100, 1
      %p104 = scmp.eq.s32.totalorder %s24, 3
      %p105 = scmp.ne.s32.totalorder %s100, %s102
      %p106 = scmp.eq.s32.totalorder %s24, 0
      %p107 = por %p105, %p106
      %p108 = scmp.ne.s32.totalorder %s100, %s102
      %p109 = scmp.eq.s32.totalorder %s29, 3
      %p110 = por %p108, %p109
      %p111 = scmp.ne.s32.totalorder %s102, %s103
      %p112 = scmp.eq.s32.totalorder %s29, 0
      %p113 = por %p111, %p112
      %p114 = scmp.ne.s32.totalorder %s102, %s103
      %p115 = scmp.eq.s32.totalorder %s30, 3
      %p116 = por %p114, %p115
      %p118 = scmp.ne.s32.totalorder %s103, %s117
      %p119 = scmp.eq.s32.totalorder %s30, 0
      %p120 = por %p118, %p119
      %s122 = sadd.s32 %s121, 1
      %p125 = scmp.eq.s32.totalorder %s24, 3
      %p126 = scmp.ne.s32.totalorder %s121, %s123
      %p127 = scmp.eq.s32.totalorder %s24, 0
      %p128 = por %p126, %p127
      %p129 = scmp.ne.s32.totalorder %s121, %s123
      %p130 = scmp.eq.s32.totalorder %s29, 3
      %p131 = por %p129, %p130
      %p132 = scmp.ne.s32.totalorder %s123, %s124
      %p133 = scmp.eq.s32.totalorder %s29, 0
      %p134 = por %p132, %p133
      %p135 = scmp.ne.s32.totalorder %s123, %s124
      %p136 = scmp.eq.s32.totalorder %s30, 3
      %p137 = por %p135, %p136
      %p139 = scmp.ne.s32.totalorder %s124, %s138
      %p140 = scmp.eq.s32.totalorder %s30, 0
      %p141 = por %p139, %p140
      %s143 = sadd.s32 %s142, 1
      %p146 = scmp.eq.s32.totalorder %s24, 3
      %p147 = scmp.ne.s32.totalorder %s142, %s144
      %p148 = scmp.eq.s32.totalorder %s24, 0
      %p149 = por %p147, %p148
      %p150 = scmp.ne.s32.totalorder %s142, %s144
      %p151 = scmp.eq.s32.totalorder %s29, 3
      %p152 = por %p150, %p151
      %p153 = scmp.ne.s32.totalorder %s144, %s145
      %p154 = scmp.eq.s32.totalorder %s29, 0
      %p155 = por %p153, %p154
      %p156 = scmp.ne.s32.totalorder %s144, %s145
      %p157 = scmp.eq.s32.totalorder %s30, 3
      %p158 = por %p156, %p157
      %p160 = scmp.ne.s32.totalorder %s145, %s159
      %p161 = scmp.eq.s32.totalorder %s30, 0
      %p162 = por %p160, %p161
      %s164 = sadd.s32 %s163, 1
      %p167 = scmp.eq.s32.totalorder %s24, 3
      %p168 = scmp.ne.s32.totalorder %s163, %s165
      %p169 = scmp.eq.s32.totalorder %s24, 0
      %p170 = por %p168, %p169
      %p171 = scmp.ne.s32.totalorder %s163, %s165
      %p172 = scmp.eq.s32.totalorder %s29, 3
      %p173 = por %p171, %p172
      %p174 = scmp.ne.s32.totalorder %s165, %s166
      %p175 = scmp.eq.s32.totalorder %s29, 0
      %p176 = por %p174, %p175
      %p177 = scmp.ne.s32.totalorder %s165, %s166
      %p178 = scmp.eq.s32.totalorder %s30, 3
      %p179 = por %p177, %p178
      %p181 = scmp.ne.s32.totalorder %s166, %s180
      %p182 = scmp.eq.s32.totalorder %s30, 0
      %p183 = por %p181, %p182
      %s185 = sadd.s32 %s184, 1
      %p188 = scmp.eq.s32.totalorder %s24, 3
      %p189 = scmp.ne.s32.totalorder %s184, %s186
      %p190 = scmp.eq.s32.totalorder %s24, 0
      %p191 = por %p189, %p190
      %p192 = scmp.ne.s32.totalorder %s184, %s186
      %p193 = scmp.eq.s32.totalorder %s29, 3
      %p194 = por %p192, %p193
      %p195 = scmp.ne.s32.totalorder %s186, %s187
      %p196 = scmp.eq.s32.totalorder %s29, 0
      %p197 = por %p195, %p196
      %p198 = scmp.ne.s32.totalorder %s186, %s187
      %p199 = scmp.eq.s32.totalorder %s30, 3
      %p200 = por %p198, %p199
      %p202 = scmp.ne.s32.totalorder %s187, %s201
      %p203 = scmp.eq.s32.totalorder %s30, 0
      %p204 = por %p202, %p203
      %s206 = sadd.s32 %s205, 1
      %p209 = scmp.eq.s32.totalorder %s24, 3
      %p210 = scmp.ne.s32.totalorder %s205, %s207
      %p211 = scmp.eq.s32.totalorder %s24, 0
      %p212 = por %p210, %p211
      %p213 = scmp.ne.s32.totalorder %s205, %s207
      %p214 = scmp.eq.s32.totalorder %s29, 3
      %p215 = por %p213, %p214
      %p216 = scmp.ne.s32.totalorder %s207, %s208
      %p217 = scmp.eq.s32.totalorder %s29, 0
      %p218 = por %p216, %p217
      %p219 = scmp.ne.s32.totalorder %s207, %s208
      %p220 = scmp.eq.s32.totalorder %s30, 3
      %p221 = por %p219, %p220
      %p223 = scmp.ne.s32.totalorder %s208, %s222
      %p224 = scmp.eq.s32.totalorder %s30, 0
      %p225 = por %p223, %p224
      %s227 = sadd.s32 %s226, 1
      %p230 = scmp.eq.s32.totalorder %s24, 3
      %p231 = scmp.ne.s32.totalorder %s226, %s228
      %p232 = scmp.eq.s32.totalorder %s24, 0
      %p233 = por %p231, %p232
      %p234 = scmp.ne.s32.totalorder %s226, %s228
      %p235 = scmp.eq.s32.totalorder %s29, 3
      %p236 = por %p234, %p235
      %p237 = scmp.ne.s32.totalorder %s228, %s229
      %p238 = scmp.eq.s32.totalorder %s29, 0
      %p239 = por %p237, %p238
      %p240 = scmp.ne.s32.totalorder %s228, %s229
      %p241 = scmp.eq.s32.totalorder %s30, 3
      %p242 = por %p240, %p241
      %p244 = scmp.ne.s32.totalorder %s229, %s243
      %p245 = scmp.eq.s32.totalorder %s30, 0
      %p246 = por %p244, %p245
      %s248 = sadd.s32 %s247, 1
      %p251 = scmp.eq.s32.totalorder %s24, 3
      %p252 = scmp.ne.s32.totalorder %s247, %s249
      %p253 = scmp.eq.s32.totalorder %s24, 0
      %p254 = por %p252, %p253
      %p255 = scmp.ne.s32.totalorder %s247, %s249
      %p256 = scmp.eq.s32.totalorder %s29, 3
      %p257 = por %p255, %p256
      %p258 = scmp.ne.s32.totalorder %s249, %s250
      %p259 = scmp.eq.s32.totalorder %s29, 0
      %p260 = por %p258, %p259
      %p261 = scmp.ne.s32.totalorder %s249, %s250
      %p262 = scmp.eq.s32.totalorder %s30, 3
      %p263 = por %p261, %p262
      %p265 = scmp.ne.s32.totalorder %s250, %s264
      %p266 = scmp.eq.s32.totalorder %s30, 0
      %p267 = por %p265, %p266
      %s269 = sadd.s32 %s268, 1
      %p272 = scmp.eq.s32.totalorder %s24, 3
      %p273 = scmp.ne.s32.totalorder %s268, %s270
      %p274 = scmp.eq.s32.totalorder %s24, 0
      %p275 = por %p273, %p274
      %p276 = scmp.ne.s32.totalorder %s268, %s270
      %p277 = scmp.eq.s32.totalorder %s29, 3
      %p278 = por %p276, %p277
      %p279 = scmp.ne.s32.totalorder %s270, %s271
      %p280 = scmp.eq.s32.totalorder %s29, 0
      %p281 = por %p279, %p280
      %p282 = scmp.ne.s32.totalorder %s270, %s271
      %p283 = scmp.eq.s32.totalorder %s30, 3
      %p284 = por %p282, %p283
      %p286 = scmp.ne.s32.totalorder %s271, %s285
      %p287 = scmp.eq.s32.totalorder %s30, 0
      %p288 = por %p286, %p287
      %s290 = sadd.s32 %s289, 1
      %p293 = scmp.eq.s32.totalorder %s24, 3
      %p294 = scmp.ne.s32.totalorder %s289, %s291
      %p295 = scmp.eq.s32.totalorder %s24, 0
      %p296 = por %p294, %p295
      %p297 = scmp.ne.s32.totalorder %s289, %s291
      %p298 = scmp.eq.s32.totalorder %s29, 3
      %p299 = por %p297, %p298
      %p300 = scmp.ne.s32.totalorder %s291, %s292
      %p301 = scmp.eq.s32.totalorder %s29, 0
      %p302 = por %p300, %p301
      %p303 = scmp.ne.s32.totalorder %s291, %s292
      %p304 = scmp.eq.s32.totalorder %s30, 3
      %p305 = por %p303, %p304
      %p307 = scmp.ne.s32.totalorder %s292, %s306
      %p308 = scmp.eq.s32.totalorder %s30, 0
      %p309 = por %p307, %p308
      %s311 = sadd.s32 %s310, 1
      %p314 = scmp.eq.s32.totalorder %s24, 3
      %p315 = scmp.ne.s32.totalorder %s310, %s312
      %p316 = scmp.eq.s32.totalorder %s24, 0
      %p317 = por %p315, %p316
      %p318 = scmp.ne.s32.totalorder %s310, %s312
      %p319 = scmp.eq.s32.totalorder %s29, 3
      %p320 = por %p318, %p319
      %p321 = scmp.ne.s32.totalorder %s312, %s313
      %p322 = scmp.eq.s32.totalorder %s29, 0
      %p323 = por %p321, %p322
      %p324 = scmp.ne.s32.totalorder %s312, %s313
      %p325 = scmp.eq.s32.totalorder %s30, 3
      %p326 = por %p324, %p325
      %p328 = scmp.ne.s32.totalorder %s313, %s327
      %p329 = scmp.eq.s32.totalorder %s30, 0
      %p330 = por %p328, %p329
      %s331 = ssub.s32 %s24, %s31
      %p332 = scmp.eq.s32.totalorder %s331, 0
      %s334 = sadd.s32 %s333, 1
      %s335 = scalar_select %p332, %s333, %s334
      %p338 = pneg %p332
      %p339 = scmp.eq.s32.totalorder %s24, 3
      %p340 = por %p338, %p339
      %p341 = scmp.ne.s32.totalorder %s333, %s336
      %p342 = scmp.eq.s32.totalorder %s24, 0
      %p343 = por %p341, %p342
      %p344 = scmp.ne.s32.totalorder %s333, %s336
      %p345 = scmp.eq.s32.totalorder %s29, 3
      %p346 = por %p344, %p345
      %p347 = scmp.ne.s32.totalorder %s336, %s337
      %p348 = scmp.eq.s32.totalorder %s29, 0
      %p349 = por %p347, %p348
      %p350 = scmp.ne.s32.totalorder %s336, %s337
      %p351 = scmp.eq.s32.totalorder %s30, 3
      %p352 = por %p350, %p351
      %p354 = scmp.ne.s32.totalorder %s337, %s353
      %p355 = scmp.eq.s32.totalorder %s30, 0
      %p356 = por %p354, %p355
      %p357 = scmp.le.s32.totalorder 1, %s24
      %p358 = scmp.lt.s32.totalorder %s24, 5
      %p359 = pnand %p357, %p358
      %p360 = pneg %p359
      // Predicated region
      $region9: #{tpu_custom_call.1} parent=5 // pred_check
        _
      $region10: #{tpu_custom_call.1} parent=5 // pred_check_branch
        %362 = sbr.rel (%p359) target = $region12
      $region11: #{tpu_custom_call.1} parent=5 // pred_region
        %s363 = ssub.s32 %s24, 1
        // Predicated region
        $region13: #{tpu_custom_call.1} parent=11 // pred_check
          %p364 = pneg %p71
        $region14: #{tpu_custom_call.1} parent=11 // pred_check_branch
          %366 = sbr.rel (%p364) target = $region16
        $region15: #{tpu_custom_call.1} parent=11 // pred_region
          _
        $region16: #{tpu_custom_call.1} parent=11 // pred_fallthru
          _
        // Predicated region
        $region17: #{tpu_custom_call.1} parent=11 // pred_check
          %p367 = pneg %p92
        $region18: #{tpu_custom_call.1} parent=11 // pred_check_branch
          %369 = sbr.rel (%p367) target = $region20
        $region19: #{tpu_custom_call.1} parent=11 // pred_region
          _
        $region20: #{tpu_custom_call.1} parent=11 // pred_fallthru
          _
        // Predicated region
        $region21: #{tpu_custom_call.1} parent=11 // pred_check
          %p370 = pneg %p113
        $region22: #{tpu_custom_call.1} parent=11 // pred_check_branch
          %372 = sbr.rel (%p370) target = $region24
        $region23: #{tpu_custom_call.1} parent=11 // pred_region
          _
        $region24: #{tpu_custom_call.1} parent=11 // pred_fallthru
          _
        // Predicated region
        $region25: #{tpu_custom_call.1} parent=11 // pred_check
          %p373 = pneg %p134
        $region26: #{tpu_custom_call.1} parent=11 // pred_check_branch
          %375 = sbr.rel (%p373) target = $region28
        $region27: #{tpu_custom_call.1} parent=11 // pred_region
          _
        $region28: #{tpu_custom_call.1} parent=11 // pred_fallthru
          _
        // Predicated region
        $region29: #{tpu_custom_call.1} parent=11 // pred_check
          %p376 = pneg %p155
        $region30: #{tpu_custom_call.1} parent=11 // pred_check_branch
          %378 = sbr.rel (%p376) target = $region32
        $region31: #{tpu_custom_call.1} parent=11 // pred_region
          _
        $region32: #{tpu_custom_call.1} parent=11 // pred_fallthru
          _
        // Predicated region
        $region33: #{tpu_custom_call.1} parent=11 // pred_check
          %p379 = pneg %p176
        $region34: #{tpu_custom_call.1} parent=11 // pred_check_branch
          %381 = sbr.rel (%p379) target = $region36
        $region35: #{tpu_custom_call.1} parent=11 // pred_region
          _
        $region36: #{tpu_custom_call.1} parent=11 // pred_fallthru
          _
        // Predicated region
        $region37: #{tpu_custom_call.1} parent=11 // pred_check
          %p382 = pneg %p197
        $region38: #{tpu_custom_call.1} parent=11 // pred_check_branch
          %384 = sbr.rel (%p382) target = $region40
        $region39: #{tpu_custom_call.1} parent=11 // pred_region
          _
        $region40: #{tpu_custom_call.1} parent=11 // pred_fallthru
          _
        // Predicated region
        $region41: #{tpu_custom_call.1} parent=11 // pred_check
          %p385 = pneg %p218
        $region42: #{tpu_custom_call.1} parent=11 // pred_check_branch
          %387 = sbr.rel (%p385) target = $region44
        $region43: #{tpu_custom_call.1} parent=11 // pred_region
          _
        $region44: #{tpu_custom_call.1} parent=11 // pred_fallthru
          _
        // Predicated region
        $region45: #{tpu_custom_call.1} parent=11 // pred_check
          %p388 = pneg %p239
        $region46: #{tpu_custom_call.1} parent=11 // pred_check_branch
          %390 = sbr.rel (%p388) target = $region48
        $region47: #{tpu_custom_call.1} parent=11 // pred_region
          _
        $region48: #{tpu_custom_call.1} parent=11 // pred_fallthru
          _
        // Predicated region
        $region49: #{tpu_custom_call.1} parent=11 // pred_check
          %p391 = pneg %p260
        $region50: #{tpu_custom_call.1} parent=11 // pred_check_branch
          %393 = sbr.rel (%p391) target = $region52
        $region51: #{tpu_custom_call.1} parent=11 // pred_region
          %s395 = ssub.s32 16, 16
          %396 = vsyncadd [#allocation5], %s395
          %s398 = sshll.u32 %s10, 4
          %s399 = int_to_ptr.vmem [resolvable:$true] %s398
          %401 = dma.vmem_to_smem %s399, 16, [#allocation3], [#allocation5]
        $region52: #{tpu_custom_call.1} parent=11 // pred_fallthru
          _
        // Predicated region
        $region53: #{tpu_custom_call.1} parent=11 // pred_check
          %p402 = pneg %p281
        $region54: #{tpu_custom_call.1} parent=11 // pred_check_branch
          %404 = sbr.rel (%p402) target = $region56
        $region55: #{tpu_custom_call.1} parent=11 // pred_region
          _
        $region56: #{tpu_custom_call.1} parent=11 // pred_fallthru
          _
        // Predicated region
        $region57: #{tpu_custom_call.1} parent=11 // pred_check
          %p405 = pneg %p302
        $region58: #{tpu_custom_call.1} parent=11 // pred_check_branch
          %407 = sbr.rel (%p405) target = $region60
        $region59: #{tpu_custom_call.1} parent=11 // pred_region
          _
        $region60: #{tpu_custom_call.1} parent=11 // pred_fallthru
          _
        // Predicated region
        $region61: #{tpu_custom_call.1} parent=11 // pred_check
          %p408 = pneg %p323
        $region62: #{tpu_custom_call.1} parent=11 // pred_check_branch
          %410 = sbr.rel (%p408) target = $region64
        $region63: #{tpu_custom_call.1} parent=11 // pred_region
          _
        $region64: #{tpu_custom_call.1} parent=11 // pred_fallthru
          _
      $region12: #{tpu_custom_call.1} parent=5 // pred_fallthru
        _
      %p411 = scmp.lt.s32.totalorder %s24, 4
      // Predicated region
      $region65: #{tpu_custom_call.1} parent=5 // pred_check
        %p412 = pneg %p411
      $region66: #{tpu_custom_call.1} parent=5 // pred_check_branch
        %414 = sbr.rel (%p412) target = $region68
      $region67: #{tpu_custom_call.1} parent=5 // pred_region
        // Predicated region
        $region69: #{tpu_custom_call.1} parent=67 // pred_check
          %p415 = pneg %p44
        $region70: #{tpu_custom_call.1} parent=67 // pred_check_branch
          %417 = sbr.rel (%p415) target = $region72
        $region71: #{tpu_custom_call.1} parent=67 // pred_region
          %p418 = scmp.lt.s32.totalorder %s24, 3
          %s419 = scalar_select %p418, %s24, 3
          %s420 = smul.addr %s419, 32
          %s421 = smul.addr %s420, 8
          %s422 = scalar_lea.vmem %s0, %s421
        $region72: #{tpu_custom_call.1} parent=67 // pred_fallthru
          _
      $region68: #{tpu_custom_call.1} parent=5 // pred_fallthru
        _
      %p423 = scmp.le.s32.totalorder 1, %s24
      %p424 = scmp.lt.s32.totalorder %s24, 5
      %p425 = pnand %p423, %p424
      %p426 = pneg %p425
      // Predicated region
      $region73: #{tpu_custom_call.1} parent=5 // pred_check
        _
      $region74: #{tpu_custom_call.1} parent=5 // pred_check_branch
        %428 = sbr.rel (%p425) target = $region76
      $region75: #{tpu_custom_call.1} parent=5 // pred_region
        %s429 = ssub.s32 %s24, 1
        // Predicated region
        $region77: #{tpu_custom_call.1} parent=75 // pred_check
          %p430 = pneg %p260
        $region78: #{tpu_custom_call.1} parent=75 // pred_check_branch
          %432 = sbr.rel (%p430) target = $region80
        $region79: #{tpu_custom_call.1} parent=75 // pred_region
          %433 = dma.done [#allocation5], 16
        $region80: #{tpu_custom_call.1} parent=75 // pred_fallthru
          _
        %434 = sfence
        %p435 = scmp.lt.s32.totalorder %s29, 3
        %s436 = scalar_select %p435, %s29, 3
        %s437 = smul.addr %s436, 32
        %s438 = smul.addr %s437, 8
        %s439 = scalar_lea.vmem %s0, %s438
        %p440 = pneg %p50
        %p441 = pneg %p47
        %p442 = pneg %p71
        %p443 = pneg %p68
        %p444 = pneg %p92
        %p445 = pneg %p89
        %p446 = pneg %p113
        %p447 = pneg %p110
        %p448 = pneg %p134
        %p449 = pneg %p131
        %p450 = pneg %p155
        %p451 = pneg %p152
        %p452 = pneg %p176
        %p453 = pneg %p173
        %p454 = pneg %p197
        %p455 = pneg %p194
        %p456 = pneg %p218
        %p457 = pneg %p215
        %p458 = pneg %p239
        %p459 = pneg %p236
        %p460 = pneg %p260
        %p461 = pneg %p257
        %p462 = pneg %p281
        %p463 = pneg %p278
        %p464 = pneg %p302
        %p465 = pneg %p299
        %p466 = pneg %p323
        %p467 = pneg %p320
        %p468 = pneg %p349
        %p469 = pneg %p346
        %s470 = sand.u32 %s336, 1
        %s471 = scalar_lea.sflag [#allocation4], %s470
        %s472 = sand.u32 %s336, 1
        %s473 = smul.addr %s472, 256
        %s474 = scalar_lea.vmem [#allocation6], %s473
        %p475 = scmp.lt.s32.totalorder %s29, 3
        %s476 = scalar_select %p475, %s29, 3
        %s477 = smul.addr %s476, 32
        %s478 = smul.addr %s477, 8
        %s479 = scalar_lea.vmem %s0, %s478
        %v481 = vld [vmem:[%s479] sm:$0xff]
        %v482 = vld [vmem:[%s479 + $0x8] sm:$0xff]
        %v483 = vld [vmem:[%s479 + $0x10] sm:$0xff]
        %v484 = vld [vmem:[%s479 + $0x18] sm:$0xff]
        %v485 = vld [vmem:[%s479 + $0x20] sm:$0xff]
        %v486 = vld [vmem:[%s479 + $0x28] sm:$0xff]
        %v487 = vld [vmem:[%s479 + $0x30] sm:$0xff]
        %v488 = vld [vmem:[%s479 + $0x38] sm:$0xff]
        %v489 = vld [vmem:[%s479 + $0x40] sm:$0xff]
        %v490 = vld [vmem:[%s479 + $0x48] sm:$0xff]
        %v491 = vld [vmem:[%s479 + $0x50] sm:$0xff]
        %v492 = vld [vmem:[%s479 + $0x58] sm:$0xff]
        %v493 = vld [vmem:[%s479 + $0x60] sm:$0xff]
        %v494 = vld [vmem:[%s479 + $0x68] sm:$0xff]
        %v495 = vld [vmem:[%s479 + $0x70] sm:$0xff]
        %v496 = vld [vmem:[%s479 + $0x78] sm:$0xff]
        %v497 = vld [vmem:[%s479 + $0x80] sm:$0xff]
        %v498 = vld [vmem:[%s479 + $0x88] sm:$0xff]
        %v499 = vld [vmem:[%s479 + $0x90] sm:$0xff]
        %v500 = vld [vmem:[%s479 + $0x98] sm:$0xff]
        %v501 = vld [vmem:[%s479 + $0xa0] sm:$0xff]
        %v502 = vld [vmem:[%s479 + $0xa8] sm:$0xff]
        %v503 = vld [vmem:[%s479 + $0xb0] sm:$0xff]
        %v504 = vld [vmem:[%s479 + $0xb8] sm:$0xff]
        %v505 = vld [vmem:[%s479 + $0xc0] sm:$0xff]
        %v506 = vld [vmem:[%s479 + $0xc8] sm:$0xff]
        %v507 = vld [vmem:[%s479 + $0xd0] sm:$0xff]
        %v508 = vld [vmem:[%s479 + $0xd8] sm:$0xff]
        %v509 = vld [vmem:[%s479 + $0xe0] sm:$0xff]
        %v510 = vld [vmem:[%s479 + $0xe8] sm:$0xff]
        %v511 = vld [vmem:[%s479 + $0xf0] sm:$0xff]
        %v512 = vld [vmem:[%s479 + $0xf8] sm:$0xff]
        %v513 = vpack.c.bf16 %v482, %v481
        %v514 = vpack.c.bf16 %v484, %v483
        %v515 = vpack.c.bf16 %v486, %v485
        %v516 = vpack.c.bf16 %v488, %v487
        %v517 = vpack.c.bf16 %v490, %v489
        %v518 = vpack.c.bf16 %v492, %v491
        %v519 = vpack.c.bf16 %v494, %v493
        %v520 = vpack.c.bf16 %v496, %v495
        %v521 = vpack.c.bf16 %v498, %v497
        %v522 = vpack.c.bf16 %v500, %v499
        %v523 = vpack.c.bf16 %v502, %v501
        %v524 = vpack.c.bf16 %v504, %v503
        %v525 = vpack.c.bf16 %v506, %v505
        %v526 = vpack.c.bf16 %v508, %v507
        %v527 = vpack.c.bf16 %v510, %v509
        %v528 = vpack.c.bf16 %v512, %v511
        %v529 = vld [vmem:[%s1] sm:$0xf]
        %v530 = vld [vmem:[%s1 + $0x4] sm:$0xf]
        %v533 = vunpack.c.l.b16 %v529
        %v534 = vunpack.c.l.b16 %v530
        %v535 = vpack.c.b16 %v534, %v533
        %vm537 = vcmask 130048
        %v539 = vsel %vm537, %v513, 0
        %v542 = vsel %vm537, %v514, 0
        %v545 = vsel %vm537, %v515, 0
        %v548 = vsel %vm537, %v516, 0
        %v551 = vsel %vm537, %v517, 0
        %v554 = vsel %vm537, %v518, 0
        %v557 = vsel %vm537, %v519, 0
        %v560 = vsel %vm537, %v520, 0
        %v563 = vsel %vm537, %v521, 0
        %v566 = vsel %vm537, %v522, 0
        %v569 = vsel %vm537, %v523, 0
        %v572 = vsel %vm537, %v524, 0
        %v575 = vsel %vm537, %v525, 0
        %v578 = vsel %vm537, %v526, 0
        %v581 = vsel %vm537, %v527, 0
        %v584 = vsel %vm537, %v528, 0
        %586 = vmatprep.subr.bf16.mxu0 0
        %587 = vmatpush1.bf16.msra.mxu0 %v535
        %588 = vmatprep.subr.bf16.mxu0 0
        %589 = vmatpush1.bf16.msra.mxu0 0
        %590 = vmatprep.subr.bf16.mxu0 0
        %591 = vmatpush1.bf16.msra.mxu0 0
        %592 = vmatprep.subr.bf16.mxu0 0
        %593 = vmatpush1.bf16.msra.mxu0 0
        %594 = vmatprep.subr.bf16.mxu0 0
        %595 = vmatpush1.bf16.msra.mxu0 0
        %596 = vmatprep.subr.bf16.mxu0 0
        %597 = vmatpush1.bf16.msra.mxu0 0
        %598 = vmatprep.subr.bf16.mxu0 0
        %599 = vmatpush1.bf16.msra.mxu0 0
        %600 = vmatprep.subr.bf16.mxu0 0
        %601 = vmatpush1.bf16.msra.mxu0 0
        %602 = vmatprep.subr.bf16.mxu0 0
        %603 = vmatpush1.bf16.msra.mxu0 0
        %604 = vmatprep.subr.bf16.mxu0 0
        %605 = vmatpush1.bf16.msra.mxu0 0
        %606 = vmatprep.subr.bf16.mxu0 0
        %607 = vmatpush1.bf16.msra.mxu0 0
        %608 = vmatprep.subr.bf16.mxu0 0
        %609 = vmatpush1.bf16.msra.mxu0 0
        %610 = vmatprep.subr.bf16.mxu0 0
        %611 = vmatpush1.bf16.msra.mxu0 0
        %612 = vmatprep.subr.bf16.mxu0 0
        %613 = vmatpush1.bf16.msra.mxu0 0
        %614 = vmatprep.subr.bf16.mxu0 0
        %615 = vmatpush1.bf16.msra.mxu0 0
        %616 = vmatprep.subr.bf16.mxu0 0
        %617 = vmatpush1.bf16.msra.mxu0 0
        %618 = vmatprep.mubr.bf16.mxu0 0
        %619 = vmatmul.mubr.bf16.gmra.mrb[0].mxu0 %v539
        %v620 = vpop.f32.mrb[0].mxu0
        %v621 = vadd.f32 0.0, %v620
        %v622 = vpop.f32.mrb[0].mxu0
        %v623 = vpop.f32.mrb[0].mxu0
        %v624 = vadd.f32 0.0, %v623
        %v625 = vpop.f32.mrb[0].mxu0
        %626 = vmatprep.mubr.bf16.mxu0 0
        %627 = vmatmul.mubr.bf16.gmra.mrb[0].mxu0 %v542
        %v628 = vpop.f32.mrb[0].mxu0
        %v629 = vadd.f32 0.0, %v628
        %v630 = vpop.f32.mrb[0].mxu0
        %v631 = vpop.f32.mrb[0].mxu0
        %v632 = vadd.f32 0.0, %v631
        %v633 = vpop.f32.mrb[0].mxu0
        %634 = vmatprep.mubr.bf16.mxu0 0
        %635 = vmatmul.mubr.bf16.gmra.mrb[0].mxu0 %v545
        %v636 = vpop.f32.mrb[0].mxu0
        %v637 = vadd.f32 0.0, %v636
        %v638 = vpop.f32.mrb[0].mxu0
        %v639 = vpop.f32.mrb[0].mxu0
        %v640 = vadd.f32 0.0, %v639
        %v641 = vpop.f32.mrb[0].mxu0
        %642 = vmatprep.mubr.bf16.mxu0 0
        %643 = vmatmul.mubr.bf16.gmra.mrb[0].mxu0 %v548
        %v644 = vpop.f32.mrb[0].mxu0
        %v645 = vadd.f32 0.0, %v644
        %v646 = vpop.f32.mrb[0].mxu0
        %v647 = vpop.f32.mrb[0].mxu0
        %v648 = vadd.f32 0.0, %v647
        %v649 = vpop.f32.mrb[0].mxu0
        %650 = vmatprep.mubr.bf16.mxu0 0
        %651 = vmatmul.mubr.bf16.gmra.mrb[0].mxu0 %v551
        %v652 = vpop.f32.mrb[0].mxu0
        %v653 = vadd.f32 0.0, %v652
        %v654 = vpop.f32.mrb[0].mxu0
        %v655 = vpop.f32.mrb[0].mxu0
        %v656 = vadd.f32 0.0, %v655
        %v657 = vpop.f32.mrb[0].mxu0
        %658 = vmatprep.mubr.bf16.mxu0 0
        %659 = vmatmul.mubr.bf16.gmra.mrb[0].mxu0 %v554
        %v660 = vpop.f32.mrb[0].mxu0
        %v661 = vadd.f32 0.0, %v660
        %v662 = vpop.f32.mrb[0].mxu0
        %v663 = vpop.f32.mrb[0].mxu0
        %v664 = vadd.f32 0.0, %v663
        %v665 = vpop.f32.mrb[0].mxu0
        %666 = vmatprep.mubr.bf16.mxu0 0
        %667 = vmatmul.mubr.bf16.gmra.mrb[0].mxu0 %v557
        %v668 = vpop.f32.mrb[0].mxu0
        %v669 = vadd.f32 0.0, %v668
        %v670 = vpop.f32.mrb[0].mxu0
        %v671 = vpop.f32.mrb[0].mxu0
        %v672 = vadd.f32 0.0, %v671
        %v673 = vpop.f32.mrb[0].mxu0
        %674 = vmatprep.mubr.bf16.mxu0 0
        %675 = vmatmul.mubr.bf16.gmra.mrb[0].mxu0 %v560
        %v676 = vpop.f32.mrb[0].mxu0
        %v677 = vadd.f32 0.0, %v676
        %v678 = vpop.f32.mrb[0].mxu0
        %v679 = vpop.f32.mrb[0].mxu0
        %v680 = vadd.f32 0.0, %v679
        %v681 = vpop.f32.mrb[0].mxu0
        %682 = vmatprep.mubr.bf16.mxu0 0
        %683 = vmatmul.mubr.bf16.gmra.mrb[0].mxu0 %v563
        %v684 = vpop.f32.mrb[0].mxu0
        %v685 = vadd.f32 0.0, %v684
        %v686 = vpop.f32.mrb[0].mxu0
        %v687 = vpop.f32.mrb[0].mxu0
        %v688 = vadd.f32 0.0, %v687
        %v689 = vpop.f32.mrb[0].mxu0
        %690 = vmatprep.mubr.bf16.mxu0 0
        %691 = vmatmul.mubr.bf16.gmra.mrb[0].mxu0 %v566
        %v692 = vpop.f32.mrb[0].mxu0
        %v693 = vadd.f32 0.0, %v692
        %v694 = vpop.f32.mrb[0].mxu0
        %v695 = vpop.f32.mrb[0].mxu0
        %v696 = vadd.f32 0.0, %v695
        %v697 = vpop.f32.mrb[0].mxu0
        %698 = vmatprep.mubr.bf16.mxu0 0
        %699 = vmatmul.mubr.bf16.gmra.mrb[0].mxu0 %v569
        %v700 = vpop.f32.mrb[0].mxu0
        %v701 = vadd.f32 0.0, %v700
        %v702 = vpop.f32.mrb[0].mxu0
        %v703 = vpop.f32.mrb[0].mxu0
        %v704 = vadd.f32 0.0, %v703
        %v705 = vpop.f32.mrb[0].mxu0
        %706 = vmatprep.mubr.bf16.mxu0 0
        %707 = vmatmul.mubr.bf16.gmra.mrb[0].mxu0 %v572
        %v708 = vpop.f32.mrb[0].mxu0
        %v709 = vadd.f32 0.0, %v708
        %v710 = vpop.f32.mrb[0].mxu0
        %v711 = vpop.f32.mrb[0].mxu0
        %v712 = vadd.f32 0.0, %v711
        %v713 = vpop.f32.mrb[0].mxu0
        %714 = vmatprep.mubr.bf16.mxu0 0
        %715 = vmatmul.mubr.bf16.gmra.mrb[0].mxu0 %v575
        %v716 = vpop.f32.mrb[0].mxu0
        %v717 = vadd.f32 0.0, %v716
        %v718 = vpop.f32.mrb[0].mxu0
        %v719 = vpop.f32.mrb[0].mxu0
        %v720 = vadd.f32 0.0, %v719
        %v721 = vpop.f32.mrb[0].mxu0
        %722 = vmatprep.mubr.bf16.mxu0 0
        %723 = vmatmul.mubr.bf16.gmra.mrb[0].mxu0 %v578
        %v724 = vpop.f32.mrb[0].mxu0
        %v725 = vadd.f32 0.0, %v724
        %v726 = vpop.f32.mrb[0].mxu0
        %v727 = vpop.f32.mrb[0].mxu0
        %v728 = vadd.f32 0.0, %v727
        %v729 = vpop.f32.mrb[0].mxu0
        %730 = vmatprep.mubr.bf16.mxu0 0
        %731 = vmatmul.mubr.bf16.gmra.mrb[0].mxu0 %v581
        %v732 = vpop.f32.mrb[0].mxu0
        %v733 = vadd.f32 0.0, %v732
        %v734 = vpop.f32.mrb[0].mxu0
        %v735 = vpop.f32.mrb[0].mxu0
        %v736 = vadd.f32 0.0, %v735
        %v737 = vpop.f32.mrb[0].mxu0
        %738 = vmatprep.mubr.bf16.mxu0 0
        %739 = vmatmul.mubr.bf16.gmra.mrb[0].mxu0 %v584
        %v740 = vpop.f32.mrb[0].mxu0
        %v741 = vadd.f32 0.0, %v740
        %v742 = vpop.f32.mrb[0].mxu0
        %v743 = vpop.f32.mrb[0].mxu0
        %v744 = vadd.f32 0.0, %v743
        %v745 = vpop.f32.mrb[0].mxu0
        %746 = vdwg.mxu0
        %v747 = vld [vmem:[%s2] sm:$0x1]
        %v749 = vlaneseq
        %v750 = vshrl.u32 %v749, 7
        %v751 = vsub.s32 0, %v750
        %v752 = vrot.slane %v747, %v751
        %v754 = vmul.f32 %v621, %v752
        %v755 = vmul.f32 %v624, %v752
        %v756 = vmul.f32 %v629, %v752
        %v757 = vmul.f32 %v632, %v752
        %v758 = vmul.f32 %v637, %v752
        %v759 = vmul.f32 %v640, %v752
        %v760 = vmul.f32 %v645, %v752
        %v761 = vmul.f32 %v648, %v752
        %v762 = vmul.f32 %v653, %v752
        %v763 = vmul.f32 %v656, %v752
        %v764 = vmul.f32 %v661, %v752
        %v765 = vmul.f32 %v664, %v752
        %v766 = vmul.f32 %v669, %v752
        %v767 = vmul.f32 %v672, %v752
        %v768 = vmul.f32 %v677, %v752
        %v769 = vmul.f32 %v680, %v752
        %v770 = vmul.f32 %v685, %v752
        %v771 = vmul.f32 %v688, %v752
        %v772 = vmul.f32 %v693, %v752
        %v773 = vmul.f32 %v696, %v752
        %v774 = vmul.f32 %v701, %v752
        %v775 = vmul.f32 %v704, %v752
        %v776 = vmul.f32 %v709, %v752
        %v777 = vmul.f32 %v712, %v752
        %v778 = vmul.f32 %v717, %v752
        %v779 = vmul.f32 %v720, %v752
        %v780 = vmul.f32 %v725, %v752
        %v781 = vmul.f32 %v728, %v752
        %v782 = vmul.f32 %v733, %v752
        %v783 = vmul.f32 %v736, %v752
        %v784 = vmul.f32 %v741, %v752
        %v785 = vmul.f32 %v744, %v752
        %v786 = vld [vmem:[%s3] sm:$0x1]
        %v788 = vlaneseq
        %v789 = vshrl.u32 %v788, 7
        %v790 = vsub.s32 0, %v789
        %v791 = vrot.slane %v786, %v790
        %v793 = vadd.f32 %v754, %v791
        %v794 = vadd.f32 %v755, %v791
        %v795 = vadd.f32 %v756, %v791
        %v796 = vadd.f32 %v757, %v791
        %v797 = vadd.f32 %v758, %v791
        %v798 = vadd.f32 %v759, %v791
        %v799 = vadd.f32 %v760, %v791
        %v800 = vadd.f32 %v761, %v791
        %v801 = vadd.f32 %v762, %v791
        %v802 = vadd.f32 %v763, %v791
        %v803 = vadd.f32 %v764, %v791
        %v804 = vadd.f32 %v765, %v791
        %v805 = vadd.f32 %v766, %v791
        %v806 = vadd.f32 %v767, %v791
        %v807 = vadd.f32 %v768, %v791
        %v808 = vadd.f32 %v769, %v791
        %v809 = vadd.f32 %v770, %v791
        %v810 = vadd.f32 %v771, %v791
        %v811 = vadd.f32 %v772, %v791
        %v812 = vadd.f32 %v773, %v791
        %v813 = vadd.f32 %v774, %v791
        %v814 = vadd.f32 %v775, %v791
        %v815 = vadd.f32 %v776, %v791
        %v816 = vadd.f32 %v777, %v791
        %v817 = vadd.f32 %v778, %v791
        %v818 = vadd.f32 %v779, %v791
        %v819 = vadd.f32 %v780, %v791
        %v820 = vadd.f32 %v781, %v791
        %v821 = vadd.f32 %v782, %v791
        %v822 = vadd.f32 %v783, %v791
        %v823 = vadd.f32 %v784, %v791
        %v824 = vadd.f32 %v785, %v791
        %v825 = vmax.f32 %v793, 0.0
        %v826 = vmax.f32 %v794, 0.0
        %v827 = vmax.f32 %v795, 0.0
        %v828 = vmax.f32 %v796, 0.0
        %v829 = vmax.f32 %v797, 0.0
        %v830 = vmax.f32 %v798, 0.0
        %v831 = vmax.f32 %v799, 0.0
        %v832 = vmax.f32 %v800, 0.0
        %v833 = vmax.f32 %v801, 0.0
        %v834 = vmax.f32 %v802, 0.0
        %v835 = vmax.f32 %v803, 0.0
        %v836 = vmax.f32 %v804, 0.0
        %v837 = vmax.f32 %v805, 0.0
        %v838 = vmax.f32 %v806, 0.0
        %v839 = vmax.f32 %v807, 0.0
        %v840 = vmax.f32 %v808, 0.0
        %v841 = vmax.f32 %v809, 0.0
        %v842 = vmax.f32 %v810, 0.0
        %v843 = vmax.f32 %v811, 0.0
        %v844 = vmax.f32 %v812, 0.0
        %v845 = vmax.f32 %v813, 0.0
        %v846 = vmax.f32 %v814, 0.0
        %v847 = vmax.f32 %v815, 0.0
        %v848 = vmax.f32 %v816, 0.0
        %v849 = vmax.f32 %v817, 0.0
        %v850 = vmax.f32 %v818, 0.0
        %v851 = vmax.f32 %v819, 0.0
        %v852 = vmax.f32 %v820, 0.0
        %v853 = vmax.f32 %v821, 0.0
        %v854 = vmax.f32 %v822, 0.0
        %v855 = vmax.f32 %v823, 0.0
        %v856 = vmax.f32 %v824, 0.0
        %vm857 = vcmask 261120
        %858 = vst.msk [vmem:[#allocation2] sm:$0xff] %vm857, 0.0
        %859 = vst.msk [vmem:[#allocation2 + $0x8] sm:$0xff] %vm857, 0.0
        %860 = vst.msk [vmem:[#allocation2 + $0x10] sm:$0xff] %vm857, 0.0
        %861 = vst.msk [vmem:[#allocation2 + $0x18] sm:$0xff] %vm857, 0.0
        %862 = vst.msk [vmem:[#allocation2 + $0x20] sm:$0xff] %vm857, 0.0
        %863 = vst.msk [vmem:[#allocation2 + $0x28] sm:$0xff] %vm857, 0.0
        %864 = vst.msk [vmem:[#allocation2 + $0x30] sm:$0xff] %vm857, 0.0
        %865 = vst.msk [vmem:[#allocation2 + $0x38] sm:$0xff] %vm857, 0.0
        %866 = vst.msk [vmem:[#allocation2 + $0x40] sm:$0xff] %vm857, 0.0
        %867 = vst.msk [vmem:[#allocation2 + $0x48] sm:$0xff] %vm857, 0.0
        %868 = vst.msk [vmem:[#allocation2 + $0x50] sm:$0xff] %vm857, 0.0
        %869 = vst.msk [vmem:[#allocation2 + $0x58] sm:$0xff] %vm857, 0.0
        %870 = vst.msk [vmem:[#allocation2 + $0x60] sm:$0xff] %vm857, 0.0
        %871 = vst.msk [vmem:[#allocation2 + $0x68] sm:$0xff] %vm857, 0.0
        %872 = vst.msk [vmem:[#allocation2 + $0x70] sm:$0xff] %vm857, 0.0
        %873 = vst.msk [vmem:[#allocation2 + $0x78] sm:$0xff] %vm857, 0.0
        %874 = vst.msk [vmem:[#allocation2 + $0x80] sm:$0xff] %vm857, 0.0
        %875 = vst.msk [vmem:[#allocation2 + $0x88] sm:$0xff] %vm857, 0.0
        %876 = vst.msk [vmem:[#allocation2 + $0x90] sm:$0xff] %vm857, 0.0
        %877 = vst.msk [vmem:[#allocation2 + $0x98] sm:$0xff] %vm857, 0.0
        %878 = vst.msk [vmem:[#allocation2 + $0xa0] sm:$0xff] %vm857, 0.0
        %879 = vst.msk [vmem:[#allocation2 + $0xa8] sm:$0xff] %vm857, 0.0
        %880 = vst.msk [vmem:[#allocation2 + $0xb0] sm:$0xff] %vm857, 0.0
        %881 = vst.msk [vmem:[#allocation2 + $0xb8] sm:$0xff] %vm857, 0.0
        %882 = vst.msk [vmem:[#allocation2 + $0xc0] sm:$0xff] %vm857, 0.0
        %883 = vst.msk [vmem:[#allocation2 + $0xc8] sm:$0xff] %vm857, 0.0
        %884 = vst.msk [vmem:[#allocation2 + $0xd0] sm:$0xff] %vm857, 0.0
        %885 = vst.msk [vmem:[#allocation2 + $0xd8] sm:$0xff] %vm857, 0.0
        %886 = vst.msk [vmem:[#allocation2 + $0xe0] sm:$0xff] %vm857, 0.0
        %887 = vst.msk [vmem:[#allocation2 + $0xe8] sm:$0xff] %vm857, 0.0
        %888 = vst.msk [vmem:[#allocation2 + $0xf0] sm:$0xff] %vm857, 0.0
        %889 = vst.msk [vmem:[#allocation2 + $0xf8] sm:$0xff] %vm857, 0.0
        %890 = vst.msk [vmem:[#allocation2 + $0x100] sm:$0xff] %vm857, 0.0
        %891 = vst.msk [vmem:[#allocation2 + $0x108] sm:$0xff] %vm857, 0.0
        %892 = vst.msk [vmem:[#allocation2 + $0x110] sm:$0xff] %vm857, 0.0
        %893 = vst.msk [vmem:[#allocation2 + $0x118] sm:$0xff] %vm857, 0.0
        %894 = vst.msk [vmem:[#allocation2 + $0x120] sm:$0xff] %vm857, 0.0
        %895 = vst.msk [vmem:[#allocation2 + $0x128] sm:$0xff] %vm857, 0.0
        %896 = vst.msk [vmem:[#allocation2 + $0x130] sm:$0xff] %vm857, 0.0
        %897 = vst.msk [vmem:[#allocation2 + $0x138] sm:$0xff] %vm857, 0.0
        %898 = vst.msk [vmem:[#allocation2 + $0x140] sm:$0xff] %vm857, 0.0
        %899 = vst.msk [vmem:[#allocation2 + $0x148] sm:$0xff] %vm857, 0.0
        %900 = vst.msk [vmem:[#allocation2 + $0x150] sm:$0xff] %vm857, 0.0
        %901 = vst.msk [vmem:[#allocation2 + $0x158] sm:$0xff] %vm857, 0.0
        %902 = vst.msk [vmem:[#allocation2 + $0x160] sm:$0xff] %vm857, 0.0
        %903 = vst.msk [vmem:[#allocation2 + $0x168] sm:$0xff] %vm857, 0.0
        %904 = vst.msk [vmem:[#allocation2 + $0x170] sm:$0xff] %vm857, 0.0
        %905 = vst.msk [vmem:[#allocation2 + $0x178] sm:$0xff] %vm857, 0.0
        %906 = vst.msk [vmem:[#allocation2 + $0x180] sm:$0xff] %vm857, 0.0
        %907 = vst.msk [vmem:[#allocation2 + $0x188] sm:$0xff] %vm857, 0.0
        %908 = vst.msk [vmem:[#allocation2 + $0x190] sm:$0xff] %vm857, 0.0
        %909 = vst.msk [vmem:[#allocation2 + $0x198] sm:$0xff] %vm857, 0.0
        %910 = vst.msk [vmem:[#allocation2 + $0x1a0] sm:$0xff] %vm857, 0.0
        %911 = vst.msk [vmem:[#allocation2 + $0x1a8] sm:$0xff] %vm857, 0.0
        %s912 = scalar_lea.vmem [#allocation2], 24
        %913 = vst.msk [vmem:[%s912 + $0x1] sm:$0xff] %vm857, %v825
        %914 = vst.msk [vmem:[%s912 + $0x9] sm:$0xff] %vm857, %v826
        %915 = vst.msk [vmem:[%s912 + $0x19] sm:$0xff] %vm857, %v827
        %916 = vst.msk [vmem:[%s912 + $0x21] sm:$0xff] %vm857, %v828
        %917 = vst.msk [vmem:[%s912 + $0x31] sm:$0xff] %vm857, %v829
        %918 = vst.msk [vmem:[%s912 + $0x39] sm:$0xff] %vm857, %v830
        %919 = vst.msk [vmem:[%s912 + $0x49] sm:$0xff] %vm857, %v831
        %920 = vst.msk [vmem:[%s912 + $0x51] sm:$0xff] %vm857, %v832
        %921 = vst.msk [vmem:[%s912 + $0x61] sm:$0xff] %vm857, %v833
        %922 = vst.msk [vmem:[%s912 + $0x69] sm:$0xff] %vm857, %v834
        %923 = vst.msk [vmem:[%s912 + $0x79] sm:$0xff] %vm857, %v835
        %924 = vst.msk [vmem:[%s912 + $0x81] sm:$0xff] %vm857, %v836
        %925 = vst.msk [vmem:[%s912 + $0x91] sm:$0xff] %vm857, %v837
        %926 = vst.msk [vmem:[%s912 + $0x99] sm:$0xff] %vm857, %v838
        %927 = vst.msk [vmem:[%s912 + $0xa9] sm:$0xff] %vm857, %v839
        %928 = vst.msk [vmem:[%s912 + $0xb1] sm:$0xff] %vm857, %v840
        %929 = vst.msk [vmem:[%s912 + $0xc1] sm:$0xff] %vm857, %v841
        %930 = vst.msk [vmem:[%s912 + $0xc9] sm:$0xff] %vm857, %v842
        %931 = vst.msk [vmem:[%s912 + $0xd9] sm:$0xff] %vm857, %v843
        %932 = vst.msk [vmem:[%s912 + $0xe1] sm:$0xff] %vm857, %v844
        %933 = vst.msk [vmem:[%s912 + $0xf1] sm:$0xff] %vm857, %v845
        %934 = vst.msk [vmem:[%s912 + $0xf9] sm:$0xff] %vm857, %v846
        %935 = vst.msk [vmem:[%s912 + $0x109] sm:$0xff] %vm857, %v847
        %936 = vst.msk [vmem:[%s912 + $0x111] sm:$0xff] %vm857, %v848
        %937 = vst.msk [vmem:[%s912 + $0x121] sm:$0xff] %vm857, %v849
        %938 = vst.msk [vmem:[%s912 + $0x129] sm:$0xff] %vm857, %v850
        %939 = vst.msk [vmem:[%s912 + $0x139] sm:$0xff] %vm857, %v851
        %940 = vst.msk [vmem:[%s912 + $0x141] sm:$0xff] %vm857, %v852
        %941 = vst.msk [vmem:[%s912 + $0x151] sm:$0xff] %vm857, %v853
        %942 = vst.msk [vmem:[%s912 + $0x159] sm:$0xff] %vm857, %v854
        %943 = vst.msk [vmem:[%s912 + $0x169] sm:$0xff] %vm857, %v855
        %944 = vst.msk [vmem:[%s912 + $0x171] sm:$0xff] %vm857, %v856
        %v945 = vld [vmem:[#allocation2] sm:$0xff]
        %v946 = vld [vmem:[#allocation2 + $0x8] sm:$0xff]
        %v947 = vld [vmem:[#allocation2 + $0x18] sm:$0xff]
        %v948 = vld [vmem:[#allocation2 + $0x20] sm:$0xff]
        %v949 = vld [vmem:[#allocation2 + $0x30] sm:$0xff]
        %v950 = vld [vmem:[#allocation2 + $0x38] sm:$0xff]
        %v951 = vld [vmem:[#allocation2 + $0x48] sm:$0xff]
        %v952 = vld [vmem:[#allocation2 + $0x50] sm:$0xff]
        %v953 = vld [vmem:[#allocation2 + $0x60] sm:$0xff]
        %v954 = vld [vmem:[#allocation2 + $0x68] sm:$0xff]
        %v955 = vld [vmem:[#allocation2 + $0x78] sm:$0xff]
        %v956 = vld [vmem:[#allocation2 + $0x80] sm:$0xff]
        %v957 = vld [vmem:[#allocation2 + $0x90] sm:$0xff]
        %v958 = vld [vmem:[#allocation2 + $0x98] sm:$0xff]
        %v959 = vld [vmem:[#allocation2 + $0xa8] sm:$0xff]
        %v960 = vld [vmem:[#allocation2 + $0xb0] sm:$0xff]
        %v961 = vld [vmem:[#allocation2 + $0xc0] sm:$0xff]
        %v962 = vld [vmem:[#allocation2 + $0xc8] sm:$0xff]
        %v963 = vld [vmem:[#allocation2 + $0xd8] sm:$0xff]
        %v964 = vld [vmem:[#allocation2 + $0xe0] sm:$0xff]
        %v965 = vld [vmem:[#allocation2 + $0xf0] sm:$0xff]
        %v966 = vld [vmem:[#allocation2 + $0xf8] sm:$0xff]
        %v967 = vld [vmem:[#allocation2 + $0x108] sm:$0xff]
        %v968 = vld [vmem:[#allocation2 + $0x110] sm:$0xff]
        %v969 = vld [vmem:[#allocation2 + $0x120] sm:$0xff]
        %v970 = vld [vmem:[#allocation2 + $0x128] sm:$0xff]
        %v971 = vld [vmem:[#allocation2 + $0x138] sm:$0xff]
        %v972 = vld [vmem:[#allocation2 + $0x140] sm:$0xff]
        %v973 = vld [vmem:[#allocation2 + $0x150] sm:$0xff]
        %v974 = vld [vmem:[#allocation2 + $0x158] sm:$0xff]
        %v975 = vld [vmem:[#allocation2 + $0x168] sm:$0xff]
        %v976 = vld [vmem:[#allocation2 + $0x170] sm:$0xff]
        %v977 = vpack.c.bf16 %v946, %v945
        %v978 = vpack.c.bf16 %v948, %v947
        %v979 = vpack.c.bf16 %v950, %v949
        %v980 = vpack.c.bf16 %v952, %v951
        %v981 = vpack.c.bf16 %v954, %v953
        %v982 = vpack.c.bf16 %v956, %v955
        %v983 = vpack.c.bf16 %v958, %v957
        %v984 = vpack.c.bf16 %v960, %v959
        %v985 = vpack.c.bf16 %v962, %v961
        %v986 = vpack.c.bf16 %v964, %v963
        %v987 = vpack.c.bf16 %v966, %v965
        %v988 = vpack.c.bf16 %v968, %v967
        %v989 = vpack.c.bf16 %v970, %v969
        %v990 = vpack.c.bf16 %v972, %v971
        %v991 = vpack.c.bf16 %v974, %v973
        %v992 = vpack.c.bf16 %v976, %v975
        %v993 = vld [vmem:[%s4] sm:$0xf]
        %v994 = vld [vmem:[%s4 + $0x4] sm:$0xf]
        %v995 = vld [vmem:[%s4 + $0x8] sm:$0xf]
        %v996 = vld [vmem:[%s4 + $0xc] sm:$0xf]
        %v997 = vld [vmem:[#allocation2 + $0x1] sm:$0xff]
        %v998 = vld [vmem:[#allocation2 + $0x9] sm:$0xff]
        %v999 = vld [vmem:[#allocation2 + $0x19] sm:$0xff]
        %v1000 = vld [vmem:[#allocation2 + $0x21] sm:$0xff]
        %v1001 = vld [vmem:[#allocation2 + $0x31] sm:$0xff]
        %v1002 = vld [vmem:[#allocation2 + $0x39] sm:$0xff]
        %v1003 = vld [vmem:[#allocation2 + $0x49] sm:$0xff]
        %v1004 = vld [vmem:[#allocation2 + $0x51] sm:$0xff]
        %v1005 = vld [vmem:[#allocation2 + $0x61] sm:$0xff]
        %v1006 = vld [vmem:[#allocation2 + $0x69] sm:$0xff]
        %v1007 = vld [vmem:[#allocation2 + $0x79] sm:$0xff]
        %v1008 = vld [vmem:[#allocation2 + $0x81] sm:$0xff]
        %v1009 = vld [vmem:[#allocation2 + $0x91] sm:$0xff]
        %v1010 = vld [vmem:[#allocation2 + $0x99] sm:$0xff]
        %v1011 = vld [vmem:[#allocation2 + $0xa9] sm:$0xff]
        %v1012 = vld [vmem:[#allocation2 + $0xb1] sm:$0xff]
        %v1013 = vld [vmem:[#allocation2 + $0xc1] sm:$0xff]
        %v1014 = vld [vmem:[#allocation2 + $0xc9] sm:$0xff]
        %v1015 = vld [vmem:[#allocation2 + $0xd9] sm:$0xff]
        %v1016 = vld [vmem:[#allocation2 + $0xe1] sm:$0xff]
        %v1017 = vld [vmem:[#allocation2 + $0xf1] sm:$0xff]
        %v1018 = vld [vmem:[#allocation2 + $0xf9] sm:$0xff]
        %v1019 = vld [vmem:[#allocation2 + $0x109] sm:$0xff]
        %v1020 = vld [vmem:[#allocation2 + $0x111] sm:$0xff]
        %v1021 = vld [vmem:[#allocation2 + $0x121] sm:$0xff]
        %v1022 = vld [vmem:[#allocation2 + $0x129] sm:$0xff]
        %v1023 = vld [vmem:[#allocation2 + $0x139] sm:$0xff]
        %v1024 = vld [vmem:[#allocation2 + $0x141] sm:$0xff]
        %v1025 = vld [vmem:[#allocation2 + $0x151] sm:$0xff]
        %v1026 = vld [vmem:[#allocation2 + $0x159] sm:$0xff]
        %v1027 = vld [vmem:[#allocation2 + $0x169] sm:$0xff]
        %v1028 = vld [vmem:[#allocation2 + $0x171] sm:$0xff]
        %v1029 = vpack.c.bf16 %v998, %v997
        %v1030 = vpack.c.bf16 %v1000, %v999
        %v1031 = vpack.c.bf16 %v1002, %v1001
        %v1032 = vpack.c.bf16 %v1004, %v1003
        %v1033 = vpack.c.bf16 %v1006, %v1005
        %v1034 = vpack.c.bf16 %v1008, %v1007
        %v1035 = vpack.c.bf16 %v1010, %v1009
        %v1036 = vpack.c.bf16 %v1012, %v1011
        %v1037 = vpack.c.bf16 %v1014, %v1013
        %v1038 = vpack.c.bf16 %v1016, %v1015
        %v1039 = vpack.c.bf16 %v1018, %v1017
        %v1040 = vpack.c.bf16 %v1020, %v1019
        %v1041 = vpack.c.bf16 %v1022, %v1021
        %v1042 = vpack.c.bf16 %v1024, %v1023
        %v1043 = vpack.c.bf16 %v1026, %v1025
        %v1044 = vpack.c.bf16 %v1028, %v1027
        %s1045 = scalar_lea.vmem %s4, 16
        %v1046 = vld [vmem:[%s1045] sm:$0xf]
        %v1047 = vld [vmem:[%s1045 + $0x4] sm:$0xf]
        %v1048 = vld [vmem:[%s1045 + $0x8] sm:$0xf]
        %v1049 = vld [vmem:[%s1045 + $0xc] sm:$0xf]
        %v1054 = vunpack.c.l.b16 %v1046
        %v1055 = vunpack.c.l.b16 %v1047
        %v1056 = vunpack.c.l.b16 %v1048
        %v1057 = vunpack.c.l.b16 %v1049
        %v1058 = vpack.c.b16 %v1055, %v1054
        %v1059 = vpack.c.b16 %v1057, %v1056
        %v1063 = vsel %vm857, %v1029, 0
        %v1066 = vsel %vm857, %v1030, 0
        %v1069 = vsel %vm857, %v1031, 0
        %v1072 = vsel %vm857, %v1032, 0
        %v1075 = vsel %vm857, %v1033, 0
        %v1078 = vsel %vm857, %v1034, 0
        %v1081 = vsel %vm857, %v1035, 0
        %v1084 = vsel %vm857, %v1036, 0
        %v1087 = vsel %vm857, %v1037, 0
        %v1090 = vsel %vm857, %v1038, 0
        %v1093 = vsel %vm857, %v1039, 0
        %v1096 = vsel %vm857, %v1040, 0
        %v1099 = vsel %vm857, %v1041, 0
        %v1102 = vsel %vm857, %v1042, 0
        %v1105 = vsel %vm857, %v1043, 0
        %v1108 = vsel %vm857, %v1044, 0
        %1110 = vmatprep.subr.bf16.mxu0 0
        %1111 = vmatpush1.bf16.msra.mxu0 %v1058
        %1112 = vmatprep.subr.bf16.mxu0 0
        %1113 = vmatpush1.bf16.msra.mxu0 %v1059
        %1114 = vmatprep.subr.bf16.mxu0 0
        %1115 = vmatpush1.bf16.msra.mxu0 0
        %1116 = vmatprep.subr.bf16.mxu0 0
        %1117 = vmatpush1.bf16.msra.mxu0 0
        %1118 = vmatprep.subr.bf16.mxu0 0
        %1119 = vmatpush1.bf16.msra.mxu0 0
        %1120 = vmatprep.subr.bf16.mxu0 0
        %1121 = vmatpush1.bf16.msra.mxu0 0
        %1122 = vmatprep.subr.bf16.mxu0 0
        %1123 = vmatpush1.bf16.msra.mxu0 0
        %1124 = vmatprep.subr.bf16.mxu0 0
        %1125 = vmatpush1.bf16.msra.mxu0 0
        %1126 = vmatprep.subr.bf16.mxu0 0
        %1127 = vmatpush1.bf16.msra.mxu0 0
        %1128 = vmatprep.subr.bf16.mxu0 0
        %1129 = vmatpush1.bf16.msra.mxu0 0
        %1130 = vmatprep.subr.bf16.mxu0 0
        %1131 = vmatpush1.bf16.msra.mxu0 0
        %1132 = vmatprep.subr.bf16.mxu0 0
        %1133 = vmatpush1.bf16.msra.mxu0 0
        %1134 = vmatprep.subr.bf16.mxu0 0
        %1135 = vmatpush1.bf16.msra.mxu0 0
        %1136 = vmatprep.subr.bf16.mxu0 0
        %1137 = vmatpush1.bf16.msra.mxu0 0
        %1138 = vmatprep.subr.bf16.mxu0 0
        %1139 = vmatpush1.bf16.msra.mxu0 0
        %1140 = vmatprep.subr.bf16.mxu0 0
        %1141 = vmatpush1.bf16.msra.mxu0 0
        %1142 = vmatprep.mubr.bf16.mxu0 0
        %1143 = vmatmul.mubr.bf16.gmra.mrb[0].mxu0 %v1063
        %v1144 = vpop.f32.mrb[0].mxu0
        %v1145 = vadd.f32 0.0, %v1144
        %v1146 = vpop.f32.mrb[0].mxu0
        %v1147 = vpop.f32.mrb[0].mxu0
        %v1148 = vadd.f32 0.0, %v1147
        %v1149 = vpop.f32.mrb[0].mxu0
        %1150 = vmatprep.mubr.bf16.mxu0 0
        %1151 = vmatmul.mubr.bf16.gmra.mrb[0].mxu0 %v1066
        %v1152 = vpop.f32.mrb[0].mxu0
        %v1153 = vadd.f32 0.0, %v1152
        %v1154 = vpop.f32.mrb[0].mxu0
        %v1155 = vpop.f32.mrb[0].mxu0
        %v1156 = vadd.f32 0.0, %v1155
        %v1157 = vpop.f32.mrb[0].mxu0
        %1158 = vmatprep.mubr.bf16.mxu0 0
        %1159 = vmatmul.mubr.bf16.gmra.mrb[0].mxu0 %v1069
        %v1160 = vpop.f32.mrb[0].mxu0
        %v1161 = vadd.f32 0.0, %v1160
        %v1162 = vpop.f32.mrb[0].mxu0
        %v1163 = vpop.f32.mrb[0].mxu0
        %v1164 = vadd.f32 0.0, %v1163
        %v1165 = vpop.f32.mrb[0].mxu0
        %1166 = vmatprep.mubr.bf16.mxu0 0
        %1167 = vmatmul.mubr.bf16.gmra.mrb[0].mxu0 %v1072
        %v1168 = vpop.f32.mrb[0].mxu0
        %v1169 = vadd.f32 0.0, %v1168
        %v1170 = vpop.f32.mrb[0].mxu0
        %v1171 = vpop.f32.mrb[0].mxu0
        %v1172 = vadd.f32 0.0, %v1171
        %v1173 = vpop.f32.mrb[0].mxu0
        %1174 = vmatprep.mubr.bf16.mxu0 0
        %1175 = vmatmul.mubr.bf16.gmra.mrb[0].mxu0 %v1075
        %v1176 = vpop.f32.mrb[0].mxu0
        %v1177 = vadd.f32 0.0, %v1176
        %v1178 = vpop.f32.mrb[0].mxu0
        %v1179 = vpop.f32.mrb[0].mxu0
        %v1180 = vadd.f32 0.0, %v1179
        %v1181 = vpop.f32.mrb[0].mxu0
        %1182 = vmatprep.mubr.bf16.mxu0 0
        %1183 = vmatmul.mubr.bf16.gmra.mrb[0].mxu0 %v1078
        %v1184 = vpop.f32.mrb[0].mxu0
        %v1185 = vadd.f32 0.0, %v1184
        %v1186 = vpop.f32.mrb[0].mxu0
        %v1187 = vpop.f32.mrb[0].mxu0
        %v1188 = vadd.f32 0.0, %v1187
        %v1189 = vpop.f32.mrb[0].mxu0
        %1190 = vmatprep.mubr.bf16.mxu0 0
        %1191 = vmatmul.mubr.bf16.gmra.mrb[0].mxu0 %v1081
        %v1192 = vpop.f32.mrb[0].mxu0
        %v1193 = vadd.f32 0.0, %v1192
        %v1194 = vpop.f32.mrb[0].mxu0
        %v1195 = vpop.f32.mrb[0].mxu0
        %v1196 = vadd.f32 0.0, %v1195
        %v1197 = vpop.f32.mrb[0].mxu0
        %1198 = vmatprep.mubr.bf16.mxu0 0
        %1199 = vmatmul.mubr.bf16.gmra.mrb[0].mxu0 %v1084
        %v1200 = vpop.f32.mrb[0].mxu0
        %v1201 = vadd.f32 0.0, %v1200
        %v1202 = vpop.f32.mrb[0].mxu0
        %v1203 = vpop.f32.mrb[0].mxu0
        %v1204 = vadd.f32 0.0, %v1203
        %v1205 = vpop.f32.mrb[0].mxu0
        %1206 = vmatprep.mubr.bf16.mxu0 0
        %1207 = vmatmul.mubr.bf16.gmra.mrb[0].mxu0 %v1087
        %v1208 = vpop.f32.mrb[0].mxu0
        %v1209 = vadd.f32 0.0, %v1208
        %v1210 = vpop.f32.mrb[0].mxu0
        %v1211 = vpop.f32.mrb[0].mxu0
        %v1212 = vadd.f32 0.0, %v1211
        %v1213 = vpop.f32.mrb[0].mxu0
        %1214 = vmatprep.mubr.bf16.mxu0 0
        %1215 = vmatmul.mubr.bf16.gmra.mrb[0].mxu0 %v1090
        %v1216 = vpop.f32.mrb[0].mxu0
        %v1217 = vadd.f32 0.0, %v1216
        %v1218 = vpop.f32.mrb[0].mxu0
        %v1219 = vpop.f32.mrb[0].mxu0
        %v1220 = vadd.f32 0.0, %v1219
        %v1221 = vpop.f32.mrb[0].mxu0
        %1222 = vmatprep.mubr.bf16.mxu0 0
        %1223 = vmatmul.mubr.bf16.gmra.mrb[0].mxu0 %v1093
        %v1224 = vpop.f32.mrb[0].mxu0
        %v1225 = vadd.f32 0.0, %v1224
        %v1226 = vpop.f32.mrb[0].mxu0
        %v1227 = vpop.f32.mrb[0].mxu0
        %v1228 = vadd.f32 0.0, %v1227
        %v1229 = vpop.f32.mrb[0].mxu0
        %1230 = vmatprep.mubr.bf16.mxu0 0
        %1231 = vmatmul.mubr.bf16.gmra.mrb[0].mxu0 %v1096
        %v1232 = vpop.f32.mrb[0].mxu0
        %v1233 = vadd.f32 0.0, %v1232
        %v1234 = vpop.f32.mrb[0].mxu0
        %v1235 = vpop.f32.mrb[0].mxu0
        %v1236 = vadd.f32 0.0, %v1235
        %v1237 = vpop.f32.mrb[0].mxu0
        %1238 = vmatprep.mubr.bf16.mxu0 0
        %1239 = vmatmul.mubr.bf16.gmra.mrb[0].mxu0 %v1099
        %v1240 = vpop.f32.mrb[0].mxu0
        %v1241 = vadd.f32 0.0, %v1240
        %v1242 = vpop.f32.mrb[0].mxu0
        %v1243 = vpop.f32.mrb[0].mxu0
        %v1244 = vadd.f32 0.0, %v1243
        %v1245 = vpop.f32.mrb[0].mxu0
        %1246 = vmatprep.mubr.bf16.mxu0 0
        %1247 = vmatmul.mubr.bf16.gmra.mrb[0].mxu0 %v1102
        %v1248 = vpop.f32.mrb[0].mxu0
        %v1249 = vadd.f32 0.0, %v1248
        %v1250 = vpop.f32.mrb[0].mxu0
        %v1251 = vpop.f32.mrb[0].mxu0
        %v1252 = vadd.f32 0.0, %v1251
        %v1253 = vpop.f32.mrb[0].mxu0
        %1254 = vmatprep.mubr.bf16.mxu0 0
        %1255 = vmatmul.mubr.bf16.gmra.mrb[0].mxu0 %v1105
        %v1256 = vpop.f32.mrb[0].mxu0
        %v1257 = vadd.f32 0.0, %v1256
        %v1258 = vpop.f32.mrb[0].mxu0
        %v1259 = vpop.f32.mrb[0].mxu0
        %v1260 = vadd.f32 0.0, %v1259
        %v1261 = vpop.f32.mrb[0].mxu0
        %1262 = vmatprep.mubr.bf16.mxu0 0
        %1263 = vmatmul.mubr.bf16.gmra.mrb[0].mxu0 %v1108
        %v1264 = vpop.f32.mrb[0].mxu0
        %v1265 = vadd.f32 0.0, %v1264
        %v1266 = vpop.f32.mrb[0].mxu0
        %v1267 = vpop.f32.mrb[0].mxu0
        %v1268 = vadd.f32 0.0, %v1267
        %v1269 = vpop.f32.mrb[0].mxu0
        %1270 = vdwg.mxu0
        %v1275 = vunpack.c.l.b16 %v993
        %v1276 = vunpack.c.l.b16 %v994
        %v1277 = vunpack.c.l.b16 %v995
        %v1278 = vunpack.c.l.b16 %v996
        %v1279 = vpack.c.b16 %v1276, %v1275
        %v1280 = vpack.c.b16 %v1278, %v1277
        %v1284 = vsel %vm857, %v977, 0
        %v1287 = vsel %vm857, %v978, 0
        %v1290 = vsel %vm857, %v979, 0
        %v1293 = vsel %vm857, %v980, 0
        %v1296 = vsel %vm857, %v981, 0
        %v1299 = vsel %vm857, %v982, 0
        %v1302 = vsel %vm857, %v983, 0
        %v1305 = vsel %vm857, %v984, 0
        %v1308 = vsel %vm857, %v985, 0
        %v1311 = vsel %vm857, %v986, 0
        %v1314 = vsel %vm857, %v987, 0
        %v1317 = vsel %vm857, %v988, 0
        %v1320 = vsel %vm857, %v989, 0
        %v1323 = vsel %vm857, %v990, 0
        %v1326 = vsel %vm857, %v991, 0
        %v1329 = vsel %vm857, %v992, 0
        %1331 = vmatprep.subr.bf16.mxu0 0
        %1332 = vmatpush1.bf16.msra.mxu0 %v1279
        %1333 = vmatprep.subr.bf16.mxu0 0
        %1334 = vmatpush1.bf16.msra.mxu0 %v1280
        %1335 = vmatprep.subr.bf16.mxu0 0
        %1336 = vmatpush1.bf16.msra.mxu0 0
        %1337 = vmatprep.subr.bf16.mxu0 0
        %1338 = vmatpush1.bf16.msra.mxu0 0
        %1339 = vmatprep.subr.bf16.mxu0 0
        %1340 = vmatpush1.bf16.msra.mxu0 0
        %1341 = vmatprep.subr.bf16.mxu0 0
        %1342 = vmatpush1.bf16.msra.mxu0 0
        %1343 = vmatprep.subr.bf16.mxu0 0
        %1344 = vmatpush1.bf16.msra.mxu0 0
        %1345 = vmatprep.subr.bf16.mxu0 0
        %1346 = vmatpush1.bf16.msra.mxu0 0
        %1347 = vmatprep.subr.bf16.mxu0 0
        %1348 = vmatpush1.bf16.msra.mxu0 0
        %1349 = vmatprep.subr.bf16.mxu0 0
        %1350 = vmatpush1.bf16.msra.mxu0 0
        %1351 = vmatprep.subr.bf16.mxu0 0
        %1352 = vmatpush1.bf16.msra.mxu0 0
        %1353 = vmatprep.subr.bf16.mxu0 0
        %1354 = vmatpush1.bf16.msra.mxu0 0
        %1355 = vmatprep.subr.bf16.mxu0 0
        %1356 = vmatpush1.bf16.msra.mxu0 0
        %1357 = vmatprep.subr.bf16.mxu0 0
        %1358 = vmatpush1.bf16.msra.mxu0 0
        %1359 = vmatprep.subr.bf16.mxu0 0
        %1360 = vmatpush1.bf16.msra.mxu0 0
        %1361 = vmatprep.subr.bf16.mxu0 0
        %1362 = vmatpush1.bf16.msra.mxu0 0
        %1363 = vmatprep.mubr.bf16.mxu0 0
        %1364 = vmatmul.mubr.bf16.gmra.mrb[0].mxu0 %v1284
        %v1365 = vpop.f32.mrb[0].mxu0
        %v1366 = vadd.f32 %v1145, %v1365
        %v1367 = vpop.f32.mrb[0].mxu0
        %v1368 = vpop.f32.mrb[0].mxu0
        %v1369 = vadd.f32 %v1148, %v1368
        %v1370 = vpop.f32.mrb[0].mxu0
        %1371 = vmatprep.mubr.bf16.mxu0 0
        %1372 = vmatmul.mubr.bf16.gmra.mrb[0].mxu0 %v1287
        %v1373 = vpop.f32.mrb[0].mxu0
        %v1374 = vadd.f32 %v1153, %v1373
        %v1375 = vpop.f32.mrb[0].mxu0
        %v1376 = vpop.f32.mrb[0].mxu0
        %v1377 = vadd.f32 %v1156, %v1376
        %v1378 = vpop.f32.mrb[0].mxu0
        %1379 = vmatprep.mubr.bf16.mxu0 0
        %1380 = vmatmul.mubr.bf16.gmra.mrb[0].mxu0 %v1290
        %v1381 = vpop.f32.mrb[0].mxu0
        %v1382 = vadd.f32 %v1161, %v1381
        %v1383 = vpop.f32.mrb[0].mxu0
        %v1384 = vpop.f32.mrb[0].mxu0
        %v1385 = vadd.f32 %v1164, %v1384
        %v1386 = vpop.f32.mrb[0].mxu0
        %1387 = vmatprep.mubr.bf16.mxu0 0
        %1388 = vmatmul.mubr.bf16.gmra.mrb[0].mxu0 %v1293
        %v1389 = vpop.f32.mrb[0].mxu0
        %v1390 = vadd.f32 %v1169, %v1389
        %v1391 = vpop.f32.mrb[0].mxu0
        %v1392 = vpop.f32.mrb[0].mxu0
        %v1393 = vadd.f32 %v1172, %v1392
        %v1394 = vpop.f32.mrb[0].mxu0
        %1395 = vmatprep.mubr.bf16.mxu0 0
        %1396 = vmatmul.mubr.bf16.gmra.mrb[0].mxu0 %v1296
        %v1397 = vpop.f32.mrb[0].mxu0
        %v1398 = vadd.f32 %v1177, %v1397
        %v1399 = vpop.f32.mrb[0].mxu0
        %v1400 = vpop.f32.mrb[0].mxu0
        %v1401 = vadd.f32 %v1180, %v1400
        %v1402 = vpop.f32.mrb[0].mxu0
        %1403 = vmatprep.mubr.bf16.mxu0 0
        %1404 = vmatmul.mubr.bf16.gmra.mrb[0].mxu0 %v1299
        %v1405 = vpop.f32.mrb[0].mxu0
        %v1406 = vadd.f32 %v1185, %v1405
        %v1407 = vpop.f32.mrb[0].mxu0
        %v1408 = vpop.f32.mrb[0].mxu0
        %v1409 = vadd.f32 %v1188, %v1408
        %v1410 = vpop.f32.mrb[0].mxu0
        %1411 = vmatprep.mubr.bf16.mxu0 0
        %1412 = vmatmul.mubr.bf16.gmra.mrb[0].mxu0 %v1302
        %v1413 = vpop.f32.mrb[0].mxu0
        %v1414 = vadd.f32 %v1193, %v1413
        %v1415 = vpop.f32.mrb[0].mxu0
        %v1416 = vpop.f32.mrb[0].mxu0
        %v1417 = vadd.f32 %v1196, %v1416
        %v1418 = vpop.f32.mrb[0].mxu0
        %1419 = vmatprep.mubr.bf16.mxu0 0
        %1420 = vmatmul.mubr.bf16.gmra.mrb[0].mxu0 %v1305
        %v1421 = vpop.f32.mrb[0].mxu0
        %v1422 = vadd.f32 %v1201, %v1421
        %v1423 = vpop.f32.mrb[0].mxu0
        %v1424 = vpop.f32.mrb[0].mxu0
        %v1425 = vadd.f32 %v1204, %v1424
        %v1426 = vpop.f32.mrb[0].mxu0
        %1427 = vmatprep.mubr.bf16.mxu0 0
        %1428 = vmatmul.mubr.bf16.gmra.mrb[0].mxu0 %v1308
        %v1429 = vpop.f32.mrb[0].mxu0
        %v1430 = vadd.f32 %v1209, %v1429
        %v1431 = vpop.f32.mrb[0].mxu0
        %v1432 = vpop.f32.mrb[0].mxu0
        %v1433 = vadd.f32 %v1212, %v1432
        %v1434 = vpop.f32.mrb[0].mxu0
        %1435 = vmatprep.mubr.bf16.mxu0 0
        %1436 = vmatmul.mubr.bf16.gmra.mrb[0].mxu0 %v1311
        %v1437 = vpop.f32.mrb[0].mxu0
        %v1438 = vadd.f32 %v1217, %v1437
        %v1439 = vpop.f32.mrb[0].mxu0
        %v1440 = vpop.f32.mrb[0].mxu0
        %v1441 = vadd.f32 %v1220, %v1440
        %v1442 = vpop.f32.mrb[0].mxu0
        %1443 = vmatprep.mubr.bf16.mxu0 0
        %1444 = vmatmul.mubr.bf16.gmra.mrb[0].mxu0 %v1314
        %v1445 = vpop.f32.mrb[0].mxu0
        %v1446 = vadd.f32 %v1225, %v1445
        %v1447 = vpop.f32.mrb[0].mxu0
        %v1448 = vpop.f32.mrb[0].mxu0
        %v1449 = vadd.f32 %v1228, %v1448
        %v1450 = vpop.f32.mrb[0].mxu0
        %1451 = vmatprep.mubr.bf16.mxu0 0
        %1452 = vmatmul.mubr.bf16.gmra.mrb[0].mxu0 %v1317
        %v1453 = vpop.f32.mrb[0].mxu0
        %v1454 = vadd.f32 %v1233, %v1453
        %v1455 = vpop.f32.mrb[0].mxu0
        %v1456 = vpop.f32.mrb[0].mxu0
        %v1457 = vadd.f32 %v1236, %v1456
        %v1458 = vpop.f32.mrb[0].mxu0
        %1459 = vmatprep.mubr.bf16.mxu0 0
        %1460 = vmatmul.mubr.bf16.gmra.mrb[0].mxu0 %v1320
        %v1461 = vpop.f32.mrb[0].mxu0
        %v1462 = vadd.f32 %v1241, %v1461
        %v1463 = vpop.f32.mrb[0].mxu0
        %v1464 = vpop.f32.mrb[0].mxu0
        %v1465 = vadd.f32 %v1244, %v1464
        %v1466 = vpop.f32.mrb[0].mxu0
        %1467 = vmatprep.mubr.bf16.mxu0 0
        %1468 = vmatmul.mubr.bf16.gmra.mrb[0].mxu0 %v1323
        %v1469 = vpop.f32.mrb[0].mxu0
        %v1470 = vadd.f32 %v1249, %v1469
        %v1471 = vpop.f32.mrb[0].mxu0
        %v1472 = vpop.f32.mrb[0].mxu0
        %v1473 = vadd.f32 %v1252, %v1472
        %v1474 = vpop.f32.mrb[0].mxu0
        %1475 = vmatprep.mubr.bf16.mxu0 0
        %1476 = vmatmul.mubr.bf16.gmra.mrb[0].mxu0 %v1326
        %v1477 = vpop.f32.mrb[0].mxu0
        %v1478 = vadd.f32 %v1257, %v1477
        %v1479 = vpop.f32.mrb[0].mxu0
        %v1480 = vpop.f32.mrb[0].mxu0
        %v1481 = vadd.f32 %v1260, %v1480
        %v1482 = vpop.f32.mrb[0].mxu0
        %1483 = vmatprep.mubr.bf16.mxu0 0
        %1484 = vmatmul.mubr.bf16.gmra.mrb[0].mxu0 %v1329
        %v1485 = vpop.f32.mrb[0].mxu0
        %v1486 = vadd.f32 %v1265, %v1485
        %v1487 = vpop.f32.mrb[0].mxu0
        %v1488 = vpop.f32.mrb[0].mxu0
        %v1489 = vadd.f32 %v1268, %v1488
        %v1490 = vpop.f32.mrb[0].mxu0
        %1491 = vdwg.mxu0
        %v1492 = vld [vmem:[#allocation2 + $0x2] sm:$0xff]
        %v1493 = vld [vmem:[#allocation2 + $0xa] sm:$0xff]
        %v1494 = vld [vmem:[#allocation2 + $0x1a] sm:$0xff]
        %v1495 = vld [vmem:[#allocation2 + $0x22] sm:$0xff]
        %v1496 = vld [vmem:[#allocation2 + $0x32] sm:$0xff]
        %v1497 = vld [vmem:[#allocation2 + $0x3a] sm:$0xff]
        %v1498 = vld [vmem:[#allocation2 + $0x4a] sm:$0xff]
        %v1499 = vld [vmem:[#allocation2 + $0x52] sm:$0xff]
        %v1500 = vld [vmem:[#allocation2 + $0x62] sm:$0xff]
        %v1501 = vld [vmem:[#allocation2 + $0x6a] sm:$0xff]
        %v1502 = vld [vmem:[#allocation2 + $0x7a] sm:$0xff]
        %v1503 = vld [vmem:[#allocation2 + $0x82] sm:$0xff]
        %v1504 = vld [vmem:[#allocation2 + $0x92] sm:$0xff]
        %v1505 = vld [vmem:[#allocation2 + $0x9a] sm:$0xff]
        %v1506 = vld [vmem:[#allocation2 + $0xaa] sm:$0xff]
        %v1507 = vld [vmem:[#allocation2 + $0xb2] sm:$0xff]
        %v1508 = vld [vmem:[#allocation2 + $0xc2] sm:$0xff]
        %v1509 = vld [vmem:[#allocation2 + $0xca] sm:$0xff]
        %v1510 = vld [vmem:[#allocation2 + $0xda] sm:$0xff]
        %v1511 = vld [vmem:[#allocation2 + $0xe2] sm:$0xff]
        %v1512 = vld [vmem:[#allocation2 + $0xf2] sm:$0xff]
        %v1513 = vld [vmem:[#allocation2 + $0xfa] sm:$0xff]
        %v1514 = vld [vmem:[#allocation2 + $0x10a] sm:$0xff]
        %v1515 = vld [vmem:[#allocation2 + $0x112] sm:$0xff]
        %v1516 = vld [vmem:[#allocation2 + $0x122] sm:$0xff]
        %v1517 = vld [vmem:[#allocation2 + $0x12a] sm:$0xff]
        %v1518 = vld [vmem:[#allocation2 + $0x13a] sm:$0xff]
        %v1519 = vld [vmem:[#allocation2 + $0x142] sm:$0xff]
        %v1520 = vld [vmem:[#allocation2 + $0x152] sm:$0xff]
        %v1521 = vld [vmem:[#allocation2 + $0x15a] sm:$0xff]
        %v1522 = vld [vmem:[#allocation2 + $0x16a] sm:$0xff]
        %v1523 = vld [vmem:[#allocation2 + $0x172] sm:$0xff]
        %v1524 = vpack.c.bf16 %v1493, %v1492
        %v1525 = vpack.c.bf16 %v1495, %v1494
        %v1526 = vpack.c.bf16 %v1497, %v1496
        %v1527 = vpack.c.bf16 %v1499, %v1498
        %v1528 = vpack.c.bf16 %v1501, %v1500
        %v1529 = vpack.c.bf16 %v1503, %v1502
        %v1530 = vpack.c.bf16 %v1505, %v1504
        %v1531 = vpack.c.bf16 %v1507, %v1506
        %v1532 = vpack.c.bf16 %v1509, %v1508
        %v1533 = vpack.c.bf16 %v1511, %v1510
        %v1534 = vpack.c.bf16 %v1513, %v1512
        %v1535 = vpack.c.bf16 %v1515, %v1514
        %v1536 = vpack.c.bf16 %v1517, %v1516
        %v1537 = vpack.c.bf16 %v1519, %v1518
        %v1538 = vpack.c.bf16 %v1521, %v1520
        %v1539 = vpack.c.bf16 %v1523, %v1522
        %s1540 = scalar_lea.vmem %s4, 32
        %v1541 = vld [vmem:[%s1540] sm:$0xf]
        %v1542 = vld [vmem:[%s1540 + $0x4] sm:$0xf]
        %v1543 = vld [vmem:[%s1540 + $0x8] sm:$0xf]
        %v1544 = vld [vmem:[%s1540 + $0xc] sm:$0xf]
        %v1549 = vunpack.c.l.b16 %v1541
        %v1550 = vunpack.c.l.b16 %v1542
        %v1551 = vunpack.c.l.b16 %v1543
        %v1552 = vunpack.c.l.b16 %v1544
        %v1553 = vpack.c.b16 %v1550, %v1549
        %v1554 = vpack.c.b16 %v1552, %v1551
        %v1558 = vsel %vm857, %v1524, 0
        %v1561 = vsel %vm857, %v1525, 0
        %v1564 = vsel %vm857, %v1526, 0
        %v1567 = vsel %vm857, %v1527, 0
        %v1570 = vsel %vm857, %v1528, 0
        %v1573 = vsel %vm857, %v1529, 0
        %v1576 = vsel %vm857, %v1530, 0
        %v1579 = vsel %vm857, %v1531, 0
        %v1582 = vsel %vm857, %v1532, 0
        %v1585 = vsel %vm857, %v1533, 0
        %v1588 = vsel %vm857, %v1534, 0
        %v1591 = vsel %vm857, %v1535, 0
        %v1594 = vsel %vm857, %v1536, 0
        %v1597 = vsel %vm857, %v1537, 0
        %v1600 = vsel %vm857, %v1538, 0
        %v1603 = vsel %vm857, %v1539, 0
        %1605 = vmatprep.subr.bf16.mxu0 0
        %1606 = vmatpush1.bf16.msra.mxu0 %v1553
        %1607 = vmatprep.subr.bf16.mxu0 0
        %1608 = vmatpush1.bf16.msra.mxu0 %v1554
        %1609 = vmatprep.subr.bf16.mxu0 0
        %1610 = vmatpush1.bf16.msra.mxu0 0
        %1611 = vmatprep.subr.bf16.mxu0 0
        %1612 = vmatpush1.bf16.msra.mxu0 0
        %1613 = vmatprep.subr.bf16.mxu0 0
        %1614 = vmatpush1.bf16.msra.mxu0 0
        %1615 = vmatprep.subr.bf16.mxu0 0
        %1616 = vmatpush1.bf16.msra.mxu0 0
        %1617 = vmatprep.subr.bf16.mxu0 0
        %1618 = vmatpush1.bf16.msra.mxu0 0
        %1619 = vmatprep.subr.bf16.mxu0 0
        %1620 = vmatpush1.bf16.msra.mxu0 0
        %1621 = vmatprep.subr.bf16.mxu0 0
        %1622 = vmatpush1.bf16.msra.mxu0 0
        %1623 = vmatprep.subr.bf16.mxu0 0
        %1624 = vmatpush1.bf16.msra.mxu0 0
        %1625 = vmatprep.subr.bf16.mxu0 0
        %1626 = vmatpush1.bf16.msra.mxu0 0
        %1627 = vmatprep.subr.bf16.mxu0 0
        %1628 = vmatpush1.bf16.msra.mxu0 0
        %1629 = vmatprep.subr.bf16.mxu0 0
        %1630 = vmatpush1.bf16.msra.mxu0 0
        %1631 = vmatprep.subr.bf16.mxu0 0
        %1632 = vmatpush1.bf16.msra.mxu0 0
        %1633 = vmatprep.subr.bf16.mxu0 0
        %1634 = vmatpush1.bf16.msra.mxu0 0
        %1635 = vmatprep.subr.bf16.mxu0 0
        %1636 = vmatpush1.bf16.msra.mxu0 0
        %1637 = vmatprep.mubr.bf16.mxu0 0
        %1638 = vmatmul.mubr.bf16.gmra.mrb[0].mxu0 %v1558
        %v1639 = vpop.f32.mrb[0].mxu0
        %v1640 = vadd.f32 0.0, %v1639
        %v1641 = vpop.f32.mrb[0].mxu0
        %v1642 = vpop.f32.mrb[0].mxu0
        %v1643 = vadd.f32 0.0, %v1642
        %v1644 = vpop.f32.mrb[0].mxu0
        %1645 = vmatprep.mubr.bf16.mxu0 0
        %1646 = vmatmul.mubr.bf16.gmra.mrb[0].mxu0 %v1561
        %v1647 = vpop.f32.mrb[0].mxu0
        %v1648 = vadd.f32 0.0, %v1647
        %v1649 = vpop.f32.mrb[0].mxu0
        %v1650 = vpop.f32.mrb[0].mxu0
        %v1651 = vadd.f32 0.0, %v1650
        %v1652 = vpop.f32.mrb[0].mxu0
        %1653 = vmatprep.mubr.bf16.mxu0 0
        %1654 = vmatmul.mubr.bf16.gmra.mrb[0].mxu0 %v1564
        %v1655 = vpop.f32.mrb[0].mxu0
        %v1656 = vadd.f32 0.0, %v1655
        %v1657 = vpop.f32.mrb[0].mxu0
        %v1658 = vpop.f32.mrb[0].mxu0
        %v1659 = vadd.f32 0.0, %v1658
        %v1660 = vpop.f32.mrb[0].mxu0
        %1661 = vmatprep.mubr.bf16.mxu0 0
        %1662 = vmatmul.mubr.bf16.gmra.mrb[0].mxu0 %v1567
        %v1663 = vpop.f32.mrb[0].mxu0
        %v1664 = vadd.f32 0.0, %v1663
        %v1665 = vpop.f32.mrb[0].mxu0
        %v1666 = vpop.f32.mrb[0].mxu0
        %v1667 = vadd.f32 0.0, %v1666
        %v1668 = vpop.f32.mrb[0].mxu0
        %1669 = vmatprep.mubr.bf16.mxu0 0
        %1670 = vmatmul.mubr.bf16.gmra.mrb[0].mxu0 %v1570
        %v1671 = vpop.f32.mrb[0].mxu0
        %v1672 = vadd.f32 0.0, %v1671
        %v1673 = vpop.f32.mrb[0].mxu0
        %v1674 = vpop.f32.mrb[0].mxu0
        %v1675 = vadd.f32 0.0, %v1674
        %v1676 = vpop.f32.mrb[0].mxu0
        %1677 = vmatprep.mubr.bf16.mxu0 0
        %1678 = vmatmul.mubr.bf16.gmra.mrb[0].mxu0 %v1573
        %v1679 = vpop.f32.mrb[0].mxu0
        %v1680 = vadd.f32 0.0, %v1679
        %v1681 = vpop.f32.mrb[0].mxu0
        %v1682 = vpop.f32.mrb[0].mxu0
        %v1683 = vadd.f32 0.0, %v1682
        %v1684 = vpop.f32.mrb[0].mxu0
        %1685 = vmatprep.mubr.bf16.mxu0 0
        %1686 = vmatmul.mubr.bf16.gmra.mrb[0].mxu0 %v1576
        %v1687 = vpop.f32.mrb[0].mxu0
        %v1688 = vadd.f32 0.0, %v1687
        %v1689 = vpop.f32.mrb[0].mxu0
        %v1690 = vpop.f32.mrb[0].mxu0
        %v1691 = vadd.f32 0.0, %v1690
        %v1692 = vpop.f32.mrb[0].mxu0
        %1693 = vmatprep.mubr.bf16.mxu0 0
        %1694 = vmatmul.mubr.bf16.gmra.mrb[0].mxu0 %v1579
        %v1695 = vpop.f32.mrb[0].mxu0
        %v1696 = vadd.f32 0.0, %v1695
        %v1697 = vpop.f32.mrb[0].mxu0
        %v1698 = vpop.f32.mrb[0].mxu0
        %v1699 = vadd.f32 0.0, %v1698
        %v1700 = vpop.f32.mrb[0].mxu0
        %1701 = vmatprep.mubr.bf16.mxu0 0
        %1702 = vmatmul.mubr.bf16.gmra.mrb[0].mxu0 %v1582
        %v1703 = vpop.f32.mrb[0].mxu0
        %v1704 = vadd.f32 0.0, %v1703
        %v1705 = vpop.f32.mrb[0].mxu0
        %v1706 = vpop.f32.mrb[0].mxu0
        %v1707 = vadd.f32 0.0, %v1706
        %v1708 = vpop.f32.mrb[0].mxu0
        %1709 = vmatprep.mubr.bf16.mxu0 0
        %1710 = vmatmul.mubr.bf16.gmra.mrb[0].mxu0 %v1585
        %v1711 = vpop.f32.mrb[0].mxu0
        %v1712 = vadd.f32 0.0, %v1711
        %v1713 = vpop.f32.mrb[0].mxu0
        %v1714 = vpop.f32.mrb[0].mxu0
        %v1715 = vadd.f32 0.0, %v1714
        %v1716 = vpop.f32.mrb[0].mxu0
        %1717 = vmatprep.mubr.bf16.mxu0 0
        %1718 = vmatmul.mubr.bf16.gmra.mrb[0].mxu0 %v1588
        %v1719 = vpop.f32.mrb[0].mxu0
        %v1720 = vadd.f32 0.0, %v1719
        %v1721 = vpop.f32.mrb[0].mxu0
        %v1722 = vpop.f32.mrb[0].mxu0
        %v1723 = vadd.f32 0.0, %v1722
        %v1724 = vpop.f32.mrb[0].mxu0
        %1725 = vmatprep.mubr.bf16.mxu0 0
        %1726 = vmatmul.mubr.bf16.gmra.mrb[0].mxu0 %v1591
        %v1727 = vpop.f32.mrb[0].mxu0
        %v1728 = vadd.f32 0.0, %v1727
        %v1729 = vpop.f32.mrb[0].mxu0
        %v1730 = vpop.f32.mrb[0].mxu0
        %v1731 = vadd.f32 0.0, %v1730
        %v1732 = vpop.f32.mrb[0].mxu0
        %1733 = vmatprep.mubr.bf16.mxu0 0
        %1734 = vmatmul.mubr.bf16.gmra.mrb[0].mxu0 %v1594
        %v1735 = vpop.f32.mrb[0].mxu0
        %v1736 = vadd.f32 0.0, %v1735
        %v1737 = vpop.f32.mrb[0].mxu0
        %v1738 = vpop.f32.mrb[0].mxu0
        %v1739 = vadd.f32 0.0, %v1738
        %v1740 = vpop.f32.mrb[0].mxu0
        %1741 = vmatprep.mubr.bf16.mxu0 0
        %1742 = vmatmul.mubr.bf16.gmra.mrb[0].mxu0 %v1597
        %v1743 = vpop.f32.mrb[0].mxu0
        %v1744 = vadd.f32 0.0, %v1743
        %v1745 = vpop.f32.mrb[0].mxu0
        %v1746 = vpop.f32.mrb[0].mxu0
        %v1747 = vadd.f32 0.0, %v1746
        %v1748 = vpop.f32.mrb[0].mxu0
        %1749 = vmatprep.mubr.bf16.mxu0 0
        %1750 = vmatmul.mubr.bf16.gmra.mrb[0].mxu0 %v1600
        %v1751 = vpop.f32.mrb[0].mxu0
        %v1752 = vadd.f32 0.0, %v1751
        %v1753 = vpop.f32.mrb[0].mxu0
        %v1754 = vpop.f32.mrb[0].mxu0
        %v1755 = vadd.f32 0.0, %v1754
        %v1756 = vpop.f32.mrb[0].mxu0
        %1757 = vmatprep.mubr.bf16.mxu0 0
        %1758 = vmatmul.mubr.bf16.gmra.mrb[0].mxu0 %v1603
        %v1759 = vpop.f32.mrb[0].mxu0
        %v1760 = vadd.f32 0.0, %v1759
        %v1761 = vpop.f32.mrb[0].mxu0
        %v1762 = vpop.f32.mrb[0].mxu0
        %v1763 = vadd.f32 0.0, %v1762
        %v1764 = vpop.f32.mrb[0].mxu0
        %1765 = vdwg.mxu0
        %v1766 = vadd.f32 %v1366, %v1640
        %v1767 = vadd.f32 %v1369, %v1643
        %v1768 = vadd.f32 %v1374, %v1648
        %v1769 = vadd.f32 %v1377, %v1651
        %v1770 = vadd.f32 %v1382, %v1656
        %v1771 = vadd.f32 %v1385, %v1659
        %v1772 = vadd.f32 %v1390, %v1664
        %v1773 = vadd.f32 %v1393, %v1667
        %v1774 = vadd.f32 %v1398, %v1672
        %v1775 = vadd.f32 %v1401, %v1675
        %v1776 = vadd.f32 %v1406, %v1680
        %v1777 = vadd.f32 %v1409, %v1683
        %v1778 = vadd.f32 %v1414, %v1688
        %v1779 = vadd.f32 %v1417, %v1691
        %v1780 = vadd.f32 %v1422, %v1696
        %v1781 = vadd.f32 %v1425, %v1699
        %v1782 = vadd.f32 %v1430, %v1704
        %v1783 = vadd.f32 %v1433, %v1707
        %v1784 = vadd.f32 %v1438, %v1712
        %v1785 = vadd.f32 %v1441, %v1715
        %v1786 = vadd.f32 %v1446, %v1720
        %v1787 = vadd.f32 %v1449, %v1723
        %v1788 = vadd.f32 %v1454, %v1728
        %v1789 = vadd.f32 %v1457, %v1731
        %v1790 = vadd.f32 %v1462, %v1736
        %v1791 = vadd.f32 %v1465, %v1739
        %v1792 = vadd.f32 %v1470, %v1744
        %v1793 = vadd.f32 %v1473, %v1747
        %v1794 = vadd.f32 %v1478, %v1752
        %v1795 = vadd.f32 %v1481, %v1755
        %v1796 = vadd.f32 %v1486, %v1760
        %v1797 = vadd.f32 %v1489, %v1763
        %v1798 = vld [vmem:[%s912] sm:$0xff]
        %v1799 = vld [vmem:[%s912 + $0x8] sm:$0xff]
        %v1800 = vld [vmem:[%s912 + $0x18] sm:$0xff]
        %v1801 = vld [vmem:[%s912 + $0x20] sm:$0xff]
        %v1802 = vld [vmem:[%s912 + $0x30] sm:$0xff]
        %v1803 = vld [vmem:[%s912 + $0x38] sm:$0xff]
        %v1804 = vld [vmem:[%s912 + $0x48] sm:$0xff]
        %v1805 = vld [vmem:[%s912 + $0x50] sm:$0xff]
        %v1806 = vld [vmem:[%s912 + $0x60] sm:$0xff]
        %v1807 = vld [vmem:[%s912 + $0x68] sm:$0xff]
        %v1808 = vld [vmem:[%s912 + $0x78] sm:$0xff]
        %v1809 = vld [vmem:[%s912 + $0x80] sm:$0xff]
        %v1810 = vld [vmem:[%s912 + $0x90] sm:$0xff]
        %v1811 = vld [vmem:[%s912 + $0x98] sm:$0xff]
        %v1812 = vld [vmem:[%s912 + $0xa8] sm:$0xff]
        %v1813 = vld [vmem:[%s912 + $0xb0] sm:$0xff]
        %v1814 = vld [vmem:[%s912 + $0xc0] sm:$0xff]
        %v1815 = vld [vmem:[%s912 + $0xc8] sm:$0xff]
        %v1816 = vld [vmem:[%s912 + $0xd8] sm:$0xff]
        %v1817 = vld [vmem:[%s912 + $0xe0] sm:$0xff]
        %v1818 = vld [vmem:[%s912 + $0xf0] sm:$0xff]
        %v1819 = vld [vmem:[%s912 + $0xf8] sm:$0xff]
        %v1820 = vld [vmem:[%s912 + $0x108] sm:$0xff]
        %v1821 = vld [vmem:[%s912 + $0x110] sm:$0xff]
        %v1822 = vld [vmem:[%s912 + $0x120] sm:$0xff]
        %v1823 = vld [vmem:[%s912 + $0x128] sm:$0xff]
        %v1824 = vld [vmem:[%s912 + $0x138] sm:$0xff]
        %v1825 = vld [vmem:[%s912 + $0x140] sm:$0xff]
        %v1826 = vld [vmem:[%s912 + $0x150] sm:$0xff]
        %v1827 = vld [vmem:[%s912 + $0x158] sm:$0xff]
        %v1828 = vld [vmem:[%s912 + $0x168] sm:$0xff]
        %v1829 = vld [vmem:[%s912 + $0x170] sm:$0xff]
        %v1830 = vpack.c.bf16 %v1799, %v1798
        %v1831 = vpack.c.bf16 %v1801, %v1800
        %v1832 = vpack.c.bf16 %v1803, %v1802
        %v1833 = vpack.c.bf16 %v1805, %v1804
        %v1834 = vpack.c.bf16 %v1807, %v1806
        %v1835 = vpack.c.bf16 %v1809, %v1808
        %v1836 = vpack.c.bf16 %v1811, %v1810
        %v1837 = vpack.c.bf16 %v1813, %v1812
        %v1838 = vpack.c.bf16 %v1815, %v1814
        %v1839 = vpack.c.bf16 %v1817, %v1816
        %v1840 = vpack.c.bf16 %v1819, %v1818
        %v1841 = vpack.c.bf16 %v1821, %v1820
        %v1842 = vpack.c.bf16 %v1823, %v1822
        %v1843 = vpack.c.bf16 %v1825, %v1824
        %v1844 = vpack.c.bf16 %v1827, %v1826
        %v1845 = vpack.c.bf16 %v1829, %v1828
        %s1846 = scalar_lea.vmem %s4, 48
        %v1847 = vld [vmem:[%s1846] sm:$0xf]
        %v1848 = vld [vmem:[%s1846 + $0x4] sm:$0xf]
        %v1849 = vld [vmem:[%s1846 + $0x8] sm:$0xf]
        %v1850 = vld [vmem:[%s1846 + $0xc] sm:$0xf]
        %v1855 = vunpack.c.l.b16 %v1847
        %v1856 = vunpack.c.l.b16 %v1848
        %v1857 = vunpack.c.l.b16 %v1849
        %v1858 = vunpack.c.l.b16 %v1850
        %v1859 = vpack.c.b16 %v1856, %v1855
        %v1860 = vpack.c.b16 %v1858, %v1857
        %v1864 = vsel %vm857, %v1830, 0
        %v1867 = vsel %vm857, %v1831, 0
        %v1870 = vsel %vm857, %v1832, 0
        %v1873 = vsel %vm857, %v1833, 0
        %v1876 = vsel %vm857, %v1834, 0
        %v1879 = vsel %vm857, %v1835, 0
        %v1882 = vsel %vm857, %v1836, 0
        %v1885 = vsel %vm857, %v1837, 0
        %v1888 = vsel %vm857, %v1838, 0
        %v1891 = vsel %vm857, %v1839, 0
        %v1894 = vsel %vm857, %v1840, 0
        %v1897 = vsel %vm857, %v1841, 0
        %v1900 = vsel %vm857, %v1842, 0
        %v1903 = vsel %vm857, %v1843, 0
        %v1906 = vsel %vm857, %v1844, 0
        %v1909 = vsel %vm857, %v1845, 0
        %1911 = vmatprep.subr.bf16.mxu0 0
        %1912 = vmatpush1.bf16.msra.mxu0 %v1859
        %1913 = vmatprep.subr.bf16.mxu0 0
        %1914 = vmatpush1.bf16.msra.mxu0 %v1860
        %1915 = vmatprep.subr.bf16.mxu0 0
        %1916 = vmatpush1.bf16.msra.mxu0 0
        %1917 = vmatprep.subr.bf16.mxu0 0
        %1918 = vmatpush1.bf16.msra.mxu0 0
        %1919 = vmatprep.subr.bf16.mxu0 0
        %1920 = vmatpush1.bf16.msra.mxu0 0
        %1921 = vmatprep.subr.bf16.mxu0 0
        %1922 = vmatpush1.bf16.msra.mxu0 0
        %1923 = vmatprep.subr.bf16.mxu0 0
        %1924 = vmatpush1.bf16.msra.mxu0 0
        %1925 = vmatprep.subr.bf16.mxu0 0
        %1926 = vmatpush1.bf16.msra.mxu0 0
        %1927 = vmatprep.subr.bf16.mxu0 0
        %1928 = vmatpush1.bf16.msra.mxu0 0
        %1929 = vmatprep.subr.bf16.mxu0 0
        %1930 = vmatpush1.bf16.msra.mxu0 0
        %1931 = vmatprep.subr.bf16.mxu0 0
        %1932 = vmatpush1.bf16.msra.mxu0 0
        %1933 = vmatprep.subr.bf16.mxu0 0
        %1934 = vmatpush1.bf16.msra.mxu0 0
        %1935 = vmatprep.subr.bf16.mxu0 0
        %1936 = vmatpush1.bf16.msra.mxu0 0
        %1937 = vmatprep.subr.bf16.mxu0 0
        %1938 = vmatpush1.bf16.msra.mxu0 0
        %1939 = vmatprep.subr.bf16.mxu0 0
        %1940 = vmatpush1.bf16.msra.mxu0 0
        %1941 = vmatprep.subr.bf16.mxu0 0
        %1942 = vmatpush1.bf16.msra.mxu0 0
        %1943 = vmatprep.mubr.bf16.mxu0 0
        %1944 = vmatmul.mubr.bf16.gmra.mrb[0].mxu0 %v1864
        %v1945 = vpop.f32.mrb[0].mxu0
        %v1946 = vadd.f32 0.0, %v1945
        %v1947 = vpop.f32.mrb[0].mxu0
        %v1948 = vpop.f32.mrb[0].mxu0
        %v1949 = vadd.f32 0.0, %v1948
        %v1950 = vpop.f32.mrb[0].mxu0
        %1951 = vmatprep.mubr.bf16.mxu0 0
        %1952 = vmatmul.mubr.bf16.gmra.mrb[0].mxu0 %v1867
        %v1953 = vpop.f32.mrb[0].mxu0
        %v1954 = vadd.f32 0.0, %v1953
        %v1955 = vpop.f32.mrb[0].mxu0
        %v1956 = vpop.f32.mrb[0].mxu0
        %v1957 = vadd.f32 0.0, %v1956
        %v1958 = vpop.f32.mrb[0].mxu0
        %1959 = vmatprep.mubr.bf16.mxu0 0
        %1960 = vmatmul.mubr.bf16.gmra.mrb[0].mxu0 %v1870
        %v1961 = vpop.f32.mrb[0].mxu0
        %v1962 = vadd.f32 0.0, %v1961
        %v1963 = vpop.f32.mrb[0].mxu0
        %v1964 = vpop.f32.mrb[0].mxu0
        %v1965 = vadd.f32 0.0, %v1964
        %v1966 = vpop.f32.mrb[0].mxu0
        %1967 = vmatprep.mubr.bf16.mxu0 0
        %1968 = vmatmul.mubr.bf16.gmra.mrb[0].mxu0 %v1873
        %v1969 = vpop.f32.mrb[0].mxu0
        %v1970 = vadd.f32 0.0, %v1969
        %v1971 = vpop.f32.mrb[0].mxu0
        %v1972 = vpop.f32.mrb[0].mxu0
        %v1973 = vadd.f32 0.0, %v1972
        %v1974 = vpop.f32.mrb[0].mxu0
        %1975 = vmatprep.mubr.bf16.mxu0 0
        %1976 = vmatmul.mubr.bf16.gmra.mrb[0].mxu0 %v1876
        %v1977 = vpop.f32.mrb[0].mxu0
        %v1978 = vadd.f32 0.0, %v1977
        %v1979 = vpop.f32.mrb[0].mxu0
        %v1980 = vpop.f32.mrb[0].mxu0
        %v1981 = vadd.f32 0.0, %v1980
        %v1982 = vpop.f32.mrb[0].mxu0
        %1983 = vmatprep.mubr.bf16.mxu0 0
        %1984 = vmatmul.mubr.bf16.gmra.mrb[0].mxu0 %v1879
        %v1985 = vpop.f32.mrb[0].mxu0
        %v1986 = vadd.f32 0.0, %v1985
        %v1987 = vpop.f32.mrb[0].mxu0
        %v1988 = vpop.f32.mrb[0].mxu0
        %v1989 = vadd.f32 0.0, %v1988
        %v1990 = vpop.f32.mrb[0].mxu0
        %1991 = vmatprep.mubr.bf16.mxu0 0
        %1992 = vmatmul.mubr.bf16.gmra.mrb[0].mxu0 %v1882
        %v1993 = vpop.f32.mrb[0].mxu0
        %v1994 = vadd.f32 0.0, %v1993
        %v1995 = vpop.f32.mrb[0].mxu0
        %v1996 = vpop.f32.mrb[0].mxu0
        %v1997 = vadd.f32 0.0, %v1996
        %v1998 = vpop.f32.mrb[0].mxu0
        %1999 = vmatprep.mubr.bf16.mxu0 0
        %2000 = vmatmul.mubr.bf16.gmra.mrb[0].mxu0 %v1885
        %v2001 = vpop.f32.mrb[0].mxu0
        %v2002 = vadd.f32 0.0, %v2001
        %v2003 = vpop.f32.mrb[0].mxu0
        %v2004 = vpop.f32.mrb[0].mxu0
        %v2005 = vadd.f32 0.0, %v2004
        %v2006 = vpop.f32.mrb[0].mxu0
        %2007 = vmatprep.mubr.bf16.mxu0 0
        %2008 = vmatmul.mubr.bf16.gmra.mrb[0].mxu0 %v1888
        %v2009 = vpop.f32.mrb[0].mxu0
        %v2010 = vadd.f32 0.0, %v2009
        %v2011 = vpop.f32.mrb[0].mxu0
        %v2012 = vpop.f32.mrb[0].mxu0
        %v2013 = vadd.f32 0.0, %v2012
        %v2014 = vpop.f32.mrb[0].mxu0
        %2015 = vmatprep.mubr.bf16.mxu0 0
        %2016 = vmatmul.mubr.bf16.gmra.mrb[0].mxu0 %v1891
        %v2017 = vpop.f32.mrb[0].mxu0
        %v2018 = vadd.f32 0.0, %v2017
        %v2019 = vpop.f32.mrb[0].mxu0
        %v2020 = vpop.f32.mrb[0].mxu0
        %v2021 = vadd.f32 0.0, %v2020
        %v2022 = vpop.f32.mrb[0].mxu0
        %2023 = vmatprep.mubr.bf16.mxu0 0
        %2024 = vmatmul.mubr.bf16.gmra.mrb[0].mxu0 %v1894
        %v2025 = vpop.f32.mrb[0].mxu0
        %v2026 = vadd.f32 0.0, %v2025
        %v2027 = vpop.f32.mrb[0].mxu0
        %v2028 = vpop.f32.mrb[0].mxu0
        %v2029 = vadd.f32 0.0, %v2028
        %v2030 = vpop.f32.mrb[0].mxu0
        %2031 = vmatprep.mubr.bf16.mxu0 0
        %2032 = vmatmul.mubr.bf16.gmra.mrb[0].mxu0 %v1897
        %v2033 = vpop.f32.mrb[0].mxu0
        %v2034 = vadd.f32 0.0, %v2033
        %v2035 = vpop.f32.mrb[0].mxu0
        %v2036 = vpop.f32.mrb[0].mxu0
        %v2037 = vadd.f32 0.0, %v2036
        %v2038 = vpop.f32.mrb[0].mxu0
        %2039 = vmatprep.mubr.bf16.mxu0 0
        %2040 = vmatmul.mubr.bf16.gmra.mrb[0].mxu0 %v1900
        %v2041 = vpop.f32.mrb[0].mxu0
        %v2042 = vadd.f32 0.0, %v2041
        %v2043 = vpop.f32.mrb[0].mxu0
        %v2044 = vpop.f32.mrb[0].mxu0
        %v2045 = vadd.f32 0.0, %v2044
        %v2046 = vpop.f32.mrb[0].mxu0
        %2047 = vmatprep.mubr.bf16.mxu0 0
        %2048 = vmatmul.mubr.bf16.gmra.mrb[0].mxu0 %v1903
        %v2049 = vpop.f32.mrb[0].mxu0
        %v2050 = vadd.f32 0.0, %v2049
        %v2051 = vpop.f32.mrb[0].mxu0
        %v2052 = vpop.f32.mrb[0].mxu0
        %v2053 = vadd.f32 0.0, %v2052
        %v2054 = vpop.f32.mrb[0].mxu0
        %2055 = vmatprep.mubr.bf16.mxu0 0
        %2056 = vmatmul.mubr.bf16.gmra.mrb[0].mxu0 %v1906
        %v2057 = vpop.f32.mrb[0].mxu0
        %v2058 = vadd.f32 0.0, %v2057
        %v2059 = vpop.f32.mrb[0].mxu0
        %v2060 = vpop.f32.mrb[0].mxu0
        %v2061 = vadd.f32 0.0, %v2060
        %v2062 = vpop.f32.mrb[0].mxu0
        %2063 = vmatprep.mubr.bf16.mxu0 0
        %2064 = vmatmul.mubr.bf16.gmra.mrb[0].mxu0 %v1909
        %v2065 = vpop.f32.mrb[0].mxu0
        %v2066 = vadd.f32 0.0, %v2065
        %v2067 = vpop.f32.mrb[0].mxu0
        %v2068 = vpop.f32.mrb[0].mxu0
        %v2069 = vadd.f32 0.0, %v2068
        %v2070 = vpop.f32.mrb[0].mxu0
        %2071 = vdwg.mxu0
        %v2072 = vadd.f32 %v1766, %v1946
        %v2073 = vadd.f32 %v1767, %v1949
        %v2074 = vadd.f32 %v1768, %v1954
        %v2075 = vadd.f32 %v1769, %v1957
        %v2076 = vadd.f32 %v1770, %v1962
        %v2077 = vadd.f32 %v1771, %v1965
        %v2078 = vadd.f32 %v1772, %v1970
        %v2079 = vadd.f32 %v1773, %v1973
        %v2080 = vadd.f32 %v1774, %v1978
        %v2081 = vadd.f32 %v1775, %v1981
        %v2082 = vadd.f32 %v1776, %v1986
        %v2083 = vadd.f32 %v1777, %v1989
        %v2084 = vadd.f32 %v1778, %v1994
        %v2085 = vadd.f32 %v1779, %v1997
        %v2086 = vadd.f32 %v1780, %v2002
        %v2087 = vadd.f32 %v1781, %v2005
        %v2088 = vadd.f32 %v1782, %v2010
        %v2089 = vadd.f32 %v1783, %v2013
        %v2090 = vadd.f32 %v1784, %v2018
        %v2091 = vadd.f32 %v1785, %v2021
        %v2092 = vadd.f32 %v1786, %v2026
        %v2093 = vadd.f32 %v1787, %v2029
        %v2094 = vadd.f32 %v1788, %v2034
        %v2095 = vadd.f32 %v1789, %v2037
        %v2096 = vadd.f32 %v1790, %v2042
        %v2097 = vadd.f32 %v1791, %v2045
        %v2098 = vadd.f32 %v1792, %v2050
        %v2099 = vadd.f32 %v1793, %v2053
        %v2100 = vadd.f32 %v1794, %v2058
        %v2101 = vadd.f32 %v1795, %v2061
        %v2102 = vadd.f32 %v1796, %v2066
        %v2103 = vadd.f32 %v1797, %v2069
        %v2104 = vld [vmem:[%s912 + $0x1] sm:$0xff]
        %v2105 = vld [vmem:[%s912 + $0x9] sm:$0xff]
        %v2106 = vld [vmem:[%s912 + $0x19] sm:$0xff]
        %v2107 = vld [vmem:[%s912 + $0x21] sm:$0xff]
        %v2108 = vld [vmem:[%s912 + $0x31] sm:$0xff]
        %v2109 = vld [vmem:[%s912 + $0x39] sm:$0xff]
        %v2110 = vld [vmem:[%s912 + $0x49] sm:$0xff]
        %v2111 = vld [vmem:[%s912 + $0x51] sm:$0xff]
        %v2112 = vld [vmem:[%s912 + $0x61] sm:$0xff]
        %v2113 = vld [vmem:[%s912 + $0x69] sm:$0xff]
        %v2114 = vld [vmem:[%s912 + $0x79] sm:$0xff]
        %v2115 = vld [vmem:[%s912 + $0x81] sm:$0xff]
        %v2116 = vld [vmem:[%s912 + $0x91] sm:$0xff]
        %v2117 = vld [vmem:[%s912 + $0x99] sm:$0xff]
        %v2118 = vld [vmem:[%s912 + $0xa9] sm:$0xff]
        %v2119 = vld [vmem:[%s912 + $0xb1] sm:$0xff]
        %v2120 = vld [vmem:[%s912 + $0xc1] sm:$0xff]
        %v2121 = vld [vmem:[%s912 + $0xc9] sm:$0xff]
        %v2122 = vld [vmem:[%s912 + $0xd9] sm:$0xff]
        %v2123 = vld [vmem:[%s912 + $0xe1] sm:$0xff]
        %v2124 = vld [vmem:[%s912 + $0xf1] sm:$0xff]
        %v2125 = vld [vmem:[%s912 + $0xf9] sm:$0xff]
        %v2126 = vld [vmem:[%s912 + $0x109] sm:$0xff]
        %v2127 = vld [vmem:[%s912 + $0x111] sm:$0xff]
        %v2128 = vld [vmem:[%s912 + $0x121] sm:$0xff]
        %v2129 = vld [vmem:[%s912 + $0x129] sm:$0xff]
        %v2130 = vld [vmem:[%s912 + $0x139] sm:$0xff]
        %v2131 = vld [vmem:[%s912 + $0x141] sm:$0xff]
        %v2132 = vld [vmem:[%s912 + $0x151] sm:$0xff]
        %v2133 = vld [vmem:[%s912 + $0x159] sm:$0xff]
        %v2134 = vld [vmem:[%s912 + $0x169] sm:$0xff]
        %v2135 = vld [vmem:[%s912 + $0x171] sm:$0xff]
        %v2136 = vpack.c.bf16 %v2105, %v2104
        %v2137 = vpack.c.bf16 %v2107, %v2106
        %v2138 = vpack.c.bf16 %v2109, %v2108
        %v2139 = vpack.c.bf16 %v2111, %v2110
        %v2140 = vpack.c.bf16 %v2113, %v2112
        %v2141 = vpack.c.bf16 %v2115, %v2114
        %v2142 = vpack.c.bf16 %v2117, %v2116
        %v2143 = vpack.c.bf16 %v2119, %v2118
        %v2144 = vpack.c.bf16 %v2121, %v2120
        %v2145 = vpack.c.bf16 %v2123, %v2122
        %v2146 = vpack.c.bf16 %v2125, %v2124
        %v2147 = vpack.c.bf16 %v2127, %v2126
        %v2148 = vpack.c.bf16 %v2129, %v2128
        %v2149 = vpack.c.bf16 %v2131, %v2130
        %v2150 = vpack.c.bf16 %v2133, %v2132
        %v2151 = vpack.c.bf16 %v2135, %v2134
        %s2152 = scalar_lea.vmem %s4, 64
        %v2153 = vld [vmem:[%s2152] sm:$0xf]
        %v2154 = vld [vmem:[%s2152 + $0x4] sm:$0xf]
        %v2155 = vld [vmem:[%s2152 + $0x8] sm:$0xf]
        %v2156 = vld [vmem:[%s2152 + $0xc] sm:$0xf]
        %v2161 = vunpack.c.l.b16 %v2153
        %v2162 = vunpack.c.l.b16 %v2154
        %v2163 = vunpack.c.l.b16 %v2155
        %v2164 = vunpack.c.l.b16 %v2156
        %v2165 = vpack.c.b16 %v2162, %v2161
        %v2166 = vpack.c.b16 %v2164, %v2163
        %v2170 = vsel %vm857, %v2136, 0
        %v2173 = vsel %vm857, %v2137, 0
        %v2176 = vsel %vm857, %v2138, 0
        %v2179 = vsel %vm857, %v2139, 0
        %v2182 = vsel %vm857, %v2140, 0
        %v2185 = vsel %vm857, %v2141, 0
        %v2188 = vsel %vm857, %v2142, 0
        %v2191 = vsel %vm857, %v2143, 0
        %v2194 = vsel %vm857, %v2144, 0
        %v2197 = vsel %vm857, %v2145, 0
        %v2200 = vsel %vm857, %v2146, 0
        %v2203 = vsel %vm857, %v2147, 0
        %v2206 = vsel %vm857, %v2148, 0
        %v2209 = vsel %vm857, %v2149, 0
        %v2212 = vsel %vm857, %v2150, 0
        %v2215 = vsel %vm857, %v2151, 0
        %2217 = vmatprep.subr.bf16.mxu0 0
        %2218 = vmatpush1.bf16.msra.mxu0 %v2165
        %2219 = vmatprep.subr.bf16.mxu0 0
        %2220 = vmatpush1.bf16.msra.mxu0 %v2166
        %2221 = vmatprep.subr.bf16.mxu0 0
        %2222 = vmatpush1.bf16.msra.mxu0 0
        %2223 = vmatprep.subr.bf16.mxu0 0
        %2224 = vmatpush1.bf16.msra.mxu0 0
        %2225 = vmatprep.subr.bf16.mxu0 0
        %2226 = vmatpush1.bf16.msra.mxu0 0
        %2227 = vmatprep.subr.bf16.mxu0 0
        %2228 = vmatpush1.bf16.msra.mxu0 0
        %2229 = vmatprep.subr.bf16.mxu0 0
        %2230 = vmatpush1.bf16.msra.mxu0 0
        %2231 = vmatprep.subr.bf16.mxu0 0
        %2232 = vmatpush1.bf16.msra.mxu0 0
        %2233 = vmatprep.subr.bf16.mxu0 0
        %2234 = vmatpush1.bf16.msra.mxu0 0
        %2235 = vmatprep.subr.bf16.mxu0 0
        %2236 = vmatpush1.bf16.msra.mxu0 0
        %2237 = vmatprep.subr.bf16.mxu0 0
        %2238 = vmatpush1.bf16.msra.mxu0 0
        %2239 = vmatprep.subr.bf16.mxu0 0
        %2240 = vmatpush1.bf16.msra.mxu0 0
        %2241 = vmatprep.subr.bf16.mxu0 0
        %2242 = vmatpush1.bf16.msra.mxu0 0
        %2243 = vmatprep.subr.bf16.mxu0 0
        %2244 = vmatpush1.bf16.msra.mxu0 0
        %2245 = vmatprep.subr.bf16.mxu0 0
        %2246 = vmatpush1.bf16.msra.mxu0 0
        %2247 = vmatprep.subr.bf16.mxu0 0
        %2248 = vmatpush1.bf16.msra.mxu0 0
        %2249 = vmatprep.mubr.bf16.mxu0 0
        %2250 = vmatmul.mubr.bf16.gmra.mrb[0].mxu0 %v2170
        %v2251 = vpop.f32.mrb[0].mxu0
        %v2252 = vadd.f32 0.0, %v2251
        %v2253 = vpop.f32.mrb[0].mxu0
        %v2254 = vpop.f32.mrb[0].mxu0
        %v2255 = vadd.f32 0.0, %v2254
        %v2256 = vpop.f32.mrb[0].mxu0
        %2257 = vmatprep.mubr.bf16.mxu0 0
        %2258 = vmatmul.mubr.bf16.gmra.mrb[0].mxu0 %v2173
        %v2259 = vpop.f32.mrb[0].mxu0
        %v2260 = vadd.f32 0.0, %v2259
        %v2261 = vpop.f32.mrb[0].mxu0
        %v2262 = vpop.f32.mrb[0].mxu0
        %v2263 = vadd.f32 0.0, %v2262
        %v2264 = vpop.f32.mrb[0].mxu0
        %2265 = vmatprep.mubr.bf16.mxu0 0
        %2266 = vmatmul.mubr.bf16.gmra.mrb[0].mxu0 %v2176
        %v2267 = vpop.f32.mrb[0].mxu0
        %v2268 = vadd.f32 0.0, %v2267
        %v2269 = vpop.f32.mrb[0].mxu0
        %v2270 = vpop.f32.mrb[0].mxu0
        %v2271 = vadd.f32 0.0, %v2270
        %v2272 = vpop.f32.mrb[0].mxu0
        %2273 = vmatprep.mubr.bf16.mxu0 0
        %2274 = vmatmul.mubr.bf16.gmra.mrb[0].mxu0 %v2179
        %v2275 = vpop.f32.mrb[0].mxu0
        %v2276 = vadd.f32 0.0, %v2275
        %v2277 = vpop.f32.mrb[0].mxu0
        %v2278 = vpop.f32.mrb[0].mxu0
        %v2279 = vadd.f32 0.0, %v2278
        %v2280 = vpop.f32.mrb[0].mxu0
        %2281 = vmatprep.mubr.bf16.mxu0 0
        %2282 = vmatmul.mubr.bf16.gmra.mrb[0].mxu0 %v2182
        %v2283 = vpop.f32.mrb[0].mxu0
        %v2284 = vadd.f32 0.0, %v2283
        %v2285 = vpop.f32.mrb[0].mxu0
        %v2286 = vpop.f32.mrb[0].mxu0
        %v2287 = vadd.f32 0.0, %v2286
        %v2288 = vpop.f32.mrb[0].mxu0
        %2289 = vmatprep.mubr.bf16.mxu0 0
        %2290 = vmatmul.mubr.bf16.gmra.mrb[0].mxu0 %v2185
        %v2291 = vpop.f32.mrb[0].mxu0
        %v2292 = vadd.f32 0.0, %v2291
        %v2293 = vpop.f32.mrb[0].mxu0
        %v2294 = vpop.f32.mrb[0].mxu0
        %v2295 = vadd.f32 0.0, %v2294
        %v2296 = vpop.f32.mrb[0].mxu0
        %2297 = vmatprep.mubr.bf16.mxu0 0
        %2298 = vmatmul.mubr.bf16.gmra.mrb[0].mxu0 %v2188
        %v2299 = vpop.f32.mrb[0].mxu0
        %v2300 = vadd.f32 0.0, %v2299
        %v2301 = vpop.f32.mrb[0].mxu0
        %v2302 = vpop.f32.mrb[0].mxu0
        %v2303 = vadd.f32 0.0, %v2302
        %v2304 = vpop.f32.mrb[0].mxu0
        %2305 = vmatprep.mubr.bf16.mxu0 0
        %2306 = vmatmul.mubr.bf16.gmra.mrb[0].mxu0 %v2191
        %v2307 = vpop.f32.mrb[0].mxu0
        %v2308 = vadd.f32 0.0, %v2307
        %v2309 = vpop.f32.mrb[0].mxu0
        %v2310 = vpop.f32.mrb[0].mxu0
        %v2311 = vadd.f32 0.0, %v2310
        %v2312 = vpop.f32.mrb[0].mxu0
        %2313 = vmatprep.mubr.bf16.mxu0 0
        %2314 = vmatmul.mubr.bf16.gmra.mrb[0].mxu0 %v2194
        %v2315 = vpop.f32.mrb[0].mxu0
        %v2316 = vadd.f32 0.0, %v2315
        %v2317 = vpop.f32.mrb[0].mxu0
        %v2318 = vpop.f32.mrb[0].mxu0
        %v2319 = vadd.f32 0.0, %v2318
        %v2320 = vpop.f32.mrb[0].mxu0
        %2321 = vmatprep.mubr.bf16.mxu0 0
        %2322 = vmatmul.mubr.bf16.gmra.mrb[0].mxu0 %v2197
        %v2323 = vpop.f32.mrb[0].mxu0
        %v2324 = vadd.f32 0.0, %v2323
        %v2325 = vpop.f32.mrb[0].mxu0
        %v2326 = vpop.f32.mrb[0].mxu0
        %v2327 = vadd.f32 0.0, %v2326
        %v2328 = vpop.f32.mrb[0].mxu0
        %2329 = vmatprep.mubr.bf16.mxu0 0
        %2330 = vmatmul.mubr.bf16.gmra.mrb[0].mxu0 %v2200
        %v2331 = vpop.f32.mrb[0].mxu0
        %v2332 = vadd.f32 0.0, %v2331
        %v2333 = vpop.f32.mrb[0].mxu0
        %v2334 = vpop.f32.mrb[0].mxu0
        %v2335 = vadd.f32 0.0, %v2334
        %v2336 = vpop.f32.mrb[0].mxu0
        %2337 = vmatprep.mubr.bf16.mxu0 0
        %2338 = vmatmul.mubr.bf16.gmra.mrb[0].mxu0 %v2203
        %v2339 = vpop.f32.mrb[0].mxu0
        %v2340 = vadd.f32 0.0, %v2339
        %v2341 = vpop.f32.mrb[0].mxu0
        %v2342 = vpop.f32.mrb[0].mxu0
        %v2343 = vadd.f32 0.0, %v2342
        %v2344 = vpop.f32.mrb[0].mxu0
        %2345 = vmatprep.mubr.bf16.mxu0 0
        %2346 = vmatmul.mubr.bf16.gmra.mrb[0].mxu0 %v2206
        %v2347 = vpop.f32.mrb[0].mxu0
        %v2348 = vadd.f32 0.0, %v2347
        %v2349 = vpop.f32.mrb[0].mxu0
        %v2350 = vpop.f32.mrb[0].mxu0
        %v2351 = vadd.f32 0.0, %v2350
        %v2352 = vpop.f32.mrb[0].mxu0
        %2353 = vmatprep.mubr.bf16.mxu0 0
        %2354 = vmatmul.mubr.bf16.gmra.mrb[0].mxu0 %v2209
        %v2355 = vpop.f32.mrb[0].mxu0
        %v2356 = vadd.f32 0.0, %v2355
        %v2357 = vpop.f32.mrb[0].mxu0
        %v2358 = vpop.f32.mrb[0].mxu0
        %v2359 = vadd.f32 0.0, %v2358
        %v2360 = vpop.f32.mrb[0].mxu0
        %2361 = vmatprep.mubr.bf16.mxu0 0
        %2362 = vmatmul.mubr.bf16.gmra.mrb[0].mxu0 %v2212
        %v2363 = vpop.f32.mrb[0].mxu0
        %v2364 = vadd.f32 0.0, %v2363
        %v2365 = vpop.f32.mrb[0].mxu0
        %v2366 = vpop.f32.mrb[0].mxu0
        %v2367 = vadd.f32 0.0, %v2366
        %v2368 = vpop.f32.mrb[0].mxu0
        %2369 = vmatprep.mubr.bf16.mxu0 0
        %2370 = vmatmul.mubr.bf16.gmra.mrb[0].mxu0 %v2215
        %v2371 = vpop.f32.mrb[0].mxu0
        %v2372 = vadd.f32 0.0, %v2371
        %v2373 = vpop.f32.mrb[0].mxu0
        %v2374 = vpop.f32.mrb[0].mxu0
        %v2375 = vadd.f32 0.0, %v2374
        %v2376 = vpop.f32.mrb[0].mxu0
        %2377 = vdwg.mxu0
        %v2378 = vadd.f32 %v2072, %v2252
        %v2379 = vadd.f32 %v2073, %v2255
        %v2380 = vadd.f32 %v2074, %v2260
        %v2381 = vadd.f32 %v2075, %v2263
        %v2382 = vadd.f32 %v2076, %v2268
        %v2383 = vadd.f32 %v2077, %v2271
        %v2384 = vadd.f32 %v2078, %v2276
        %v2385 = vadd.f32 %v2079, %v2279
        %v2386 = vadd.f32 %v2080, %v2284
        %v2387 = vadd.f32 %v2081, %v2287
        %v2388 = vadd.f32 %v2082, %v2292
        %v2389 = vadd.f32 %v2083, %v2295
        %v2390 = vadd.f32 %v2084, %v2300
        %v2391 = vadd.f32 %v2085, %v2303
        %v2392 = vadd.f32 %v2086, %v2308
        %v2393 = vadd.f32 %v2087, %v2311
        %v2394 = vadd.f32 %v2088, %v2316
        %v2395 = vadd.f32 %v2089, %v2319
        %v2396 = vadd.f32 %v2090, %v2324
        %v2397 = vadd.f32 %v2091, %v2327
        %v2398 = vadd.f32 %v2092, %v2332
        %v2399 = vadd.f32 %v2093, %v2335
        %v2400 = vadd.f32 %v2094, %v2340
        %v2401 = vadd.f32 %v2095, %v2343
        %v2402 = vadd.f32 %v2096, %v2348
        %v2403 = vadd.f32 %v2097, %v2351
        %v2404 = vadd.f32 %v2098, %v2356
        %v2405 = vadd.f32 %v2099, %v2359
        %v2406 = vadd.f32 %v2100, %v2364
        %v2407 = vadd.f32 %v2101, %v2367
        %v2408 = vadd.f32 %v2102, %v2372
        %v2409 = vadd.f32 %v2103, %v2375
        %v2410 = vld [vmem:[%s912 + $0x2] sm:$0xff]
        %v2411 = vld [vmem:[%s912 + $0xa] sm:$0xff]
        %v2412 = vld [vmem:[%s912 + $0x1a] sm:$0xff]
        %v2413 = vld [vmem:[%s912 + $0x22] sm:$0xff]
        %v2414 = vld [vmem:[%s912 + $0x32] sm:$0xff]
        %v2415 = vld [vmem:[%s912 + $0x3a] sm:$0xff]
        %v2416 = vld [vmem:[%s912 + $0x4a] sm:$0xff]
        %v2417 = vld [vmem:[%s912 + $0x52] sm:$0xff]
        %v2418 = vld [vmem:[%s912 + $0x62] sm:$0xff]
        %v2419 = vld [vmem:[%s912 + $0x6a] sm:$0xff]
        %v2420 = vld [vmem:[%s912 + $0x7a] sm:$0xff]
        %v2421 = vld [vmem:[%s912 + $0x82] sm:$0xff]
        %v2422 = vld [vmem:[%s912 + $0x92] sm:$0xff]
        %v2423 = vld [vmem:[%s912 + $0x9a] sm:$0xff]
        %v2424 = vld [vmem:[%s912 + $0xaa] sm:$0xff]
        %v2425 = vld [vmem:[%s912 + $0xb2] sm:$0xff]
        %v2426 = vld [vmem:[%s912 + $0xc2] sm:$0xff]
        %v2427 = vld [vmem:[%s912 + $0xca] sm:$0xff]
        %v2428 = vld [vmem:[%s912 + $0xda] sm:$0xff]
        %v2429 = vld [vmem:[%s912 + $0xe2] sm:$0xff]
        %v2430 = vld [vmem:[%s912 + $0xf2] sm:$0xff]
        %v2431 = vld [vmem:[%s912 + $0xfa] sm:$0xff]
        %v2432 = vld [vmem:[%s912 + $0x10a] sm:$0xff]
        %v2433 = vld [vmem:[%s912 + $0x112] sm:$0xff]
        %v2434 = vld [vmem:[%s912 + $0x122] sm:$0xff]
        %v2435 = vld [vmem:[%s912 + $0x12a] sm:$0xff]
        %v2436 = vld [vmem:[%s912 + $0x13a] sm:$0xff]
        %v2437 = vld [vmem:[%s912 + $0x142] sm:$0xff]
        %v2438 = vld [vmem:[%s912 + $0x152] sm:$0xff]
        %v2439 = vld [vmem:[%s912 + $0x15a] sm:$0xff]
        %v2440 = vld [vmem:[%s912 + $0x16a] sm:$0xff]
        %v2441 = vld [vmem:[%s912 + $0x172] sm:$0xff]
        %v2442 = vpack.c.bf16 %v2411, %v2410
        %v2443 = vpack.c.bf16 %v2413, %v2412
        %v2444 = vpack.c.bf16 %v2415, %v2414
        %v2445 = vpack.c.bf16 %v2417, %v2416
        %v2446 = vpack.c.bf16 %v2419, %v2418
        %v2447 = vpack.c.bf16 %v2421, %v2420
        %v2448 = vpack.c.bf16 %v2423, %v2422
        %v2449 = vpack.c.bf16 %v2425, %v2424
        %v2450 = vpack.c.bf16 %v2427, %v2426
        %v2451 = vpack.c.bf16 %v2429, %v2428
        %v2452 = vpack.c.bf16 %v2431, %v2430
        %v2453 = vpack.c.bf16 %v2433, %v2432
        %v2454 = vpack.c.bf16 %v2435, %v2434
        %v2455 = vpack.c.bf16 %v2437, %v2436
        %v2456 = vpack.c.bf16 %v2439, %v2438
        %v2457 = vpack.c.bf16 %v2441, %v2440
        %s2458 = scalar_lea.vmem %s4, 80
        %v2459 = vld [vmem:[%s2458] sm:$0xf]
        %v2460 = vld [vmem:[%s2458 + $0x4] sm:$0xf]
        %v2461 = vld [vmem:[%s2458 + $0x8] sm:$0xf]
        %v2462 = vld [vmem:[%s2458 + $0xc] sm:$0xf]
        %v2467 = vunpack.c.l.b16 %v2459
        %v2468 = vunpack.c.l.b16 %v2460
        %v2469 = vunpack.c.l.b16 %v2461
        %v2470 = vunpack.c.l.b16 %v2462
        %v2471 = vpack.c.b16 %v2468, %v2467
        %v2472 = vpack.c.b16 %v2470, %v2469
        %v2476 = vsel %vm857, %v2442, 0
        %v2479 = vsel %vm857, %v2443, 0
        %v2482 = vsel %vm857, %v2444, 0
        %v2485 = vsel %vm857, %v2445, 0
        %v2488 = vsel %vm857, %v2446, 0
        %v2491 = vsel %vm857, %v2447, 0
        %v2494 = vsel %vm857, %v2448, 0
        %v2497 = vsel %vm857, %v2449, 0
        %v2500 = vsel %vm857, %v2450, 0
        %v2503 = vsel %vm857, %v2451, 0
        %v2506 = vsel %vm857, %v2452, 0
        %v2509 = vsel %vm857, %v2453, 0
        %v2512 = vsel %vm857, %v2454, 0
        %v2515 = vsel %vm857, %v2455, 0
        %v2518 = vsel %vm857, %v2456, 0
        %v2521 = vsel %vm857, %v2457, 0
        %2523 = vmatprep.subr.bf16.mxu0 0
        %2524 = vmatpush1.bf16.msra.mxu0 %v2471
        %2525 = vmatprep.subr.bf16.mxu0 0
        %2526 = vmatpush1.bf16.msra.mxu0 %v2472
        %2527 = vmatprep.subr.bf16.mxu0 0
        %2528 = vmatpush1.bf16.msra.mxu0 0
        %2529 = vmatprep.subr.bf16.mxu0 0
        %2530 = vmatpush1.bf16.msra.mxu0 0
        %2531 = vmatprep.subr.bf16.mxu0 0
        %2532 = vmatpush1.bf16.msra.mxu0 0
        %2533 = vmatprep.subr.bf16.mxu0 0
        %2534 = vmatpush1.bf16.msra.mxu0 0
        %2535 = vmatprep.subr.bf16.mxu0 0
        %2536 = vmatpush1.bf16.msra.mxu0 0
        %2537 = vmatprep.subr.bf16.mxu0 0
        %2538 = vmatpush1.bf16.msra.mxu0 0
        %2539 = vmatprep.subr.bf16.mxu0 0
        %2540 = vmatpush1.bf16.msra.mxu0 0
        %2541 = vmatprep.subr.bf16.mxu0 0
        %2542 = vmatpush1.bf16.msra.mxu0 0
        %2543 = vmatprep.subr.bf16.mxu0 0
        %2544 = vmatpush1.bf16.msra.mxu0 0
        %2545 = vmatprep.subr.bf16.mxu0 0
        %2546 = vmatpush1.bf16.msra.mxu0 0
        %2547 = vmatprep.subr.bf16.mxu0 0
        %2548 = vmatpush1.bf16.msra.mxu0 0
        %2549 = vmatprep.subr.bf16.mxu0 0
        %2550 = vmatpush1.bf16.msra.mxu0 0
        %2551 = vmatprep.subr.bf16.mxu0 0
        %2552 = vmatpush1.bf16.msra.mxu0 0
        %2553 = vmatprep.subr.bf16.mxu0 0
        %2554 = vmatpush1.bf16.msra.mxu0 0
        %2555 = vmatprep.mubr.bf16.mxu0 0
        %2556 = vmatmul.mubr.bf16.gmra.mrb[0].mxu0 %v2476
        %v2557 = vpop.f32.mrb[0].mxu0
        %v2558 = vadd.f32 0.0, %v2557
        %v2559 = vpop.f32.mrb[0].mxu0
        %v2560 = vpop.f32.mrb[0].mxu0
        %v2561 = vadd.f32 0.0, %v2560
        %v2562 = vpop.f32.mrb[0].mxu0
        %2563 = vmatprep.mubr.bf16.mxu0 0
        %2564 = vmatmul.mubr.bf16.gmra.mrb[0].mxu0 %v2479
        %v2565 = vpop.f32.mrb[0].mxu0
        %v2566 = vadd.f32 0.0, %v2565
        %v2567 = vpop.f32.mrb[0].mxu0
        %v2568 = vpop.f32.mrb[0].mxu0
        %v2569 = vadd.f32 0.0, %v2568
        %v2570 = vpop.f32.mrb[0].mxu0
        %2571 = vmatprep.mubr.bf16.mxu0 0
        %2572 = vmatmul.mubr.bf16.gmra.mrb[0].mxu0 %v2482
        %v2573 = vpop.f32.mrb[0].mxu0
        %v2574 = vadd.f32 0.0, %v2573
        %v2575 = vpop.f32.mrb[0].mxu0
        %v2576 = vpop.f32.mrb[0].mxu0
        %v2577 = vadd.f32 0.0, %v2576
        %v2578 = vpop.f32.mrb[0].mxu0
        %2579 = vmatprep.mubr.bf16.mxu0 0
        %2580 = vmatmul.mubr.bf16.gmra.mrb[0].mxu0 %v2485
        %v2581 = vpop.f32.mrb[0].mxu0
        %v2582 = vadd.f32 0.0, %v2581
        %v2583 = vpop.f32.mrb[0].mxu0
        %v2584 = vpop.f32.mrb[0].mxu0
        %v2585 = vadd.f32 0.0, %v2584
        %v2586 = vpop.f32.mrb[0].mxu0
        %2587 = vmatprep.mubr.bf16.mxu0 0
        %2588 = vmatmul.mubr.bf16.gmra.mrb[0].mxu0 %v2488
        %v2589 = vpop.f32.mrb[0].mxu0
        %v2590 = vadd.f32 0.0, %v2589
        %v2591 = vpop.f32.mrb[0].mxu0
        %v2592 = vpop.f32.mrb[0].mxu0
        %v2593 = vadd.f32 0.0, %v2592
        %v2594 = vpop.f32.mrb[0].mxu0
        %2595 = vmatprep.mubr.bf16.mxu0 0
        %2596 = vmatmul.mubr.bf16.gmra.mrb[0].mxu0 %v2491
        %v2597 = vpop.f32.mrb[0].mxu0
        %v2598 = vadd.f32 0.0, %v2597
        %v2599 = vpop.f32.mrb[0].mxu0
        %v2600 = vpop.f32.mrb[0].mxu0
        %v2601 = vadd.f32 0.0, %v2600
        %v2602 = vpop.f32.mrb[0].mxu0
        %2603 = vmatprep.mubr.bf16.mxu0 0
        %2604 = vmatmul.mubr.bf16.gmra.mrb[0].mxu0 %v2494
        %v2605 = vpop.f32.mrb[0].mxu0
        %v2606 = vadd.f32 0.0, %v2605
        %v2607 = vpop.f32.mrb[0].mxu0
        %v2608 = vpop.f32.mrb[0].mxu0
        %v2609 = vadd.f32 0.0, %v2608
        %v2610 = vpop.f32.mrb[0].mxu0
        %2611 = vmatprep.mubr.bf16.mxu0 0
        %2612 = vmatmul.mubr.bf16.gmra.mrb[0].mxu0 %v2497
        %v2613 = vpop.f32.mrb[0].mxu0
        %v2614 = vadd.f32 0.0, %v2613
        %v2615 = vpop.f32.mrb[0].mxu0
        %v2616 = vpop.f32.mrb[0].mxu0
        %v2617 = vadd.f32 0.0, %v2616
        %v2618 = vpop.f32.mrb[0].mxu0
        %2619 = vmatprep.mubr.bf16.mxu0 0
        %2620 = vmatmul.mubr.bf16.gmra.mrb[0].mxu0 %v2500
        %v2621 = vpop.f32.mrb[0].mxu0
        %v2622 = vadd.f32 0.0, %v2621
        %v2623 = vpop.f32.mrb[0].mxu0
        %v2624 = vpop.f32.mrb[0].mxu0
        %v2625 = vadd.f32 0.0, %v2624
        %v2626 = vpop.f32.mrb[0].mxu0
        %2627 = vmatprep.mubr.bf16.mxu0 0
        %2628 = vmatmul.mubr.bf16.gmra.mrb[0].mxu0 %v2503
        %v2629 = vpop.f32.mrb[0].mxu0
        %v2630 = vadd.f32 0.0, %v2629
        %v2631 = vpop.f32.mrb[0].mxu0
        %v2632 = vpop.f32.mrb[0].mxu0
        %v2633 = vadd.f32 0.0, %v2632
        %v2634 = vpop.f32.mrb[0].mxu0
        %2635 = vmatprep.mubr.bf16.mxu0 0
        %2636 = vmatmul.mubr.bf16.gmra.mrb[0].mxu0 %v2506
        %v2637 = vpop.f32.mrb[0].mxu0
        %v2638 = vadd.f32 0.0, %v2637
        %v2639 = vpop.f32.mrb[0].mxu0
        %v2640 = vpop.f32.mrb[0].mxu0
        %v2641 = vadd.f32 0.0, %v2640
        %v2642 = vpop.f32.mrb[0].mxu0
        %2643 = vmatprep.mubr.bf16.mxu0 0
        %2644 = vmatmul.mubr.bf16.gmra.mrb[0].mxu0 %v2509
        %v2645 = vpop.f32.mrb[0].mxu0
        %v2646 = vadd.f32 0.0, %v2645
        %v2647 = vpop.f32.mrb[0].mxu0
        %v2648 = vpop.f32.mrb[0].mxu0
        %v2649 = vadd.f32 0.0, %v2648
        %v2650 = vpop.f32.mrb[0].mxu0
        %2651 = vmatprep.mubr.bf16.mxu0 0
        %2652 = vmatmul.mubr.bf16.gmra.mrb[0].mxu0 %v2512
        %v2653 = vpop.f32.mrb[0].mxu0
        %v2654 = vadd.f32 0.0, %v2653
        %v2655 = vpop.f32.mrb[0].mxu0
        %v2656 = vpop.f32.mrb[0].mxu0
        %v2657 = vadd.f32 0.0, %v2656
        %v2658 = vpop.f32.mrb[0].mxu0
        %2659 = vmatprep.mubr.bf16.mxu0 0
        %2660 = vmatmul.mubr.bf16.gmra.mrb[0].mxu0 %v2515
        %v2661 = vpop.f32.mrb[0].mxu0
        %v2662 = vadd.f32 0.0, %v2661
        %v2663 = vpop.f32.mrb[0].mxu0
        %v2664 = vpop.f32.mrb[0].mxu0
        %v2665 = vadd.f32 0.0, %v2664
        %v2666 = vpop.f32.mrb[0].mxu0
        %2667 = vmatprep.mubr.bf16.mxu0 0
        %2668 = vmatmul.mubr.bf16.gmra.mrb[0].mxu0 %v2518
        %v2669 = vpop.f32.mrb[0].mxu0
        %v2670 = vadd.f32 0.0, %v2669
        %v2671 = vpop.f32.mrb[0].mxu0
        %v2672 = vpop.f32.mrb[0].mxu0
        %v2673 = vadd.f32 0.0, %v2672
        %v2674 = vpop.f32.mrb[0].mxu0
        %2675 = vmatprep.mubr.bf16.mxu0 0
        %2676 = vmatmul.mubr.bf16.gmra.mrb[0].mxu0 %v2521
        %v2677 = vpop.f32.mrb[0].mxu0
        %v2678 = vadd.f32 0.0, %v2677
        %v2679 = vpop.f32.mrb[0].mxu0
        %v2680 = vpop.f32.mrb[0].mxu0
        %v2681 = vadd.f32 0.0, %v2680
        %v2682 = vpop.f32.mrb[0].mxu0
        %2683 = vdwg.mxu0
        %v2684 = vadd.f32 %v2378, %v2558
        %v2685 = vadd.f32 %v2379, %v2561
        %v2686 = vadd.f32 %v2380, %v2566
        %v2687 = vadd.f32 %v2381, %v2569
        %v2688 = vadd.f32 %v2382, %v2574
        %v2689 = vadd.f32 %v2383, %v2577
        %v2690 = vadd.f32 %v2384, %v2582
        %v2691 = vadd.f32 %v2385, %v2585
        %v2692 = vadd.f32 %v2386, %v2590
        %v2693 = vadd.f32 %v2387, %v2593
        %v2694 = vadd.f32 %v2388, %v2598
        %v2695 = vadd.f32 %v2389, %v2601
        %v2696 = vadd.f32 %v2390, %v2606
        %v2697 = vadd.f32 %v2391, %v2609
        %v2698 = vadd.f32 %v2392, %v2614
        %v2699 = vadd.f32 %v2393, %v2617
        %v2700 = vadd.f32 %v2394, %v2622
        %v2701 = vadd.f32 %v2395, %v2625
        %v2702 = vadd.f32 %v2396, %v2630
        %v2703 = vadd.f32 %v2397, %v2633
        %v2704 = vadd.f32 %v2398, %v2638
        %v2705 = vadd.f32 %v2399, %v2641
        %v2706 = vadd.f32 %v2400, %v2646
        %v2707 = vadd.f32 %v2401, %v2649
        %v2708 = vadd.f32 %v2402, %v2654
        %v2709 = vadd.f32 %v2403, %v2657
        %v2710 = vadd.f32 %v2404, %v2662
        %v2711 = vadd.f32 %v2405, %v2665
        %v2712 = vadd.f32 %v2406, %v2670
        %v2713 = vadd.f32 %v2407, %v2673
        %v2714 = vadd.f32 %v2408, %v2678
        %v2715 = vadd.f32 %v2409, %v2681
        %s2716 = scalar_lea.vmem [#allocation2], 48
        %v2717 = vld [vmem:[%s2716] sm:$0xff]
        %v2718 = vld [vmem:[%s2716 + $0x8] sm:$0xff]
        %v2719 = vld [vmem:[%s2716 + $0x18] sm:$0xff]
        %v2720 = vld [vmem:[%s2716 + $0x20] sm:$0xff]
        %v2721 = vld [vmem:[%s2716 + $0x30] sm:$0xff]
        %v2722 = vld [vmem:[%s2716 + $0x38] sm:$0xff]
        %v2723 = vld [vmem:[%s2716 + $0x48] sm:$0xff]
        %v2724 = vld [vmem:[%s2716 + $0x50] sm:$0xff]
        %v2725 = vld [vmem:[%s2716 + $0x60] sm:$0xff]
        %v2726 = vld [vmem:[%s2716 + $0x68] sm:$0xff]
        %v2727 = vld [vmem:[%s2716 + $0x78] sm:$0xff]
        %v2728 = vld [vmem:[%s2716 + $0x80] sm:$0xff]
        %v2729 = vld [vmem:[%s2716 + $0x90] sm:$0xff]
        %v2730 = vld [vmem:[%s2716 + $0x98] sm:$0xff]
        %v2731 = vld [vmem:[%s2716 + $0xa8] sm:$0xff]
        %v2732 = vld [vmem:[%s2716 + $0xb0] sm:$0xff]
        %v2733 = vld [vmem:[%s2716 + $0xc0] sm:$0xff]
        %v2734 = vld [vmem:[%s2716 + $0xc8] sm:$0xff]
        %v2735 = vld [vmem:[%s2716 + $0xd8] sm:$0xff]
        %v2736 = vld [vmem:[%s2716 + $0xe0] sm:$0xff]
        %v2737 = vld [vmem:[%s2716 + $0xf0] sm:$0xff]
        %v2738 = vld [vmem:[%s2716 + $0xf8] sm:$0xff]
        %v2739 = vld [vmem:[%s2716 + $0x108] sm:$0xff]
        %v2740 = vld [vmem:[%s2716 + $0x110] sm:$0xff]
        %v2741 = vld [vmem:[%s2716 + $0x120] sm:$0xff]
        %v2742 = vld [vmem:[%s2716 + $0x128] sm:$0xff]
        %v2743 = vld [vmem:[%s2716 + $0x138] sm:$0xff]
        %v2744 = vld [vmem:[%s2716 + $0x140] sm:$0xff]
        %v2745 = vld [vmem:[%s2716 + $0x150] sm:$0xff]
        %v2746 = vld [vmem:[%s2716 + $0x158] sm:$0xff]
        %v2747 = vld [vmem:[%s2716 + $0x168] sm:$0xff]
        %v2748 = vld [vmem:[%s2716 + $0x170] sm:$0xff]
        %v2749 = vpack.c.bf16 %v2718, %v2717
        %v2750 = vpack.c.bf16 %v2720, %v2719
        %v2751 = vpack.c.bf16 %v2722, %v2721
        %v2752 = vpack.c.bf16 %v2724, %v2723
        %v2753 = vpack.c.bf16 %v2726, %v2725
        %v2754 = vpack.c.bf16 %v2728, %v2727
        %v2755 = vpack.c.bf16 %v2730, %v2729
        %v2756 = vpack.c.bf16 %v2732, %v2731
        %v2757 = vpack.c.bf16 %v2734, %v2733
        %v2758 = vpack.c.bf16 %v2736, %v2735
        %v2759 = vpack.c.bf16 %v2738, %v2737
        %v2760 = vpack.c.bf16 %v2740, %v2739
        %v2761 = vpack.c.bf16 %v2742, %v2741
        %v2762 = vpack.c.bf16 %v2744, %v2743
        %v2763 = vpack.c.bf16 %v2746, %v2745
        %v2764 = vpack.c.bf16 %v2748, %v2747
        %s2765 = scalar_lea.vmem %s4, 96
        %v2766 = vld [vmem:[%s2765] sm:$0xf]
        %v2767 = vld [vmem:[%s2765 + $0x4] sm:$0xf]
        %v2768 = vld [vmem:[%s2765 + $0x8] sm:$0xf]
        %v2769 = vld [vmem:[%s2765 + $0xc] sm:$0xf]
        %v2774 = vunpack.c.l.b16 %v2766
        %v2775 = vunpack.c.l.b16 %v2767
        %v2776 = vunpack.c.l.b16 %v2768
        %v2777 = vunpack.c.l.b16 %v2769
        %v2778 = vpack.c.b16 %v2775, %v2774
        %v2779 = vpack.c.b16 %v2777, %v2776
        %v2783 = vsel %vm857, %v2749, 0
        %v2786 = vsel %vm857, %v2750, 0
        %v2789 = vsel %vm857, %v2751, 0
        %v2792 = vsel %vm857, %v2752, 0
        %v2795 = vsel %vm857, %v2753, 0
        %v2798 = vsel %vm857, %v2754, 0
        %v2801 = vsel %vm857, %v2755, 0
        %v2804 = vsel %vm857, %v2756, 0
        %v2807 = vsel %vm857, %v2757, 0
        %v2810 = vsel %vm857, %v2758, 0
        %v2813 = vsel %vm857, %v2759, 0
        %v2816 = vsel %vm857, %v2760, 0
        %v2819 = vsel %vm857, %v2761, 0
        %v2822 = vsel %vm857, %v2762, 0
        %v2825 = vsel %vm857, %v2763, 0
        %v2828 = vsel %vm857, %v2764, 0
        %2830 = vmatprep.subr.bf16.mxu0 0
        %2831 = vmatpush1.bf16.msra.mxu0 %v2778
        %2832 = vmatprep.subr.bf16.mxu0 0
        %2833 = vmatpush1.bf16.msra.mxu0 %v2779
        %2834 = vmatprep.subr.bf16.mxu0 0
        %2835 = vmatpush1.bf16.msra.mxu0 0
        %2836 = vmatprep.subr.bf16.mxu0 0
        %2837 = vmatpush1.bf16.msra.mxu0 0
        %2838 = vmatprep.subr.bf16.mxu0 0
        %2839 = vmatpush1.bf16.msra.mxu0 0
        %2840 = vmatprep.subr.bf16.mxu0 0
        %2841 = vmatpush1.bf16.msra.mxu0 0
        %2842 = vmatprep.subr.bf16.mxu0 0
        %2843 = vmatpush1.bf16.msra.mxu0 0
        %2844 = vmatprep.subr.bf16.mxu0 0
        %2845 = vmatpush1.bf16.msra.mxu0 0
        %2846 = vmatprep.subr.bf16.mxu0 0
        %2847 = vmatpush1.bf16.msra.mxu0 0
        %2848 = vmatprep.subr.bf16.mxu0 0
        %2849 = vmatpush1.bf16.msra.mxu0 0
        %2850 = vmatprep.subr.bf16.mxu0 0
        %2851 = vmatpush1.bf16.msra.mxu0 0
        %2852 = vmatprep.subr.bf16.mxu0 0
        %2853 = vmatpush1.bf16.msra.mxu0 0
        %2854 = vmatprep.subr.bf16.mxu0 0
        %2855 = vmatpush1.bf16.msra.mxu0 0
        %2856 = vmatprep.subr.bf16.mxu0 0
        %2857 = vmatpush1.bf16.msra.mxu0 0
        %2858 = vmatprep.subr.bf16.mxu0 0
        %2859 = vmatpush1.bf16.msra.mxu0 0
        %2860 = vmatprep.subr.bf16.mxu0 0
        %2861 = vmatpush1.bf16.msra.mxu0 0
        %2862 = vmatprep.mubr.bf16.mxu0 0
        %2863 = vmatmul.mubr.bf16.gmra.mrb[0].mxu0 %v2783
        %v2864 = vpop.f32.mrb[0].mxu0
        %v2865 = vadd.f32 0.0, %v2864
        %v2866 = vpop.f32.mrb[0].mxu0
        %v2867 = vpop.f32.mrb[0].mxu0
        %v2868 = vadd.f32 0.0, %v2867
        %v2869 = vpop.f32.mrb[0].mxu0
        %2870 = vmatprep.mubr.bf16.mxu0 0
        %2871 = vmatmul.mubr.bf16.gmra.mrb[0].mxu0 %v2786
        %v2872 = vpop.f32.mrb[0].mxu0
        %v2873 = vadd.f32 0.0, %v2872
        %v2874 = vpop.f32.mrb[0].mxu0
        %v2875 = vpop.f32.mrb[0].mxu0
        %v2876 = vadd.f32 0.0, %v2875
        %v2877 = vpop.f32.mrb[0].mxu0
        %2878 = vmatprep.mubr.bf16.mxu0 0
        %2879 = vmatmul.mubr.bf16.gmra.mrb[0].mxu0 %v2789
        %v2880 = vpop.f32.mrb[0].mxu0
        %v2881 = vadd.f32 0.0, %v2880
        %v2882 = vpop.f32.mrb[0].mxu0
        %v2883 = vpop.f32.mrb[0].mxu0
        %v2884 = vadd.f32 0.0, %v2883
        %v2885 = vpop.f32.mrb[0].mxu0
        %2886 = vmatprep.mubr.bf16.mxu0 0
        %2887 = vmatmul.mubr.bf16.gmra.mrb[0].mxu0 %v2792
        %v2888 = vpop.f32.mrb[0].mxu0
        %v2889 = vadd.f32 0.0, %v2888
        %v2890 = vpop.f32.mrb[0].mxu0
        %v2891 = vpop.f32.mrb[0].mxu0
        %v2892 = vadd.f32 0.0, %v2891
        %v2893 = vpop.f32.mrb[0].mxu0
        %2894 = vmatprep.mubr.bf16.mxu0 0
        %2895 = vmatmul.mubr.bf16.gmra.mrb[0].mxu0 %v2795
        %v2896 = vpop.f32.mrb[0].mxu0
        %v2897 = vadd.f32 0.0, %v2896
        %v2898 = vpop.f32.mrb[0].mxu0
        %v2899 = vpop.f32.mrb[0].mxu0
        %v2900 = vadd.f32 0.0, %v2899
        %v2901 = vpop.f32.mrb[0].mxu0
        %2902 = vmatprep.mubr.bf16.mxu0 0
        %2903 = vmatmul.mubr.bf16.gmra.mrb[0].mxu0 %v2798
        %v2904 = vpop.f32.mrb[0].mxu0
        %v2905 = vadd.f32 0.0, %v2904
        %v2906 = vpop.f32.mrb[0].mxu0
        %v2907 = vpop.f32.mrb[0].mxu0
        %v2908 = vadd.f32 0.0, %v2907
        %v2909 = vpop.f32.mrb[0].mxu0
        %2910 = vmatprep.mubr.bf16.mxu0 0
        %2911 = vmatmul.mubr.bf16.gmra.mrb[0].mxu0 %v2801
        %v2912 = vpop.f32.mrb[0].mxu0
        %v2913 = vadd.f32 0.0, %v2912
        %v2914 = vpop.f32.mrb[0].mxu0
        %v2915 = vpop.f32.mrb[0].mxu0
        %v2916 = vadd.f32 0.0, %v2915
        %v2917 = vpop.f32.mrb[0].mxu0
        %2918 = vmatprep.mubr.bf16.mxu0 0
        %2919 = vmatmul.mubr.bf16.gmra.mrb[0].mxu0 %v2804
        %v2920 = vpop.f32.mrb[0].mxu0
        %v2921 = vadd.f32 0.0, %v2920
        %v2922 = vpop.f32.mrb[0].mxu0
        %v2923 = vpop.f32.mrb[0].mxu0
        %v2924 = vadd.f32 0.0, %v2923
        %v2925 = vpop.f32.mrb[0].mxu0
        %2926 = vmatprep.mubr.bf16.mxu0 0
        %2927 = vmatmul.mubr.bf16.gmra.mrb[0].mxu0 %v2807
        %v2928 = vpop.f32.mrb[0].mxu0
        %v2929 = vadd.f32 0.0, %v2928
        %v2930 = vpop.f32.mrb[0].mxu0
        %v2931 = vpop.f32.mrb[0].mxu0
        %v2932 = vadd.f32 0.0, %v2931
        %v2933 = vpop.f32.mrb[0].mxu0
        %2934 = vmatprep.mubr.bf16.mxu0 0
        %2935 = vmatmul.mubr.bf16.gmra.mrb[0].mxu0 %v2810
        %v2936 = vpop.f32.mrb[0].mxu0
        %v2937 = vadd.f32 0.0, %v2936
        %v2938 = vpop.f32.mrb[0].mxu0
        %v2939 = vpop.f32.mrb[0].mxu0
        %v2940 = vadd.f32 0.0, %v2939
        %v2941 = vpop.f32.mrb[0].mxu0
        %2942 = vmatprep.mubr.bf16.mxu0 0
        %2943 = vmatmul.mubr.bf16.gmra.mrb[0].mxu0 %v2813
        %v2944 = vpop.f32.mrb[0].mxu0
        %v2945 = vadd.f32 0.0, %v2944
        %v2946 = vpop.f32.mrb[0].mxu0
        %v2947 = vpop.f32.mrb[0].mxu0
        %v2948 = vadd.f32 0.0, %v2947
        %v2949 = vpop.f32.mrb[0].mxu0
        %2950 = vmatprep.mubr.bf16.mxu0 0
        %2951 = vmatmul.mubr.bf16.gmra.mrb[0].mxu0 %v2816
        %v2952 = vpop.f32.mrb[0].mxu0
        %v2953 = vadd.f32 0.0, %v2952
        %v2954 = vpop.f32.mrb[0].mxu0
        %v2955 = vpop.f32.mrb[0].mxu0
        %v2956 = vadd.f32 0.0, %v2955
        %v2957 = vpop.f32.mrb[0].mxu0
        %2958 = vmatprep.mubr.bf16.mxu0 0
        %2959 = vmatmul.mubr.bf16.gmra.mrb[0].mxu0 %v2819
        %v2960 = vpop.f32.mrb[0].mxu0
        %v2961 = vadd.f32 0.0, %v2960
        %v2962 = vpop.f32.mrb[0].mxu0
        %v2963 = vpop.f32.mrb[0].mxu0
        %v2964 = vadd.f32 0.0, %v2963
        %v2965 = vpop.f32.mrb[0].mxu0
        %2966 = vmatprep.mubr.bf16.mxu0 0
        %2967 = vmatmul.mubr.bf16.gmra.mrb[0].mxu0 %v2822
        %v2968 = vpop.f32.mrb[0].mxu0
        %v2969 = vadd.f32 0.0, %v2968
        %v2970 = vpop.f32.mrb[0].mxu0
        %v2971 = vpop.f32.mrb[0].mxu0
        %v2972 = vadd.f32 0.0, %v2971
        %v2973 = vpop.f32.mrb[0].mxu0
        %2974 = vmatprep.mubr.bf16.mxu0 0
        %2975 = vmatmul.mubr.bf16.gmra.mrb[0].mxu0 %v2825
        %v2976 = vpop.f32.mrb[0].mxu0
        %v2977 = vadd.f32 0.0, %v2976
        %v2978 = vpop.f32.mrb[0].mxu0
        %v2979 = vpop.f32.mrb[0].mxu0
        %v2980 = vadd.f32 0.0, %v2979
        %v2981 = vpop.f32.mrb[0].mxu0
        %2982 = vmatprep.mubr.bf16.mxu0 0
        %2983 = vmatmul.mubr.bf16.gmra.mrb[0].mxu0 %v2828
        %v2984 = vpop.f32.mrb[0].mxu0
        %v2985 = vadd.f32 0.0, %v2984
        %v2986 = vpop.f32.mrb[0].mxu0
        %v2987 = vpop.f32.mrb[0].mxu0
        %v2988 = vadd.f32 0.0, %v2987
        %v2989 = vpop.f32.mrb[0].mxu0
        %2990 = vdwg.mxu0
        %v2991 = vadd.f32 %v2684, %v2865
        %v2992 = vadd.f32 %v2685, %v2868
        %v2993 = vadd.f32 %v2686, %v2873
        %v2994 = vadd.f32 %v2687, %v2876
        %v2995 = vadd.f32 %v2688, %v2881
        %v2996 = vadd.f32 %v2689, %v2884
        %v2997 = vadd.f32 %v2690, %v2889
        %v2998 = vadd.f32 %v2691, %v2892
        %v2999 = vadd.f32 %v2692, %v2897
        %v3000 = vadd.f32 %v2693, %v2900
        %v3001 = vadd.f32 %v2694, %v2905
        %v3002 = vadd.f32 %v2695, %v2908
        %v3003 = vadd.f32 %v2696, %v2913
        %v3004 = vadd.f32 %v2697, %v2916
        %v3005 = vadd.f32 %v2698, %v2921
        %v3006 = vadd.f32 %v2699, %v2924
        %v3007 = vadd.f32 %v2700, %v2929
        %v3008 = vadd.f32 %v2701, %v2932
        %v3009 = vadd.f32 %v2702, %v2937
        %v3010 = vadd.f32 %v2703, %v2940
        %v3011 = vadd.f32 %v2704, %v2945
        %v3012 = vadd.f32 %v2705, %v2948
        %v3013 = vadd.f32 %v2706, %v2953
        %v3014 = vadd.f32 %v2707, %v2956
        %v3015 = vadd.f32 %v2708, %v2961
        %v3016 = vadd.f32 %v2709, %v2964
        %v3017 = vadd.f32 %v2710, %v2969
        %v3018 = vadd.f32 %v2711, %v2972
        %v3019 = vadd.f32 %v2712, %v2977
        %v3020 = vadd.f32 %v2713, %v2980
        %v3021 = vadd.f32 %v2714, %v2985
        %v3022 = vadd.f32 %v2715, %v2988
        %v3023 = vld [vmem:[%s2716 + $0x1] sm:$0xff]
        %v3024 = vld [vmem:[%s2716 + $0x9] sm:$0xff]
        %v3025 = vld [vmem:[%s2716 + $0x19] sm:$0xff]
        %v3026 = vld [vmem:[%s2716 + $0x21] sm:$0xff]
        %v3027 = vld [vmem:[%s2716 + $0x31] sm:$0xff]
        %v3028 = vld [vmem:[%s2716 + $0x39] sm:$0xff]
        %v3029 = vld [vmem:[%s2716 + $0x49] sm:$0xff]
        %v3030 = vld [vmem:[%s2716 + $0x51] sm:$0xff]
        %v3031 = vld [vmem:[%s2716 + $0x61] sm:$0xff]
        %v3032 = vld [vmem:[%s2716 + $0x69] sm:$0xff]
        %v3033 = vld [vmem:[%s2716 + $0x79] sm:$0xff]
        %v3034 = vld [vmem:[%s2716 + $0x81] sm:$0xff]
        %v3035 = vld [vmem:[%s2716 + $0x91] sm:$0xff]
        %v3036 = vld [vmem:[%s2716 + $0x99] sm:$0xff]
        %v3037 = vld [vmem:[%s2716 + $0xa9] sm:$0xff]
        %v3038 = vld [vmem:[%s2716 + $0xb1] sm:$0xff]
        %v3039 = vld [vmem:[%s2716 + $0xc1] sm:$0xff]
        %v3040 = vld [vmem:[%s2716 + $0xc9] sm:$0xff]
        %v3041 = vld [vmem:[%s2716 + $0xd9] sm:$0xff]
        %v3042 = vld [vmem:[%s2716 + $0xe1] sm:$0xff]
        %v3043 = vld [vmem:[%s2716 + $0xf1] sm:$0xff]
        %v3044 = vld [vmem:[%s2716 + $0xf9] sm:$0xff]
        %v3045 = vld [vmem:[%s2716 + $0x109] sm:$0xff]
        %v3046 = vld [vmem:[%s2716 + $0x111] sm:$0xff]
        %v3047 = vld [vmem:[%s2716 + $0x121] sm:$0xff]
        %v3048 = vld [vmem:[%s2716 + $0x129] sm:$0xff]
        %v3049 = vld [vmem:[%s2716 + $0x139] sm:$0xff]
        %v3050 = vld [vmem:[%s2716 + $0x141] sm:$0xff]
        %v3051 = vld [vmem:[%s2716 + $0x151] sm:$0xff]
        %v3052 = vld [vmem:[%s2716 + $0x159] sm:$0xff]
        %v3053 = vld [vmem:[%s2716 + $0x169] sm:$0xff]
        %v3054 = vld [vmem:[%s2716 + $0x171] sm:$0xff]
        %v3055 = vpack.c.bf16 %v3024, %v3023
        %v3056 = vpack.c.bf16 %v3026, %v3025
        %v3057 = vpack.c.bf16 %v3028, %v3027
        %v3058 = vpack.c.bf16 %v3030, %v3029
        %v3059 = vpack.c.bf16 %v3032, %v3031
        %v3060 = vpack.c.bf16 %v3034, %v3033
        %v3061 = vpack.c.bf16 %v3036, %v3035
        %v3062 = vpack.c.bf16 %v3038, %v3037
        %v3063 = vpack.c.bf16 %v3040, %v3039
        %v3064 = vpack.c.bf16 %v3042, %v3041
        %v3065 = vpack.c.bf16 %v3044, %v3043
        %v3066 = vpack.c.bf16 %v3046, %v3045
        %v3067 = vpack.c.bf16 %v3048, %v3047
        %v3068 = vpack.c.bf16 %v3050, %v3049
        %v3069 = vpack.c.bf16 %v3052, %v3051
        %v3070 = vpack.c.bf16 %v3054, %v3053
        %s3071 = scalar_lea.vmem %s4, 112
        %v3072 = vld [vmem:[%s3071] sm:$0xf]
        %v3073 = vld [vmem:[%s3071 + $0x4] sm:$0xf]
        %v3074 = vld [vmem:[%s3071 + $0x8] sm:$0xf]
        %v3075 = vld [vmem:[%s3071 + $0xc] sm:$0xf]
        %v3080 = vunpack.c.l.b16 %v3072
        %v3081 = vunpack.c.l.b16 %v3073
        %v3082 = vunpack.c.l.b16 %v3074
        %v3083 = vunpack.c.l.b16 %v3075
        %v3084 = vpack.c.b16 %v3081, %v3080
        %v3085 = vpack.c.b16 %v3083, %v3082
        %v3089 = vsel %vm857, %v3055, 0
        %v3092 = vsel %vm857, %v3056, 0
        %v3095 = vsel %vm857, %v3057, 0
        %v3098 = vsel %vm857, %v3058, 0
        %v3101 = vsel %vm857, %v3059, 0
        %v3104 = vsel %vm857, %v3060, 0
        %v3107 = vsel %vm857, %v3061, 0
        %v3110 = vsel %vm857, %v3062, 0
        %v3113 = vsel %vm857, %v3063, 0
        %v3116 = vsel %vm857, %v3064, 0
        %v3119 = vsel %vm857, %v3065, 0
        %v3122 = vsel %vm857, %v3066, 0
        %v3125 = vsel %vm857, %v3067, 0
        %v3128 = vsel %vm857, %v3068, 0
        %v3131 = vsel %vm857, %v3069, 0
        %v3134 = vsel %vm857, %v3070, 0
        %3136 = vmatprep.subr.bf16.mxu0 0
        %3137 = vmatpush1.bf16.msra.mxu0 %v3084
        %3138 = vmatprep.subr.bf16.mxu0 0
        %3139 = vmatpush1.bf16.msra.mxu0 %v3085
        %3140 = vmatprep.subr.bf16.mxu0 0
        %3141 = vmatpush1.bf16.msra.mxu0 0
        %3142 = vmatprep.subr.bf16.mxu0 0
        %3143 = vmatpush1.bf16.msra.mxu0 0
        %3144 = vmatprep.subr.bf16.mxu0 0
        %3145 = vmatpush1.bf16.msra.mxu0 0
        %3146 = vmatprep.subr.bf16.mxu0 0
        %3147 = vmatpush1.bf16.msra.mxu0 0
        %3148 = vmatprep.subr.bf16.mxu0 0
        %3149 = vmatpush1.bf16.msra.mxu0 0
        %3150 = vmatprep.subr.bf16.mxu0 0
        %3151 = vmatpush1.bf16.msra.mxu0 0
        %3152 = vmatprep.subr.bf16.mxu0 0
        %3153 = vmatpush1.bf16.msra.mxu0 0
        %3154 = vmatprep.subr.bf16.mxu0 0
        %3155 = vmatpush1.bf16.msra.mxu0 0
        %3156 = vmatprep.subr.bf16.mxu0 0
        %3157 = vmatpush1.bf16.msra.mxu0 0
        %3158 = vmatprep.subr.bf16.mxu0 0
        %3159 = vmatpush1.bf16.msra.mxu0 0
        %3160 = vmatprep.subr.bf16.mxu0 0
        %3161 = vmatpush1.bf16.msra.mxu0 0
        %3162 = vmatprep.subr.bf16.mxu0 0
        %3163 = vmatpush1.bf16.msra.mxu0 0
        %3164 = vmatprep.subr.bf16.mxu0 0
        %3165 = vmatpush1.bf16.msra.mxu0 0
        %3166 = vmatprep.subr.bf16.mxu0 0
        %3167 = vmatpush1.bf16.msra.mxu0 0
        %3168 = vmatprep.mubr.bf16.mxu0 0
        %3169 = vmatmul.mubr.bf16.gmra.mrb[0].mxu0 %v3089
        %v3170 = vpop.f32.mrb[0].mxu0
        %v3171 = vadd.f32 0.0, %v3170
        %v3172 = vpop.f32.mrb[0].mxu0
        %v3173 = vpop.f32.mrb[0].mxu0
        %v3174 = vadd.f32 0.0, %v3173
        %v3175 = vpop.f32.mrb[0].mxu0
        %3176 = vmatprep.mubr.bf16.mxu0 0
        %3177 = vmatmul.mubr.bf16.gmra.mrb[0].mxu0 %v3092
        %v3178 = vpop.f32.mrb[0].mxu0
        %v3179 = vadd.f32 0.0, %v3178
        %v3180 = vpop.f32.mrb[0].mxu0
        %v3181 = vpop.f32.mrb[0].mxu0
        %v3182 = vadd.f32 0.0, %v3181
        %v3183 = vpop.f32.mrb[0].mxu0
        %3184 = vmatprep.mubr.bf16.mxu0 0
        %3185 = vmatmul.mubr.bf16.gmra.mrb[0].mxu0 %v3095
        %v3186 = vpop.f32.mrb[0].mxu0
        %v3187 = vadd.f32 0.0, %v3186
        %v3188 = vpop.f32.mrb[0].mxu0
        %v3189 = vpop.f32.mrb[0].mxu0
        %v3190 = vadd.f32 0.0, %v3189
        %v3191 = vpop.f32.mrb[0].mxu0
        %3192 = vmatprep.mubr.bf16.mxu0 0
        %3193 = vmatmul.mubr.bf16.gmra.mrb[0].mxu0 %v3098
        %v3194 = vpop.f32.mrb[0].mxu0
        %v3195 = vadd.f32 0.0, %v3194
        %v3196 = vpop.f32.mrb[0].mxu0
        %v3197 = vpop.f32.mrb[0].mxu0
        %v3198 = vadd.f32 0.0, %v3197
        %v3199 = vpop.f32.mrb[0].mxu0
        %3200 = vmatprep.mubr.bf16.mxu0 0
        %3201 = vmatmul.mubr.bf16.gmra.mrb[0].mxu0 %v3101
        %v3202 = vpop.f32.mrb[0].mxu0
        %v3203 = vadd.f32 0.0, %v3202
        %v3204 = vpop.f32.mrb[0].mxu0
        %v3205 = vpop.f32.mrb[0].mxu0
        %v3206 = vadd.f32 0.0, %v3205
        %v3207 = vpop.f32.mrb[0].mxu0
        %3208 = vmatprep.mubr.bf16.mxu0 0
        %3209 = vmatmul.mubr.bf16.gmra.mrb[0].mxu0 %v3104
        %v3210 = vpop.f32.mrb[0].mxu0
        %v3211 = vadd.f32 0.0, %v3210
        %v3212 = vpop.f32.mrb[0].mxu0
        %v3213 = vpop.f32.mrb[0].mxu0
        %v3214 = vadd.f32 0.0, %v3213
        %v3215 = vpop.f32.mrb[0].mxu0
        %3216 = vmatprep.mubr.bf16.mxu0 0
        %3217 = vmatmul.mubr.bf16.gmra.mrb[0].mxu0 %v3107
        %v3218 = vpop.f32.mrb[0].mxu0
        %v3219 = vadd.f32 0.0, %v3218
        %v3220 = vpop.f32.mrb[0].mxu0
        %v3221 = vpop.f32.mrb[0].mxu0
        %v3222 = vadd.f32 0.0, %v3221
        %v3223 = vpop.f32.mrb[0].mxu0
        %3224 = vmatprep.mubr.bf16.mxu0 0
        %3225 = vmatmul.mubr.bf16.gmra.mrb[0].mxu0 %v3110
        %v3226 = vpop.f32.mrb[0].mxu0
        %v3227 = vadd.f32 0.0, %v3226
        %v3228 = vpop.f32.mrb[0].mxu0
        %v3229 = vpop.f32.mrb[0].mxu0
        %v3230 = vadd.f32 0.0, %v3229
        %v3231 = vpop.f32.mrb[0].mxu0
        %3232 = vmatprep.mubr.bf16.mxu0 0
        %3233 = vmatmul.mubr.bf16.gmra.mrb[0].mxu0 %v3113
        %v3234 = vpop.f32.mrb[0].mxu0
        %v3235 = vadd.f32 0.0, %v3234
        %v3236 = vpop.f32.mrb[0].mxu0
        %v3237 = vpop.f32.mrb[0].mxu0
        %v3238 = vadd.f32 0.0, %v3237
        %v3239 = vpop.f32.mrb[0].mxu0
        %3240 = vmatprep.mubr.bf16.mxu0 0
        %3241 = vmatmul.mubr.bf16.gmra.mrb[0].mxu0 %v3116
        %v3242 = vpop.f32.mrb[0].mxu0
        %v3243 = vadd.f32 0.0, %v3242
        %v3244 = vpop.f32.mrb[0].mxu0
        %v3245 = vpop.f32.mrb[0].mxu0
        %v3246 = vadd.f32 0.0, %v3245
        %v3247 = vpop.f32.mrb[0].mxu0
        %3248 = vmatprep.mubr.bf16.mxu0 0
        %3249 = vmatmul.mubr.bf16.gmra.mrb[0].mxu0 %v3119
        %v3250 = vpop.f32.mrb[0].mxu0
        %v3251 = vadd.f32 0.0, %v3250
        %v3252 = vpop.f32.mrb[0].mxu0
        %v3253 = vpop.f32.mrb[0].mxu0
        %v3254 = vadd.f32 0.0, %v3253
        %v3255 = vpop.f32.mrb[0].mxu0
        %3256 = vmatprep.mubr.bf16.mxu0 0
        %3257 = vmatmul.mubr.bf16.gmra.mrb[0].mxu0 %v3122
        %v3258 = vpop.f32.mrb[0].mxu0
        %v3259 = vadd.f32 0.0, %v3258
        %v3260 = vpop.f32.mrb[0].mxu0
        %v3261 = vpop.f32.mrb[0].mxu0
        %v3262 = vadd.f32 0.0, %v3261
        %v3263 = vpop.f32.mrb[0].mxu0
        %3264 = vmatprep.mubr.bf16.mxu0 0
        %3265 = vmatmul.mubr.bf16.gmra.mrb[0].mxu0 %v3125
        %v3266 = vpop.f32.mrb[0].mxu0
        %v3267 = vadd.f32 0.0, %v3266
        %v3268 = vpop.f32.mrb[0].mxu0
        %v3269 = vpop.f32.mrb[0].mxu0
        %v3270 = vadd.f32 0.0, %v3269
        %v3271 = vpop.f32.mrb[0].mxu0
        %3272 = vmatprep.mubr.bf16.mxu0 0
        %3273 = vmatmul.mubr.bf16.gmra.mrb[0].mxu0 %v3128
        %v3274 = vpop.f32.mrb[0].mxu0
        %v3275 = vadd.f32 0.0, %v3274
        %v3276 = vpop.f32.mrb[0].mxu0
        %v3277 = vpop.f32.mrb[0].mxu0
        %v3278 = vadd.f32 0.0, %v3277
        %v3279 = vpop.f32.mrb[0].mxu0
        %3280 = vmatprep.mubr.bf16.mxu0 0
        %3281 = vmatmul.mubr.bf16.gmra.mrb[0].mxu0 %v3131
        %v3282 = vpop.f32.mrb[0].mxu0
        %v3283 = vadd.f32 0.0, %v3282
        %v3284 = vpop.f32.mrb[0].mxu0
        %v3285 = vpop.f32.mrb[0].mxu0
        %v3286 = vadd.f32 0.0, %v3285
        %v3287 = vpop.f32.mrb[0].mxu0
        %3288 = vmatprep.mubr.bf16.mxu0 0
        %3289 = vmatmul.mubr.bf16.gmra.mrb[0].mxu0 %v3134
        %v3290 = vpop.f32.mrb[0].mxu0
        %v3291 = vadd.f32 0.0, %v3290
        %v3292 = vpop.f32.mrb[0].mxu0
        %v3293 = vpop.f32.mrb[0].mxu0
        %v3294 = vadd.f32 0.0, %v3293
        %v3295 = vpop.f32.mrb[0].mxu0
        %3296 = vdwg.mxu0
        %v3297 = vadd.f32 %v2991, %v3171
        %v3298 = vadd.f32 %v2992, %v3174
        %v3299 = vadd.f32 %v2993, %v3179
        %v3300 = vadd.f32 %v2994, %v3182
        %v3301 = vadd.f32 %v2995, %v3187
        %v3302 = vadd.f32 %v2996, %v3190
        %v3303 = vadd.f32 %v2997, %v3195
        %v3304 = vadd.f32 %v2998, %v3198
        %v3305 = vadd.f32 %v2999, %v3203
        %v3306 = vadd.f32 %v3000, %v3206
        %v3307 = vadd.f32 %v3001, %v3211
        %v3308 = vadd.f32 %v3002, %v3214
        %v3309 = vadd.f32 %v3003, %v3219
        %v3310 = vadd.f32 %v3004, %v3222
        %v3311 = vadd.f32 %v3005, %v3227
        %v3312 = vadd.f32 %v3006, %v3230
        %v3313 = vadd.f32 %v3007, %v3235
        %v3314 = vadd.f32 %v3008, %v3238
        %v3315 = vadd.f32 %v3009, %v3243
        %v3316 = vadd.f32 %v3010, %v3246
        %v3317 = vadd.f32 %v3011, %v3251
        %v3318 = vadd.f32 %v3012, %v3254
        %v3319 = vadd.f32 %v3013, %v3259
        %v3320 = vadd.f32 %v3014, %v3262
        %v3321 = vadd.f32 %v3015, %v3267
        %v3322 = vadd.f32 %v3016, %v3270
        %v3323 = vadd.f32 %v3017, %v3275
        %v3324 = vadd.f32 %v3018, %v3278
        %v3325 = vadd.f32 %v3019, %v3283
        %v3326 = vadd.f32 %v3020, %v3286
        %v3327 = vadd.f32 %v3021, %v3291
        %v3328 = vadd.f32 %v3022, %v3294
        %v3329 = vld [vmem:[%s2716 + $0x2] sm:$0xff]
        %v3330 = vld [vmem:[%s2716 + $0xa] sm:$0xff]
        %v3331 = vld [vmem:[%s2716 + $0x1a] sm:$0xff]
        %v3332 = vld [vmem:[%s2716 + $0x22] sm:$0xff]
        %v3333 = vld [vmem:[%s2716 + $0x32] sm:$0xff]
        %v3334 = vld [vmem:[%s2716 + $0x3a] sm:$0xff]
        %v3335 = vld [vmem:[%s2716 + $0x4a] sm:$0xff]
        %v3336 = vld [vmem:[%s2716 + $0x52] sm:$0xff]
        %v3337 = vld [vmem:[%s2716 + $0x62] sm:$0xff]
        %v3338 = vld [vmem:[%s2716 + $0x6a] sm:$0xff]
        %v3339 = vld [vmem:[%s2716 + $0x7a] sm:$0xff]
        %v3340 = vld [vmem:[%s2716 + $0x82] sm:$0xff]
        %v3341 = vld [vmem:[%s2716 + $0x92] sm:$0xff]
        %v3342 = vld [vmem:[%s2716 + $0x9a] sm:$0xff]
        %v3343 = vld [vmem:[%s2716 + $0xaa] sm:$0xff]
        %v3344 = vld [vmem:[%s2716 + $0xb2] sm:$0xff]
        %v3345 = vld [vmem:[%s2716 + $0xc2] sm:$0xff]
        %v3346 = vld [vmem:[%s2716 + $0xca] sm:$0xff]
        %v3347 = vld [vmem:[%s2716 + $0xda] sm:$0xff]
        %v3348 = vld [vmem:[%s2716 + $0xe2] sm:$0xff]
        %v3349 = vld [vmem:[%s2716 + $0xf2] sm:$0xff]
        %v3350 = vld [vmem:[%s2716 + $0xfa] sm:$0xff]
        %v3351 = vld [vmem:[%s2716 + $0x10a] sm:$0xff]
        %v3352 = vld [vmem:[%s2716 + $0x112] sm:$0xff]
        %v3353 = vld [vmem:[%s2716 + $0x122] sm:$0xff]
        %v3354 = vld [vmem:[%s2716 + $0x12a] sm:$0xff]
        %v3355 = vld [vmem:[%s2716 + $0x13a] sm:$0xff]
        %v3356 = vld [vmem:[%s2716 + $0x142] sm:$0xff]
        %v3357 = vld [vmem:[%s2716 + $0x152] sm:$0xff]
        %v3358 = vld [vmem:[%s2716 + $0x15a] sm:$0xff]
        %v3359 = vld [vmem:[%s2716 + $0x16a] sm:$0xff]
        %v3360 = vld [vmem:[%s2716 + $0x172] sm:$0xff]
        %v3361 = vpack.c.bf16 %v3330, %v3329
        %v3362 = vpack.c.bf16 %v3332, %v3331
        %v3363 = vpack.c.bf16 %v3334, %v3333
        %v3364 = vpack.c.bf16 %v3336, %v3335
        %v3365 = vpack.c.bf16 %v3338, %v3337
        %v3366 = vpack.c.bf16 %v3340, %v3339
        %v3367 = vpack.c.bf16 %v3342, %v3341
        %v3368 = vpack.c.bf16 %v3344, %v3343
        %v3369 = vpack.c.bf16 %v3346, %v3345
        %v3370 = vpack.c.bf16 %v3348, %v3347
        %v3371 = vpack.c.bf16 %v3350, %v3349
        %v3372 = vpack.c.bf16 %v3352, %v3351
        %v3373 = vpack.c.bf16 %v3354, %v3353
        %v3374 = vpack.c.bf16 %v3356, %v3355
        %v3375 = vpack.c.bf16 %v3358, %v3357
        %v3376 = vpack.c.bf16 %v3360, %v3359
        %s3377 = scalar_lea.vmem %s4, 128
        %v3378 = vld [vmem:[%s3377] sm:$0xf]
        %v3379 = vld [vmem:[%s3377 + $0x4] sm:$0xf]
        %v3380 = vld [vmem:[%s3377 + $0x8] sm:$0xf]
        %v3381 = vld [vmem:[%s3377 + $0xc] sm:$0xf]
        %v3386 = vunpack.c.l.b16 %v3378
        %v3387 = vunpack.c.l.b16 %v3379
        %v3388 = vunpack.c.l.b16 %v3380
        %v3389 = vunpack.c.l.b16 %v3381
        %v3390 = vpack.c.b16 %v3387, %v3386
        %v3391 = vpack.c.b16 %v3389, %v3388
        %v3395 = vsel %vm857, %v3361, 0
        %v3398 = vsel %vm857, %v3362, 0
        %v3401 = vsel %vm857, %v3363, 0
        %v3404 = vsel %vm857, %v3364, 0
        %v3407 = vsel %vm857, %v3365, 0
        %v3410 = vsel %vm857, %v3366, 0
        %v3413 = vsel %vm857, %v3367, 0
        %v3416 = vsel %vm857, %v3368, 0
        %v3419 = vsel %vm857, %v3369, 0
        %v3422 = vsel %vm857, %v3370, 0
        %v3425 = vsel %vm857, %v3371, 0
        %v3428 = vsel %vm857, %v3372, 0
        %v3431 = vsel %vm857, %v3373, 0
        %v3434 = vsel %vm857, %v3374, 0
        %v3437 = vsel %vm857, %v3375, 0
        %v3440 = vsel %vm857, %v3376, 0
        %3442 = vmatprep.subr.bf16.mxu0 0
        %3443 = vmatpush1.bf16.msra.mxu0 %v3390
        %3444 = vmatprep.subr.bf16.mxu0 0
        %3445 = vmatpush1.bf16.msra.mxu0 %v3391
        %3446 = vmatprep.subr.bf16.mxu0 0
        %3447 = vmatpush1.bf16.msra.mxu0 0
        %3448 = vmatprep.subr.bf16.mxu0 0
        %3449 = vmatpush1.bf16.msra.mxu0 0
        %3450 = vmatprep.subr.bf16.mxu0 0
        %3451 = vmatpush1.bf16.msra.mxu0 0
        %3452 = vmatprep.subr.bf16.mxu0 0
        %3453 = vmatpush1.bf16.msra.mxu0 0
        %3454 = vmatprep.subr.bf16.mxu0 0
        %3455 = vmatpush1.bf16.msra.mxu0 0
        %3456 = vmatprep.subr.bf16.mxu0 0
        %3457 = vmatpush1.bf16.msra.mxu0 0
        %3458 = vmatprep.subr.bf16.mxu0 0
        %3459 = vmatpush1.bf16.msra.mxu0 0
        %3460 = vmatprep.subr.bf16.mxu0 0
        %3461 = vmatpush1.bf16.msra.mxu0 0
        %3462 = vmatprep.subr.bf16.mxu0 0
        %3463 = vmatpush1.bf16.msra.mxu0 0
        %3464 = vmatprep.subr.bf16.mxu0 0
        %3465 = vmatpush1.bf16.msra.mxu0 0
        %3466 = vmatprep.subr.bf16.mxu0 0
        %3467 = vmatpush1.bf16.msra.mxu0 0
        %3468 = vmatprep.subr.bf16.mxu0 0
        %3469 = vmatpush1.bf16.msra.mxu0 0
        %3470 = vmatprep.subr.bf16.mxu0 0
        %3471 = vmatpush1.bf16.msra.mxu0 0
        %3472 = vmatprep.subr.bf16.mxu0 0
        %3473 = vmatpush1.bf16.msra.mxu0 0
        %3474 = vmatprep.mubr.bf16.mxu0 0
        %3475 = vmatmul.mubr.bf16.gmra.mrb[0].mxu0 %v3395
        %v3476 = vpop.f32.mrb[0].mxu0
        %v3477 = vadd.f32 0.0, %v3476
        %v3478 = vpop.f32.mrb[0].mxu0
        %v3479 = vpop.f32.mrb[0].mxu0
        %v3480 = vadd.f32 0.0, %v3479
        %v3481 = vpop.f32.mrb[0].mxu0
        %3482 = vmatprep.mubr.bf16.mxu0 0
        %3483 = vmatmul.mubr.bf16.gmra.mrb[0].mxu0 %v3398
        %v3484 = vpop.f32.mrb[0].mxu0
        %v3485 = vadd.f32 0.0, %v3484
        %v3486 = vpop.f32.mrb[0].mxu0
        %v3487 = vpop.f32.mrb[0].mxu0
        %v3488 = vadd.f32 0.0, %v3487
        %v3489 = vpop.f32.mrb[0].mxu0
        %3490 = vmatprep.mubr.bf16.mxu0 0
        %3491 = vmatmul.mubr.bf16.gmra.mrb[0].mxu0 %v3401
        %v3492 = vpop.f32.mrb[0].mxu0
        %v3493 = vadd.f32 0.0, %v3492
        %v3494 = vpop.f32.mrb[0].mxu0
        %v3495 = vpop.f32.mrb[0].mxu0
        %v3496 = vadd.f32 0.0, %v3495
        %v3497 = vpop.f32.mrb[0].mxu0
        %3498 = vmatprep.mubr.bf16.mxu0 0
        %3499 = vmatmul.mubr.bf16.gmra.mrb[0].mxu0 %v3404
        %v3500 = vpop.f32.mrb[0].mxu0
        %v3501 = vadd.f32 0.0, %v3500
        %v3502 = vpop.f32.mrb[0].mxu0
        %v3503 = vpop.f32.mrb[0].mxu0
        %v3504 = vadd.f32 0.0, %v3503
        %v3505 = vpop.f32.mrb[0].mxu0
        %3506 = vmatprep.mubr.bf16.mxu0 0
        %3507 = vmatmul.mubr.bf16.gmra.mrb[0].mxu0 %v3407
        %v3508 = vpop.f32.mrb[0].mxu0
        %v3509 = vadd.f32 0.0, %v3508
        %v3510 = vpop.f32.mrb[0].mxu0
        %v3511 = vpop.f32.mrb[0].mxu0
        %v3512 = vadd.f32 0.0, %v3511
        %v3513 = vpop.f32.mrb[0].mxu0
        %3514 = vmatprep.mubr.bf16.mxu0 0
        %3515 = vmatmul.mubr.bf16.gmra.mrb[0].mxu0 %v3410
        %v3516 = vpop.f32.mrb[0].mxu0
        %v3517 = vadd.f32 0.0, %v3516
        %v3518 = vpop.f32.mrb[0].mxu0
        %v3519 = vpop.f32.mrb[0].mxu0
        %v3520 = vadd.f32 0.0, %v3519
        %v3521 = vpop.f32.mrb[0].mxu0
        %3522 = vmatprep.mubr.bf16.mxu0 0
        %3523 = vmatmul.mubr.bf16.gmra.mrb[0].mxu0 %v3413
        %v3524 = vpop.f32.mrb[0].mxu0
        %v3525 = vadd.f32 0.0, %v3524
        %v3526 = vpop.f32.mrb[0].mxu0
        %v3527 = vpop.f32.mrb[0].mxu0
        %v3528 = vadd.f32 0.0, %v3527
        %v3529 = vpop.f32.mrb[0].mxu0
        %3530 = vmatprep.mubr.bf16.mxu0 0
        %3531 = vmatmul.mubr.bf16.gmra.mrb[0].mxu0 %v3416
        %v3532 = vpop.f32.mrb[0].mxu0
        %v3533 = vadd.f32 0.0, %v3532
        %v3534 = vpop.f32.mrb[0].mxu0
        %v3535 = vpop.f32.mrb[0].mxu0
        %v3536 = vadd.f32 0.0, %v3535
        %v3537 = vpop.f32.mrb[0].mxu0
        %3538 = vmatprep.mubr.bf16.mxu0 0
        %3539 = vmatmul.mubr.bf16.gmra.mrb[0].mxu0 %v3419
        %v3540 = vpop.f32.mrb[0].mxu0
        %v3541 = vadd.f32 0.0, %v3540
        %v3542 = vpop.f32.mrb[0].mxu0
        %v3543 = vpop.f32.mrb[0].mxu0
        %v3544 = vadd.f32 0.0, %v3543
        %v3545 = vpop.f32.mrb[0].mxu0
        %3546 = vmatprep.mubr.bf16.mxu0 0
        %3547 = vmatmul.mubr.bf16.gmra.mrb[0].mxu0 %v3422
        %v3548 = vpop.f32.mrb[0].mxu0
        %v3549 = vadd.f32 0.0, %v3548
        %v3550 = vpop.f32.mrb[0].mxu0
        %v3551 = vpop.f32.mrb[0].mxu0
        %v3552 = vadd.f32 0.0, %v3551
        %v3553 = vpop.f32.mrb[0].mxu0
        %3554 = vmatprep.mubr.bf16.mxu0 0
        %3555 = vmatmul.mubr.bf16.gmra.mrb[0].mxu0 %v3425
        %v3556 = vpop.f32.mrb[0].mxu0
        %v3557 = vadd.f32 0.0, %v3556
        %v3558 = vpop.f32.mrb[0].mxu0
        %v3559 = vpop.f32.mrb[0].mxu0
        %v3560 = vadd.f32 0.0, %v3559
        %v3561 = vpop.f32.mrb[0].mxu0
        %3562 = vmatprep.mubr.bf16.mxu0 0
        %3563 = vmatmul.mubr.bf16.gmra.mrb[0].mxu0 %v3428
        %v3564 = vpop.f32.mrb[0].mxu0
        %v3565 = vadd.f32 0.0, %v3564
        %v3566 = vpop.f32.mrb[0].mxu0
        %v3567 = vpop.f32.mrb[0].mxu0
        %v3568 = vadd.f32 0.0, %v3567
        %v3569 = vpop.f32.mrb[0].mxu0
        %3570 = vmatprep.mubr.bf16.mxu0 0
        %3571 = vmatmul.mubr.bf16.gmra.mrb[0].mxu0 %v3431
        %v3572 = vpop.f32.mrb[0].mxu0
        %v3573 = vadd.f32 0.0, %v3572
        %v3574 = vpop.f32.mrb[0].mxu0
        %v3575 = vpop.f32.mrb[0].mxu0
        %v3576 = vadd.f32 0.0, %v3575
        %v3577 = vpop.f32.mrb[0].mxu0
        %3578 = vmatprep.mubr.bf16.mxu0 0
        %3579 = vmatmul.mubr.bf16.gmra.mrb[0].mxu0 %v3434
        %v3580 = vpop.f32.mrb[0].mxu0
        %v3581 = vadd.f32 0.0, %v3580
        %v3582 = vpop.f32.mrb[0].mxu0
        %v3583 = vpop.f32.mrb[0].mxu0
        %v3584 = vadd.f32 0.0, %v3583
        %v3585 = vpop.f32.mrb[0].mxu0
        %3586 = vmatprep.mubr.bf16.mxu0 0
        %3587 = vmatmul.mubr.bf16.gmra.mrb[0].mxu0 %v3437
        %v3588 = vpop.f32.mrb[0].mxu0
        %v3589 = vadd.f32 0.0, %v3588
        %v3590 = vpop.f32.mrb[0].mxu0
        %v3591 = vpop.f32.mrb[0].mxu0
        %v3592 = vadd.f32 0.0, %v3591
        %v3593 = vpop.f32.mrb[0].mxu0
        %3594 = vmatprep.mubr.bf16.mxu0 0
        %3595 = vmatmul.mubr.bf16.gmra.mrb[0].mxu0 %v3440
        %v3596 = vpop.f32.mrb[0].mxu0
        %v3597 = vadd.f32 0.0, %v3596
        %v3598 = vpop.f32.mrb[0].mxu0
        %v3599 = vpop.f32.mrb[0].mxu0
        %v3600 = vadd.f32 0.0, %v3599
        %v3601 = vpop.f32.mrb[0].mxu0
        %3602 = vdwg.mxu0
        %v3603 = vadd.f32 %v3297, %v3477
        %v3604 = vadd.f32 %v3298, %v3480
        %v3605 = vadd.f32 %v3299, %v3485
        %v3606 = vadd.f32 %v3300, %v3488
        %v3607 = vadd.f32 %v3301, %v3493
        %v3608 = vadd.f32 %v3302, %v3496
        %v3609 = vadd.f32 %v3303, %v3501
        %v3610 = vadd.f32 %v3304, %v3504
        %v3611 = vadd.f32 %v3305, %v3509
        %v3612 = vadd.f32 %v3306, %v3512
        %v3613 = vadd.f32 %v3307, %v3517
        %v3614 = vadd.f32 %v3308, %v3520
        %v3615 = vadd.f32 %v3309, %v3525
        %v3616 = vadd.f32 %v3310, %v3528
        %v3617 = vadd.f32 %v3311, %v3533
        %v3618 = vadd.f32 %v3312, %v3536
        %v3619 = vadd.f32 %v3313, %v3541
        %v3620 = vadd.f32 %v3314, %v3544
        %v3621 = vadd.f32 %v3315, %v3549
        %v3622 = vadd.f32 %v3316, %v3552
        %v3623 = vadd.f32 %v3317, %v3557
        %v3624 = vadd.f32 %v3318, %v3560
        %v3625 = vadd.f32 %v3319, %v3565
        %v3626 = vadd.f32 %v3320, %v3568
        %v3627 = vadd.f32 %v3321, %v3573
        %v3628 = vadd.f32 %v3322, %v3576
        %v3629 = vadd.f32 %v3323, %v3581
        %v3630 = vadd.f32 %v3324, %v3584
        %v3631 = vadd.f32 %v3325, %v3589
        %v3632 = vadd.f32 %v3326, %v3592
        %v3633 = vadd.f32 %v3327, %v3597
        %v3634 = vadd.f32 %v3328, %v3600
        %v3635 = vld [vmem:[%s5] sm:$0x1]
        %v3637 = vlaneseq
        %v3638 = vshrl.u32 %v3637, 7
        %v3639 = vsub.s32 0, %v3638
        %v3640 = vrot.slane %v3635, %v3639
        %v3642 = vmul.f32 %v3603, %v3640
        %v3643 = vmul.f32 %v3604, %v3640
        %v3644 = vmul.f32 %v3605, %v3640
        %v3645 = vmul.f32 %v3606, %v3640
        %v3646 = vmul.f32 %v3607, %v3640
        %v3647 = vmul.f32 %v3608, %v3640
        %v3648 = vmul.f32 %v3609, %v3640
        %v3649 = vmul.f32 %v3610, %v3640
        %v3650 = vmul.f32 %v3611, %v3640
        %v3651 = vmul.f32 %v3612, %v3640
        %v3652 = vmul.f32 %v3613, %v3640
        %v3653 = vmul.f32 %v3614, %v3640
        %v3654 = vmul.f32 %v3615, %v3640
        %v3655 = vmul.f32 %v3616, %v3640
        %v3656 = vmul.f32 %v3617, %v3640
        %v3657 = vmul.f32 %v3618, %v3640
        %v3658 = vmul.f32 %v3619, %v3640
        %v3659 = vmul.f32 %v3620, %v3640
        %v3660 = vmul.f32 %v3621, %v3640
        %v3661 = vmul.f32 %v3622, %v3640
        %v3662 = vmul.f32 %v3623, %v3640
        %v3663 = vmul.f32 %v3624, %v3640
        %v3664 = vmul.f32 %v3625, %v3640
        %v3665 = vmul.f32 %v3626, %v3640
        %v3666 = vmul.f32 %v3627, %v3640
        %v3667 = vmul.f32 %v3628, %v3640
        %v3668 = vmul.f32 %v3629, %v3640
        %v3669 = vmul.f32 %v3630, %v3640
        %v3670 = vmul.f32 %v3631, %v3640
        %v3671 = vmul.f32 %v3632, %v3640
        %v3672 = vmul.f32 %v3633, %v3640
        %v3673 = vmul.f32 %v3634, %v3640
        %v3674 = vld [vmem:[%s6] sm:$0x1]
        %v3676 = vlaneseq
        %v3677 = vshrl.u32 %v3676, 7
        %v3678 = vsub.s32 0, %v3677
        %v3679 = vrot.slane %v3674, %v3678
        %v3681 = vadd.f32 %v3642, %v3679
        %v3682 = vadd.f32 %v3643, %v3679
        %v3683 = vadd.f32 %v3644, %v3679
        %v3684 = vadd.f32 %v3645, %v3679
        %v3685 = vadd.f32 %v3646, %v3679
        %v3686 = vadd.f32 %v3647, %v3679
        %v3687 = vadd.f32 %v3648, %v3679
        %v3688 = vadd.f32 %v3649, %v3679
        %v3689 = vadd.f32 %v3650, %v3679
        %v3690 = vadd.f32 %v3651, %v3679
        %v3691 = vadd.f32 %v3652, %v3679
        %v3692 = vadd.f32 %v3653, %v3679
        %v3693 = vadd.f32 %v3654, %v3679
        %v3694 = vadd.f32 %v3655, %v3679
        %v3695 = vadd.f32 %v3656, %v3679
        %v3696 = vadd.f32 %v3657, %v3679
        %v3697 = vadd.f32 %v3658, %v3679
        %v3698 = vadd.f32 %v3659, %v3679
        %v3699 = vadd.f32 %v3660, %v3679
        %v3700 = vadd.f32 %v3661, %v3679
        %v3701 = vadd.f32 %v3662, %v3679
        %v3702 = vadd.f32 %v3663, %v3679
        %v3703 = vadd.f32 %v3664, %v3679
        %v3704 = vadd.f32 %v3665, %v3679
        %v3705 = vadd.f32 %v3666, %v3679
        %v3706 = vadd.f32 %v3667, %v3679
        %v3707 = vadd.f32 %v3668, %v3679
        %v3708 = vadd.f32 %v3669, %v3679
        %v3709 = vadd.f32 %v3670, %v3679
        %v3710 = vadd.f32 %v3671, %v3679
        %v3711 = vadd.f32 %v3672, %v3679
        %v3712 = vadd.f32 %v3673, %v3679
        %v3713 = vmax.f32 %v3681, 0.0
        %v3714 = vmax.f32 %v3682, 0.0
        %v3715 = vmax.f32 %v3683, 0.0
        %v3716 = vmax.f32 %v3684, 0.0
        %v3717 = vmax.f32 %v3685, 0.0
        %v3718 = vmax.f32 %v3686, 0.0
        %v3719 = vmax.f32 %v3687, 0.0
        %v3720 = vmax.f32 %v3688, 0.0
        %v3721 = vmax.f32 %v3689, 0.0
        %v3722 = vmax.f32 %v3690, 0.0
        %v3723 = vmax.f32 %v3691, 0.0
        %v3724 = vmax.f32 %v3692, 0.0
        %v3725 = vmax.f32 %v3693, 0.0
        %v3726 = vmax.f32 %v3694, 0.0
        %v3727 = vmax.f32 %v3695, 0.0
        %v3728 = vmax.f32 %v3696, 0.0
        %v3729 = vmax.f32 %v3697, 0.0
        %v3730 = vmax.f32 %v3698, 0.0
        %v3731 = vmax.f32 %v3699, 0.0
        %v3732 = vmax.f32 %v3700, 0.0
        %v3733 = vmax.f32 %v3701, 0.0
        %v3734 = vmax.f32 %v3702, 0.0
        %v3735 = vmax.f32 %v3703, 0.0
        %v3736 = vmax.f32 %v3704, 0.0
        %v3737 = vmax.f32 %v3705, 0.0
        %v3738 = vmax.f32 %v3706, 0.0
        %v3739 = vmax.f32 %v3707, 0.0
        %v3740 = vmax.f32 %v3708, 0.0
        %v3741 = vmax.f32 %v3709, 0.0
        %v3742 = vmax.f32 %v3710, 0.0
        %v3743 = vmax.f32 %v3711, 0.0
        %v3744 = vmax.f32 %v3712, 0.0
        %v3745 = vpack.c.bf16 %v3714, %v3713
        %v3746 = vpack.c.bf16 %v3716, %v3715
        %v3747 = vpack.c.bf16 %v3718, %v3717
        %v3748 = vpack.c.bf16 %v3720, %v3719
        %v3749 = vpack.c.bf16 %v3722, %v3721
        %v3750 = vpack.c.bf16 %v3724, %v3723
        %v3751 = vpack.c.bf16 %v3726, %v3725
        %v3752 = vpack.c.bf16 %v3728, %v3727
        %v3753 = vpack.c.bf16 %v3730, %v3729
        %v3754 = vpack.c.bf16 %v3732, %v3731
        %v3755 = vpack.c.bf16 %v3734, %v3733
        %v3756 = vpack.c.bf16 %v3736, %v3735
        %v3757 = vpack.c.bf16 %v3738, %v3737
        %v3758 = vpack.c.bf16 %v3740, %v3739
        %v3759 = vpack.c.bf16 %v3742, %v3741
        %v3760 = vpack.c.bf16 %v3744, %v3743
        %v3761 = vld [vmem:[%s7] sm:$0xf]
        %v3762 = vld [vmem:[%s7 + $0x4] sm:$0xf]
        %v3763 = vld [vmem:[%s7 + $0x8] sm:$0xf]
        %v3764 = vld [vmem:[%s7 + $0xc] sm:$0xf]
        %v3769 = vunpack.c.l.b16 %v3761
        %v3770 = vunpack.c.l.b16 %v3762
        %v3771 = vunpack.c.l.b16 %v3763
        %v3772 = vunpack.c.l.b16 %v3764
        %v3773 = vpack.c.b16 %v3770, %v3769
        %v3774 = vpack.c.b16 %v3772, %v3771
        %v3778 = vsel %vm857, %v3745, 0
        %v3781 = vsel %vm857, %v3746, 0
        %v3784 = vsel %vm857, %v3747, 0
        %v3787 = vsel %vm857, %v3748, 0
        %v3790 = vsel %vm857, %v3749, 0
        %v3793 = vsel %vm857, %v3750, 0
        %v3796 = vsel %vm857, %v3751, 0
        %v3799 = vsel %vm857, %v3752, 0
        %v3802 = vsel %vm857, %v3753, 0
        %v3805 = vsel %vm857, %v3754, 0
        %v3808 = vsel %vm857, %v3755, 0
        %v3811 = vsel %vm857, %v3756, 0
        %v3814 = vsel %vm857, %v3757, 0
        %v3817 = vsel %vm857, %v3758, 0
        %v3820 = vsel %vm857, %v3759, 0
        %v3823 = vsel %vm857, %v3760, 0
        %3825 = vmatprep.subr.bf16.mxu0 0
        %3826 = vmatpush1.bf16.msra.mxu0 %v3773
        %3827 = vmatprep.subr.bf16.mxu0 0
        %3828 = vmatpush1.bf16.msra.mxu0 %v3774
        %3829 = vmatprep.subr.bf16.mxu0 0
        %3830 = vmatpush1.bf16.msra.mxu0 0
        %3831 = vmatprep.subr.bf16.mxu0 0
        %3832 = vmatpush1.bf16.msra.mxu0 0
        %3833 = vmatprep.subr.bf16.mxu0 0
        %3834 = vmatpush1.bf16.msra.mxu0 0
        %3835 = vmatprep.subr.bf16.mxu0 0
        %3836 = vmatpush1.bf16.msra.mxu0 0
        %3837 = vmatprep.subr.bf16.mxu0 0
        %3838 = vmatpush1.bf16.msra.mxu0 0
        %3839 = vmatprep.subr.bf16.mxu0 0
        %3840 = vmatpush1.bf16.msra.mxu0 0
        %3841 = vmatprep.subr.bf16.mxu0 0
        %3842 = vmatpush1.bf16.msra.mxu0 0
        %3843 = vmatprep.subr.bf16.mxu0 0
        %3844 = vmatpush1.bf16.msra.mxu0 0
        %3845 = vmatprep.subr.bf16.mxu0 0
        %3846 = vmatpush1.bf16.msra.mxu0 0
        %3847 = vmatprep.subr.bf16.mxu0 0
        %3848 = vmatpush1.bf16.msra.mxu0 0
        %3849 = vmatprep.subr.bf16.mxu0 0
        %3850 = vmatpush1.bf16.msra.mxu0 0
        %3851 = vmatprep.subr.bf16.mxu0 0
        %3852 = vmatpush1.bf16.msra.mxu0 0
        %3853 = vmatprep.subr.bf16.mxu0 0
        %3854 = vmatpush1.bf16.msra.mxu0 0
        %3855 = vmatprep.subr.bf16.mxu0 0
        %3856 = vmatpush1.bf16.msra.mxu0 0
        %3857 = vmatprep.mubr.bf16.mxu0 0
        %3858 = vmatmul.mubr.bf16.gmra.mrb[0].mxu0 %v3778
        %v3859 = vpop.f32.mrb[0].mxu0
        %v3860 = vadd.f32 0.0, %v3859
        %v3861 = vpop.f32.mrb[0].mxu0
        %v3862 = vpop.f32.mrb[0].mxu0
        %v3863 = vadd.f32 0.0, %v3862
        %v3864 = vpop.f32.mrb[0].mxu0
        %3865 = vmatprep.mubr.bf16.mxu0 0
        %3866 = vmatmul.mubr.bf16.gmra.mrb[0].mxu0 %v3781
        %v3867 = vpop.f32.mrb[0].mxu0
        %v3868 = vadd.f32 0.0, %v3867
        %v3869 = vpop.f32.mrb[0].mxu0
        %v3870 = vpop.f32.mrb[0].mxu0
        %v3871 = vadd.f32 0.0, %v3870
        %v3872 = vpop.f32.mrb[0].mxu0
        %3873 = vmatprep.mubr.bf16.mxu0 0
        %3874 = vmatmul.mubr.bf16.gmra.mrb[0].mxu0 %v3784
        %v3875 = vpop.f32.mrb[0].mxu0
        %v3876 = vadd.f32 0.0, %v3875
        %v3877 = vpop.f32.mrb[0].mxu0
        %v3878 = vpop.f32.mrb[0].mxu0
        %v3879 = vadd.f32 0.0, %v3878
        %v3880 = vpop.f32.mrb[0].mxu0
        %3881 = vmatprep.mubr.bf16.mxu0 0
        %3882 = vmatmul.mubr.bf16.gmra.mrb[0].mxu0 %v3787
        %v3883 = vpop.f32.mrb[0].mxu0
        %v3884 = vadd.f32 0.0, %v3883
        %v3885 = vpop.f32.mrb[0].mxu0
        %v3886 = vpop.f32.mrb[0].mxu0
        %v3887 = vadd.f32 0.0, %v3886
        %v3888 = vpop.f32.mrb[0].mxu0
        %3889 = vmatprep.mubr.bf16.mxu0 0
        %3890 = vmatmul.mubr.bf16.gmra.mrb[0].mxu0 %v3790
        %v3891 = vpop.f32.mrb[0].mxu0
        %v3892 = vadd.f32 0.0, %v3891
        %v3893 = vpop.f32.mrb[0].mxu0
        %v3894 = vpop.f32.mrb[0].mxu0
        %v3895 = vadd.f32 0.0, %v3894
        %v3896 = vpop.f32.mrb[0].mxu0
        %3897 = vmatprep.mubr.bf16.mxu0 0
        %3898 = vmatmul.mubr.bf16.gmra.mrb[0].mxu0 %v3793
        %v3899 = vpop.f32.mrb[0].mxu0
        %v3900 = vadd.f32 0.0, %v3899
        %v3901 = vpop.f32.mrb[0].mxu0
        %v3902 = vpop.f32.mrb[0].mxu0
        %v3903 = vadd.f32 0.0, %v3902
        %v3904 = vpop.f32.mrb[0].mxu0
        %3905 = vmatprep.mubr.bf16.mxu0 0
        %3906 = vmatmul.mubr.bf16.gmra.mrb[0].mxu0 %v3796
        %v3907 = vpop.f32.mrb[0].mxu0
        %v3908 = vadd.f32 0.0, %v3907
        %v3909 = vpop.f32.mrb[0].mxu0
        %v3910 = vpop.f32.mrb[0].mxu0
        %v3911 = vadd.f32 0.0, %v3910
        %v3912 = vpop.f32.mrb[0].mxu0
        %3913 = vmatprep.mubr.bf16.mxu0 0
        %3914 = vmatmul.mubr.bf16.gmra.mrb[0].mxu0 %v3799
        %v3915 = vpop.f32.mrb[0].mxu0
        %v3916 = vadd.f32 0.0, %v3915
        %v3917 = vpop.f32.mrb[0].mxu0
        %v3918 = vpop.f32.mrb[0].mxu0
        %v3919 = vadd.f32 0.0, %v3918
        %v3920 = vpop.f32.mrb[0].mxu0
        %3921 = vmatprep.mubr.bf16.mxu0 0
        %3922 = vmatmul.mubr.bf16.gmra.mrb[0].mxu0 %v3802
        %v3923 = vpop.f32.mrb[0].mxu0
        %v3924 = vadd.f32 0.0, %v3923
        %v3925 = vpop.f32.mrb[0].mxu0
        %v3926 = vpop.f32.mrb[0].mxu0
        %v3927 = vadd.f32 0.0, %v3926
        %v3928 = vpop.f32.mrb[0].mxu0
        %3929 = vmatprep.mubr.bf16.mxu0 0
        %3930 = vmatmul.mubr.bf16.gmra.mrb[0].mxu0 %v3805
        %v3931 = vpop.f32.mrb[0].mxu0
        %v3932 = vadd.f32 0.0, %v3931
        %v3933 = vpop.f32.mrb[0].mxu0
        %v3934 = vpop.f32.mrb[0].mxu0
        %v3935 = vadd.f32 0.0, %v3934
        %v3936 = vpop.f32.mrb[0].mxu0
        %3937 = vmatprep.mubr.bf16.mxu0 0
        %3938 = vmatmul.mubr.bf16.gmra.mrb[0].mxu0 %v3808
        %v3939 = vpop.f32.mrb[0].mxu0
        %v3940 = vadd.f32 0.0, %v3939
        %v3941 = vpop.f32.mrb[0].mxu0
        %v3942 = vpop.f32.mrb[0].mxu0
        %v3943 = vadd.f32 0.0, %v3942
        %v3944 = vpop.f32.mrb[0].mxu0
        %3945 = vmatprep.mubr.bf16.mxu0 0
        %3946 = vmatmul.mubr.bf16.gmra.mrb[0].mxu0 %v3811
        %v3947 = vpop.f32.mrb[0].mxu0
        %v3948 = vadd.f32 0.0, %v3947
        %v3949 = vpop.f32.mrb[0].mxu0
        %v3950 = vpop.f32.mrb[0].mxu0
        %v3951 = vadd.f32 0.0, %v3950
        %v3952 = vpop.f32.mrb[0].mxu0
        %3953 = vmatprep.mubr.bf16.mxu0 0
        %3954 = vmatmul.mubr.bf16.gmra.mrb[0].mxu0 %v3814
        %v3955 = vpop.f32.mrb[0].mxu0
        %v3956 = vadd.f32 0.0, %v3955
        %v3957 = vpop.f32.mrb[0].mxu0
        %v3958 = vpop.f32.mrb[0].mxu0
        %v3959 = vadd.f32 0.0, %v3958
        %v3960 = vpop.f32.mrb[0].mxu0
        %3961 = vmatprep.mubr.bf16.mxu0 0
        %3962 = vmatmul.mubr.bf16.gmra.mrb[0].mxu0 %v3817
        %v3963 = vpop.f32.mrb[0].mxu0
        %v3964 = vadd.f32 0.0, %v3963
        %v3965 = vpop.f32.mrb[0].mxu0
        %v3966 = vpop.f32.mrb[0].mxu0
        %v3967 = vadd.f32 0.0, %v3966
        %v3968 = vpop.f32.mrb[0].mxu0
        %3969 = vmatprep.mubr.bf16.mxu0 0
        %3970 = vmatmul.mubr.bf16.gmra.mrb[0].mxu0 %v3820
        %v3971 = vpop.f32.mrb[0].mxu0
        %v3972 = vadd.f32 0.0, %v3971
        %v3973 = vpop.f32.mrb[0].mxu0
        %v3974 = vpop.f32.mrb[0].mxu0
        %v3975 = vadd.f32 0.0, %v3974
        %v3976 = vpop.f32.mrb[0].mxu0
        %3977 = vmatprep.mubr.bf16.mxu0 0
        %3978 = vmatmul.mubr.bf16.gmra.mrb[0].mxu0 %v3823
        %v3979 = vpop.f32.mrb[0].mxu0
        %v3980 = vadd.f32 0.0, %v3979
        %v3981 = vpop.f32.mrb[0].mxu0
        %v3982 = vpop.f32.mrb[0].mxu0
        %v3983 = vadd.f32 0.0, %v3982
        %v3984 = vpop.f32.mrb[0].mxu0
        %3985 = vdwg.mxu0
        %v3986 = vld [vmem:[%s8] sm:$0x1]
        %v3988 = vlaneseq
        %v3989 = vshrl.u32 %v3988, 7
        %v3990 = vsub.s32 0, %v3989
        %v3991 = vrot.slane %v3986, %v3990
        %v3993 = vmul.f32 %v3860, %v3991
        %v3994 = vmul.f32 %v3863, %v3991
        %v3995 = vmul.f32 %v3868, %v3991
        %v3996 = vmul.f32 %v3871, %v3991
        %v3997 = vmul.f32 %v3876, %v3991
        %v3998 = vmul.f32 %v3879, %v3991
        %v3999 = vmul.f32 %v3884, %v3991
        %v4000 = vmul.f32 %v3887, %v3991
        %v4001 = vmul.f32 %v3892, %v3991
        %v4002 = vmul.f32 %v3895, %v3991
        %v4003 = vmul.f32 %v3900, %v3991
        %v4004 = vmul.f32 %v3903, %v3991
        %v4005 = vmul.f32 %v3908, %v3991
        %v4006 = vmul.f32 %v3911, %v3991
        %v4007 = vmul.f32 %v3916, %v3991
        %v4008 = vmul.f32 %v3919, %v3991
        %v4009 = vmul.f32 %v3924, %v3991
        %v4010 = vmul.f32 %v3927, %v3991
        %v4011 = vmul.f32 %v3932, %v3991
        %v4012 = vmul.f32 %v3935, %v3991
        %v4013 = vmul.f32 %v3940, %v3991
        %v4014 = vmul.f32 %v3943, %v3991
        %v4015 = vmul.f32 %v3948, %v3991
        %v4016 = vmul.f32 %v3951, %v3991
        %v4017 = vmul.f32 %v3956, %v3991
        %v4018 = vmul.f32 %v3959, %v3991
        %v4019 = vmul.f32 %v3964, %v3991
        %v4020 = vmul.f32 %v3967, %v3991
        %v4021 = vmul.f32 %v3972, %v3991
        %v4022 = vmul.f32 %v3975, %v3991
        %v4023 = vmul.f32 %v3980, %v3991
        %v4024 = vmul.f32 %v3983, %v3991
        %v4025 = vld [vmem:[%s9] sm:$0x1]
        %v4027 = vlaneseq
        %v4028 = vshrl.u32 %v4027, 7
        %v4029 = vsub.s32 0, %v4028
        %v4030 = vrot.slane %v4025, %v4029
        %v4032 = vadd.f32 %v3993, %v4030
        %v4033 = vadd.f32 %v3994, %v4030
        %v4034 = vadd.f32 %v3995, %v4030
        %v4035 = vadd.f32 %v3996, %v4030
        %v4036 = vadd.f32 %v3997, %v4030
        %v4037 = vadd.f32 %v3998, %v4030
        %v4038 = vadd.f32 %v3999, %v4030
        %v4039 = vadd.f32 %v4000, %v4030
        %v4040 = vadd.f32 %v4001, %v4030
        %v4041 = vadd.f32 %v4002, %v4030
        %v4042 = vadd.f32 %v4003, %v4030
        %v4043 = vadd.f32 %v4004, %v4030
        %v4044 = vadd.f32 %v4005, %v4030
        %v4045 = vadd.f32 %v4006, %v4030
        %v4046 = vadd.f32 %v4007, %v4030
        %v4047 = vadd.f32 %v4008, %v4030
        %v4048 = vadd.f32 %v4009, %v4030
        %v4049 = vadd.f32 %v4010, %v4030
        %v4050 = vadd.f32 %v4011, %v4030
        %v4051 = vadd.f32 %v4012, %v4030
        %v4052 = vadd.f32 %v4013, %v4030
        %v4053 = vadd.f32 %v4014, %v4030
        %v4054 = vadd.f32 %v4015, %v4030
        %v4055 = vadd.f32 %v4016, %v4030
        %v4056 = vadd.f32 %v4017, %v4030
        %v4057 = vadd.f32 %v4018, %v4030
        %v4058 = vadd.f32 %v4019, %v4030
        %v4059 = vadd.f32 %v4020, %v4030
        %v4060 = vadd.f32 %v4021, %v4030
        %v4061 = vadd.f32 %v4022, %v4030
        %v4062 = vadd.f32 %v4023, %v4030
        %v4063 = vadd.f32 %v4024, %v4030
        %v4064 = vmax.f32 %v4032, 0.0
        %v4065 = vmax.f32 %v4033, 0.0
        %v4066 = vmax.f32 %v4034, 0.0
        %v4067 = vmax.f32 %v4035, 0.0
        %v4068 = vmax.f32 %v4036, 0.0
        %v4069 = vmax.f32 %v4037, 0.0
        %v4070 = vmax.f32 %v4038, 0.0
        %v4071 = vmax.f32 %v4039, 0.0
        %v4072 = vmax.f32 %v4040, 0.0
        %v4073 = vmax.f32 %v4041, 0.0
        %v4074 = vmax.f32 %v4042, 0.0
        %v4075 = vmax.f32 %v4043, 0.0
        %v4076 = vmax.f32 %v4044, 0.0
        %v4077 = vmax.f32 %v4045, 0.0
        %v4078 = vmax.f32 %v4046, 0.0
        %v4079 = vmax.f32 %v4047, 0.0
        %v4080 = vmax.f32 %v4048, 0.0
        %v4081 = vmax.f32 %v4049, 0.0
        %v4082 = vmax.f32 %v4050, 0.0
        %v4083 = vmax.f32 %v4051, 0.0
        %v4084 = vmax.f32 %v4052, 0.0
        %v4085 = vmax.f32 %v4053, 0.0
        %v4086 = vmax.f32 %v4054, 0.0
        %v4087 = vmax.f32 %v4055, 0.0
        %v4088 = vmax.f32 %v4056, 0.0
        %v4089 = vmax.f32 %v4057, 0.0
        %v4090 = vmax.f32 %v4058, 0.0
        %v4091 = vmax.f32 %v4059, 0.0
        %v4092 = vmax.f32 %v4060, 0.0
        %v4093 = vmax.f32 %v4061, 0.0
        %v4094 = vmax.f32 %v4062, 0.0
        %v4095 = vmax.f32 %v4063, 0.0
        %v4096 = vadd.f32 %v4064, %v4065
        %v4097 = vadd.f32 %v4096, %v4066
        %v4098 = vadd.f32 %v4097, %v4067
        %v4099 = vadd.f32 %v4098, %v4068
        %v4100 = vadd.f32 %v4099, %v4069
        %v4101 = vadd.f32 %v4100, %v4070
        %v4102 = vadd.f32 %v4101, %v4071
        %v4103 = vadd.f32 %v4102, %v4072
        %v4104 = vadd.f32 %v4103, %v4073
        %v4105 = vadd.f32 %v4104, %v4074
        %v4106 = vadd.f32 %v4105, %v4075
        %v4107 = vadd.f32 %v4106, %v4076
        %v4108 = vadd.f32 %v4107, %v4077
        %v4109 = vadd.f32 %v4108, %v4078
        %v4110 = vadd.f32 %v4109, %v4079
        %v4111 = vadd.f32 %v4110, %v4080
        %v4112 = vadd.f32 %v4111, %v4081
        %v4113 = vadd.f32 %v4112, %v4082
        %v4114 = vadd.f32 %v4113, %v4083
        %v4115 = vadd.f32 %v4114, %v4084
        %v4116 = vadd.f32 %v4115, %v4085
        %v4117 = vadd.f32 %v4116, %v4086
        %v4118 = vadd.f32 %v4117, %v4087
        %v4119 = vadd.f32 %v4118, %v4088
        %v4120 = vadd.f32 %v4119, %v4089
        %v4121 = vadd.f32 %v4120, %v4090
        %v4122 = vadd.f32 %v4121, %v4091
        %v4123 = vadd.f32 %v4122, %v4092
        %v4124 = vadd.f32 %v4123, %v4093
        %v4125 = vadd.f32 %v4124, %v4094
        %v4126 = vadd.f32 %v4125, %v4095
        %v4127 = vrot.slane %v4126, 4
        %v4128 = vadd.f32 %v4126, %v4127
        %v4129 = vrot.slane %v4128, 2
        %v4130 = vadd.f32 %v4128, %v4129
        %v4131 = vrot.slane %v4130, 1
        %v4132 = vadd.f32 %v4130, %v4131
        %v4133 = vmul.f32 %v4132, 0.00390625
        %4135 = vrot.lane.b32.xlu0 %v4133, 1
        %v4136 = vpop.permute.xlu0 %4135
        %4138 = vrot.lane.b32.xlu0 %v4133, 127
        %v4139 = vpop.permute.xlu0 %4138
        %v4141 = vlaneseq
        %v4142 = vand.u32 %v4141, 127
        %vm4143 = vcmp.eq.s32.totalorder %v4142, 0
        %v4144 = vsel %vm4143, 0.0, %v4136
        %vm4145 = vcmp.eq.s32.totalorder %v4142, 127
        %v4146 = vsel %vm4145, 0.0, %v4139
        %s4147 = sld [smem:[#allocation3]]
        %v4148 = vstv %s4147
        %v4149 = vmul.f32 %v4148, %v4144
        %s4150 = sld [smem:[#allocation3 + $0x1]]
        %v4151 = vstv %s4150
        %v4152 = vmul.f32 %v4151, %v4133
        %v4153 = vadd.f32 %v4149, %v4152
        %s4154 = sld [smem:[#allocation3 + $0x2]]
        %v4155 = vstv %s4154
        %v4156 = vmul.f32 %v4155, %v4146
        %v4157 = vadd.f32 %v4153, %v4156
        %v4158 = vsub.f32 0.0, %v4157
        %v4159 = vmul.f32 %v4158, 1.442695
        %v4160 = vpow.pop %v4159
        %v4161 = vadd.f32 %v4160, 1.0
        %v4162 = vrcp.pop %v4161
        %v4163 = vmul.f32 1.0, %v4162
        %v4164 = vld [vmem:[%s479] sm:$0xff]
        %v4165 = vld [vmem:[%s479 + $0x8] sm:$0xff]
        %v4166 = vld [vmem:[%s479 + $0x10] sm:$0xff]
        %v4167 = vld [vmem:[%s479 + $0x18] sm:$0xff]
        %v4168 = vld [vmem:[%s479 + $0x20] sm:$0xff]
        %v4169 = vld [vmem:[%s479 + $0x28] sm:$0xff]
        %v4170 = vld [vmem:[%s479 + $0x30] sm:$0xff]
        %v4171 = vld [vmem:[%s479 + $0x38] sm:$0xff]
        %v4172 = vld [vmem:[%s479 + $0x40] sm:$0xff]
        %v4173 = vld [vmem:[%s479 + $0x48] sm:$0xff]
        %v4174 = vld [vmem:[%s479 + $0x50] sm:$0xff]
        %v4175 = vld [vmem:[%s479 + $0x58] sm:$0xff]
        %v4176 = vld [vmem:[%s479 + $0x60] sm:$0xff]
        %v4177 = vld [vmem:[%s479 + $0x68] sm:$0xff]
        %v4178 = vld [vmem:[%s479 + $0x70] sm:$0xff]
        %v4179 = vld [vmem:[%s479 + $0x78] sm:$0xff]
        %v4180 = vld [vmem:[%s479 + $0x80] sm:$0xff]
        %v4181 = vld [vmem:[%s479 + $0x88] sm:$0xff]
        %v4182 = vld [vmem:[%s479 + $0x90] sm:$0xff]
        %v4183 = vld [vmem:[%s479 + $0x98] sm:$0xff]
        %v4184 = vld [vmem:[%s479 + $0xa0] sm:$0xff]
        %v4185 = vld [vmem:[%s479 + $0xa8] sm:$0xff]
        %v4186 = vld [vmem:[%s479 + $0xb0] sm:$0xff]
        %v4187 = vld [vmem:[%s479 + $0xb8] sm:$0xff]
        %v4188 = vld [vmem:[%s479 + $0xc0] sm:$0xff]
        %v4189 = vld [vmem:[%s479 + $0xc8] sm:$0xff]
        %v4190 = vld [vmem:[%s479 + $0xd0] sm:$0xff]
        %v4191 = vld [vmem:[%s479 + $0xd8] sm:$0xff]
        %v4192 = vld [vmem:[%s479 + $0xe0] sm:$0xff]
        %v4193 = vld [vmem:[%s479 + $0xe8] sm:$0xff]
        %v4194 = vld [vmem:[%s479 + $0xf0] sm:$0xff]
        %v4195 = vld [vmem:[%s479 + $0xf8] sm:$0xff]
        %v4196 = vpack.c.bf16 %v4165, %v4164
        %v4197 = vpack.c.bf16 %v4167, %v4166
        %v4198 = vpack.c.bf16 %v4169, %v4168
        %v4199 = vpack.c.bf16 %v4171, %v4170
        %v4200 = vpack.c.bf16 %v4173, %v4172
        %v4201 = vpack.c.bf16 %v4175, %v4174
        %v4202 = vpack.c.bf16 %v4177, %v4176
        %v4203 = vpack.c.bf16 %v4179, %v4178
        %v4204 = vpack.c.bf16 %v4181, %v4180
        %v4205 = vpack.c.bf16 %v4183, %v4182
        %v4206 = vpack.c.bf16 %v4185, %v4184
        %v4207 = vpack.c.bf16 %v4187, %v4186
        %v4208 = vpack.c.bf16 %v4189, %v4188
        %v4209 = vpack.c.bf16 %v4191, %v4190
        %v4210 = vpack.c.bf16 %v4193, %v4192
        %v4211 = vpack.c.bf16 %v4195, %v4194
        %v4212 = vld [vmem:[%s11] sm:$0xf]
        %v4213 = vld [vmem:[%s11 + $0x4] sm:$0xf]
        %v4216 = vunpack.c.l.b16 %v4212
        %v4217 = vunpack.c.l.b16 %v4213
        %v4218 = vpack.c.b16 %v4217, %v4216
        %v4221 = vsel %vm537, %v4196, 0
        %v4224 = vsel %vm537, %v4197, 0
        %v4227 = vsel %vm537, %v4198, 0
        %v4230 = vsel %vm537, %v4199, 0
        %v4233 = vsel %vm537, %v4200, 0
        %v4236 = vsel %vm537, %v4201, 0
        %v4239 = vsel %vm537, %v4202, 0
        %v4242 = vsel %vm537, %v4203, 0
        %v4245 = vsel %vm537, %v4204, 0
        %v4248 = vsel %vm537, %v4205, 0
        %v4251 = vsel %vm537, %v4206, 0
        %v4254 = vsel %vm537, %v4207, 0
        %v4257 = vsel %vm537, %v4208, 0
        %v4260 = vsel %vm537, %v4209, 0
        %v4263 = vsel %vm537, %v4210, 0
        %v4266 = vsel %vm537, %v4211, 0
        %4268 = vmatprep.subr.bf16.mxu0 0
        %4269 = vmatpush1.bf16.msra.mxu0 %v4218
        %4270 = vmatprep.subr.bf16.mxu0 0
        %4271 = vmatpush1.bf16.msra.mxu0 0
        %4272 = vmatprep.subr.bf16.mxu0 0
        %4273 = vmatpush1.bf16.msra.mxu0 0
        %4274 = vmatprep.subr.bf16.mxu0 0
        %4275 = vmatpush1.bf16.msra.mxu0 0
        %4276 = vmatprep.subr.bf16.mxu0 0
        %4277 = vmatpush1.bf16.msra.mxu0 0
        %4278 = vmatprep.subr.bf16.mxu0 0
        %4279 = vmatpush1.bf16.msra.mxu0 0
        %4280 = vmatprep.subr.bf16.mxu0 0
        %4281 = vmatpush1.bf16.msra.mxu0 0
        %4282 = vmatprep.subr.bf16.mxu0 0
        %4283 = vmatpush1.bf16.msra.mxu0 0
        %4284 = vmatprep.subr.bf16.mxu0 0
        %4285 = vmatpush1.bf16.msra.mxu0 0
        %4286 = vmatprep.subr.bf16.mxu0 0
        %4287 = vmatpush1.bf16.msra.mxu0 0
        %4288 = vmatprep.subr.bf16.mxu0 0
        %4289 = vmatpush1.bf16.msra.mxu0 0
        %4290 = vmatprep.subr.bf16.mxu0 0
        %4291 = vmatpush1.bf16.msra.mxu0 0
        %4292 = vmatprep.subr.bf16.mxu0 0
        %4293 = vmatpush1.bf16.msra.mxu0 0
        %4294 = vmatprep.subr.bf16.mxu0 0
        %4295 = vmatpush1.bf16.msra.mxu0 0
        %4296 = vmatprep.subr.bf16.mxu0 0
        %4297 = vmatpush1.bf16.msra.mxu0 0
        %4298 = vmatprep.subr.bf16.mxu0 0
        %4299 = vmatpush1.bf16.msra.mxu0 0
        %4300 = vmatprep.mubr.bf16.mxu0 0
        %4301 = vmatmul.mubr.bf16.gmra.mrb[0].mxu0 %v4221
        %v4302 = vpop.f32.mrb[0].mxu0
        %v4303 = vadd.f32 0.0, %v4302
        %v4304 = vpop.f32.mrb[0].mxu0
        %v4305 = vpop.f32.mrb[0].mxu0
        %v4306 = vadd.f32 0.0, %v4305
        %v4307 = vpop.f32.mrb[0].mxu0
        %4308 = vmatprep.mubr.bf16.mxu0 0
        %4309 = vmatmul.mubr.bf16.gmra.mrb[0].mxu0 %v4224
        %v4310 = vpop.f32.mrb[0].mxu0
        %v4311 = vadd.f32 0.0, %v4310
        %v4312 = vpop.f32.mrb[0].mxu0
        %v4313 = vpop.f32.mrb[0].mxu0
        %v4314 = vadd.f32 0.0, %v4313
        %v4315 = vpop.f32.mrb[0].mxu0
        %4316 = vmatprep.mubr.bf16.mxu0 0
        %4317 = vmatmul.mubr.bf16.gmra.mrb[0].mxu0 %v4227
        %v4318 = vpop.f32.mrb[0].mxu0
        %v4319 = vadd.f32 0.0, %v4318
        %v4320 = vpop.f32.mrb[0].mxu0
        %v4321 = vpop.f32.mrb[0].mxu0
        %v4322 = vadd.f32 0.0, %v4321
        %v4323 = vpop.f32.mrb[0].mxu0
        %4324 = vmatprep.mubr.bf16.mxu0 0
        %4325 = vmatmul.mubr.bf16.gmra.mrb[0].mxu0 %v4230
        %v4326 = vpop.f32.mrb[0].mxu0
        %v4327 = vadd.f32 0.0, %v4326
        %v4328 = vpop.f32.mrb[0].mxu0
        %v4329 = vpop.f32.mrb[0].mxu0
        %v4330 = vadd.f32 0.0, %v4329
        %v4331 = vpop.f32.mrb[0].mxu0
        %4332 = vmatprep.mubr.bf16.mxu0 0
        %4333 = vmatmul.mubr.bf16.gmra.mrb[0].mxu0 %v4233
        %v4334 = vpop.f32.mrb[0].mxu0
        %v4335 = vadd.f32 0.0, %v4334
        %v4336 = vpop.f32.mrb[0].mxu0
        %v4337 = vpop.f32.mrb[0].mxu0
        %v4338 = vadd.f32 0.0, %v4337
        %v4339 = vpop.f32.mrb[0].mxu0
        %4340 = vmatprep.mubr.bf16.mxu0 0
        %4341 = vmatmul.mubr.bf16.gmra.mrb[0].mxu0 %v4236
        %v4342 = vpop.f32.mrb[0].mxu0
        %v4343 = vadd.f32 0.0, %v4342
        %v4344 = vpop.f32.mrb[0].mxu0
        %v4345 = vpop.f32.mrb[0].mxu0
        %v4346 = vadd.f32 0.0, %v4345
        %v4347 = vpop.f32.mrb[0].mxu0
        %4348 = vmatprep.mubr.bf16.mxu0 0
        %4349 = vmatmul.mubr.bf16.gmra.mrb[0].mxu0 %v4239
        %v4350 = vpop.f32.mrb[0].mxu0
        %v4351 = vadd.f32 0.0, %v4350
        %v4352 = vpop.f32.mrb[0].mxu0
        %v4353 = vpop.f32.mrb[0].mxu0
        %v4354 = vadd.f32 0.0, %v4353
        %v4355 = vpop.f32.mrb[0].mxu0
        %4356 = vmatprep.mubr.bf16.mxu0 0
        %4357 = vmatmul.mubr.bf16.gmra.mrb[0].mxu0 %v4242
        %v4358 = vpop.f32.mrb[0].mxu0
        %v4359 = vadd.f32 0.0, %v4358
        %v4360 = vpop.f32.mrb[0].mxu0
        %v4361 = vpop.f32.mrb[0].mxu0
        %v4362 = vadd.f32 0.0, %v4361
        %v4363 = vpop.f32.mrb[0].mxu0
        %4364 = vmatprep.mubr.bf16.mxu0 0
        %4365 = vmatmul.mubr.bf16.gmra.mrb[0].mxu0 %v4245
        %v4366 = vpop.f32.mrb[0].mxu0
        %v4367 = vadd.f32 0.0, %v4366
        %v4368 = vpop.f32.mrb[0].mxu0
        %v4369 = vpop.f32.mrb[0].mxu0
        %v4370 = vadd.f32 0.0, %v4369
        %v4371 = vpop.f32.mrb[0].mxu0
        %4372 = vmatprep.mubr.bf16.mxu0 0
        %4373 = vmatmul.mubr.bf16.gmra.mrb[0].mxu0 %v4248
        %v4374 = vpop.f32.mrb[0].mxu0
        %v4375 = vadd.f32 0.0, %v4374
        %v4376 = vpop.f32.mrb[0].mxu0
        %v4377 = vpop.f32.mrb[0].mxu0
        %v4378 = vadd.f32 0.0, %v4377
        %v4379 = vpop.f32.mrb[0].mxu0
        %4380 = vmatprep.mubr.bf16.mxu0 0
        %4381 = vmatmul.mubr.bf16.gmra.mrb[0].mxu0 %v4251
        %v4382 = vpop.f32.mrb[0].mxu0
        %v4383 = vadd.f32 0.0, %v4382
        %v4384 = vpop.f32.mrb[0].mxu0
        %v4385 = vpop.f32.mrb[0].mxu0
        %v4386 = vadd.f32 0.0, %v4385
        %v4387 = vpop.f32.mrb[0].mxu0
        %4388 = vmatprep.mubr.bf16.mxu0 0
        %4389 = vmatmul.mubr.bf16.gmra.mrb[0].mxu0 %v4254
        %v4390 = vpop.f32.mrb[0].mxu0
        %v4391 = vadd.f32 0.0, %v4390
        %v4392 = vpop.f32.mrb[0].mxu0
        %v4393 = vpop.f32.mrb[0].mxu0
        %v4394 = vadd.f32 0.0, %v4393
        %v4395 = vpop.f32.mrb[0].mxu0
        %4396 = vmatprep.mubr.bf16.mxu0 0
        %4397 = vmatmul.mubr.bf16.gmra.mrb[0].mxu0 %v4257
        %v4398 = vpop.f32.mrb[0].mxu0
        %v4399 = vadd.f32 0.0, %v4398
        %v4400 = vpop.f32.mrb[0].mxu0
        %v4401 = vpop.f32.mrb[0].mxu0
        %v4402 = vadd.f32 0.0, %v4401
        %v4403 = vpop.f32.mrb[0].mxu0
        %4404 = vmatprep.mubr.bf16.mxu0 0
        %4405 = vmatmul.mubr.bf16.gmra.mrb[0].mxu0 %v4260
        %v4406 = vpop.f32.mrb[0].mxu0
        %v4407 = vadd.f32 0.0, %v4406
        %v4408 = vpop.f32.mrb[0].mxu0
        %v4409 = vpop.f32.mrb[0].mxu0
        %v4410 = vadd.f32 0.0, %v4409
        %v4411 = vpop.f32.mrb[0].mxu0
        %4412 = vmatprep.mubr.bf16.mxu0 0
        %4413 = vmatmul.mubr.bf16.gmra.mrb[0].mxu0 %v4263
        %v4414 = vpop.f32.mrb[0].mxu0
        %v4415 = vadd.f32 0.0, %v4414
        %v4416 = vpop.f32.mrb[0].mxu0
        %v4417 = vpop.f32.mrb[0].mxu0
        %v4418 = vadd.f32 0.0, %v4417
        %v4419 = vpop.f32.mrb[0].mxu0
        %4420 = vmatprep.mubr.bf16.mxu0 0
        %4421 = vmatmul.mubr.bf16.gmra.mrb[0].mxu0 %v4266
        %v4422 = vpop.f32.mrb[0].mxu0
        %v4423 = vadd.f32 0.0, %v4422
        %v4424 = vpop.f32.mrb[0].mxu0
        %v4425 = vpop.f32.mrb[0].mxu0
        %v4426 = vadd.f32 0.0, %v4425
        %v4427 = vpop.f32.mrb[0].mxu0
        %4428 = vdwg.mxu0
        %v4429 = vld [vmem:[%s12] sm:$0x1]
        %v4431 = vlaneseq
        %v4432 = vshrl.u32 %v4431, 7
        %v4433 = vsub.s32 0, %v4432
        %v4434 = vrot.slane %v4429, %v4433
        %v4436 = vmul.f32 %v4303, %v4434
        %v4437 = vmul.f32 %v4306, %v4434
        %v4438 = vmul.f32 %v4311, %v4434
        %v4439 = vmul.f32 %v4314, %v4434
        %v4440 = vmul.f32 %v4319, %v4434
        %v4441 = vmul.f32 %v4322, %v4434
        %v4442 = vmul.f32 %v4327, %v4434
        %v4443 = vmul.f32 %v4330, %v4434
        %v4444 = vmul.f32 %v4335, %v4434
        %v4445 = vmul.f32 %v4338, %v4434
        %v4446 = vmul.f32 %v4343, %v4434
        %v4447 = vmul.f32 %v4346, %v4434
        %v4448 = vmul.f32 %v4351, %v4434
        %v4449 = vmul.f32 %v4354, %v4434
        %v4450 = vmul.f32 %v4359, %v4434
        %v4451 = vmul.f32 %v4362, %v4434
        %v4452 = vmul.f32 %v4367, %v4434
        %v4453 = vmul.f32 %v4370, %v4434
        %v4454 = vmul.f32 %v4375, %v4434
        %v4455 = vmul.f32 %v4378, %v4434
        %v4456 = vmul.f32 %v4383, %v4434
        %v4457 = vmul.f32 %v4386, %v4434
        %v4458 = vmul.f32 %v4391, %v4434
        %v4459 = vmul.f32 %v4394, %v4434
        %v4460 = vmul.f32 %v4399, %v4434
        %v4461 = vmul.f32 %v4402, %v4434
        %v4462 = vmul.f32 %v4407, %v4434
        %v4463 = vmul.f32 %v4410, %v4434
        %v4464 = vmul.f32 %v4415, %v4434
        %v4465 = vmul.f32 %v4418, %v4434
        %v4466 = vmul.f32 %v4423, %v4434
        %v4467 = vmul.f32 %v4426, %v4434
        %v4468 = vld [vmem:[%s13] sm:$0x1]
        %v4470 = vlaneseq
        %v4471 = vshrl.u32 %v4470, 7
        %v4472 = vsub.s32 0, %v4471
        %v4473 = vrot.slane %v4468, %v4472
        %v4475 = vadd.f32 %v4436, %v4473
        %v4476 = vadd.f32 %v4437, %v4473
        %v4477 = vadd.f32 %v4438, %v4473
        %v4478 = vadd.f32 %v4439, %v4473
        %v4479 = vadd.f32 %v4440, %v4473
        %v4480 = vadd.f32 %v4441, %v4473
        %v4481 = vadd.f32 %v4442, %v4473
        %v4482 = vadd.f32 %v4443, %v4473
        %v4483 = vadd.f32 %v4444, %v4473
        %v4484 = vadd.f32 %v4445, %v4473
        %v4485 = vadd.f32 %v4446, %v4473
        %v4486 = vadd.f32 %v4447, %v4473
        %v4487 = vadd.f32 %v4448, %v4473
        %v4488 = vadd.f32 %v4449, %v4473
        %v4489 = vadd.f32 %v4450, %v4473
        %v4490 = vadd.f32 %v4451, %v4473
        %v4491 = vadd.f32 %v4452, %v4473
        %v4492 = vadd.f32 %v4453, %v4473
        %v4493 = vadd.f32 %v4454, %v4473
        %v4494 = vadd.f32 %v4455, %v4473
        %v4495 = vadd.f32 %v4456, %v4473
        %v4496 = vadd.f32 %v4457, %v4473
        %v4497 = vadd.f32 %v4458, %v4473
        %v4498 = vadd.f32 %v4459, %v4473
        %v4499 = vadd.f32 %v4460, %v4473
        %v4500 = vadd.f32 %v4461, %v4473
        %v4501 = vadd.f32 %v4462, %v4473
        %v4502 = vadd.f32 %v4463, %v4473
        %v4503 = vadd.f32 %v4464, %v4473
        %v4504 = vadd.f32 %v4465, %v4473
        %v4505 = vadd.f32 %v4466, %v4473
        %v4506 = vadd.f32 %v4467, %v4473
        %v4507 = vlaneseq
        %v4508 = vshrl.u32 %v4507, 7
        %v4509 = vsub.s32 0, %v4508
        %v4510 = vrot.slane %v4163, %v4509
        %v4511 = vmul.f32 %v4064, %v4510
        %v4512 = vmul.f32 %v4065, %v4510
        %v4513 = vmul.f32 %v4066, %v4510
        %v4514 = vmul.f32 %v4067, %v4510
        %v4515 = vmul.f32 %v4068, %v4510
        %v4516 = vmul.f32 %v4069, %v4510
        %v4517 = vmul.f32 %v4070, %v4510
        %v4518 = vmul.f32 %v4071, %v4510
        %v4519 = vmul.f32 %v4072, %v4510
        %v4520 = vmul.f32 %v4073, %v4510
        %v4521 = vmul.f32 %v4074, %v4510
        %v4522 = vmul.f32 %v4075, %v4510
        %v4523 = vmul.f32 %v4076, %v4510
        %v4524 = vmul.f32 %v4077, %v4510
        %v4525 = vmul.f32 %v4078, %v4510
        %v4526 = vmul.f32 %v4079, %v4510
        %v4527 = vmul.f32 %v4080, %v4510
        %v4528 = vmul.f32 %v4081, %v4510
        %v4529 = vmul.f32 %v4082, %v4510
        %v4530 = vmul.f32 %v4083, %v4510
        %v4531 = vmul.f32 %v4084, %v4510
        %v4532 = vmul.f32 %v4085, %v4510
        %v4533 = vmul.f32 %v4086, %v4510
        %v4534 = vmul.f32 %v4087, %v4510
        %v4535 = vmul.f32 %v4088, %v4510
        %v4536 = vmul.f32 %v4089, %v4510
        %v4537 = vmul.f32 %v4090, %v4510
        %v4538 = vmul.f32 %v4091, %v4510
        %v4539 = vmul.f32 %v4092, %v4510
        %v4540 = vmul.f32 %v4093, %v4510
        %v4541 = vmul.f32 %v4094, %v4510
        %v4542 = vmul.f32 %v4095, %v4510
        %v4543 = vadd.f32 %v4511, %v4475
        %v4544 = vadd.f32 %v4512, %v4476
        %v4545 = vadd.f32 %v4513, %v4477
        %v4546 = vadd.f32 %v4514, %v4478
        %v4547 = vadd.f32 %v4515, %v4479
        %v4548 = vadd.f32 %v4516, %v4480
        %v4549 = vadd.f32 %v4517, %v4481
        %v4550 = vadd.f32 %v4518, %v4482
        %v4551 = vadd.f32 %v4519, %v4483
        %v4552 = vadd.f32 %v4520, %v4484
        %v4553 = vadd.f32 %v4521, %v4485
        %v4554 = vadd.f32 %v4522, %v4486
        %v4555 = vadd.f32 %v4523, %v4487
        %v4556 = vadd.f32 %v4524, %v4488
        %v4557 = vadd.f32 %v4525, %v4489
        %v4558 = vadd.f32 %v4526, %v4490
        %v4559 = vadd.f32 %v4527, %v4491
        %v4560 = vadd.f32 %v4528, %v4492
        %v4561 = vadd.f32 %v4529, %v4493
        %v4562 = vadd.f32 %v4530, %v4494
        %v4563 = vadd.f32 %v4531, %v4495
        %v4564 = vadd.f32 %v4532, %v4496
        %v4565 = vadd.f32 %v4533, %v4497
        %v4566 = vadd.f32 %v4534, %v4498
        %v4567 = vadd.f32 %v4535, %v4499
        %v4568 = vadd.f32 %v4536, %v4500
        %v4569 = vadd.f32 %v4537, %v4501
        %v4570 = vadd.f32 %v4538, %v4502
        %v4571 = vadd.f32 %v4539, %v4503
        %v4572 = vadd.f32 %v4540, %v4504
        %v4573 = vadd.f32 %v4541, %v4505
        %v4574 = vadd.f32 %v4542, %v4506
        %v4575 = vmax.f32 %v4543, 0.0
        %v4576 = vmax.f32 %v4544, 0.0
        %v4577 = vmax.f32 %v4545, 0.0
        %v4578 = vmax.f32 %v4546, 0.0
        %v4579 = vmax.f32 %v4547, 0.0
        %v4580 = vmax.f32 %v4548, 0.0
        %v4581 = vmax.f32 %v4549, 0.0
        %v4582 = vmax.f32 %v4550, 0.0
        %v4583 = vmax.f32 %v4551, 0.0
        %v4584 = vmax.f32 %v4552, 0.0
        %v4585 = vmax.f32 %v4553, 0.0
        %v4586 = vmax.f32 %v4554, 0.0
        %v4587 = vmax.f32 %v4555, 0.0
        %v4588 = vmax.f32 %v4556, 0.0
        %v4589 = vmax.f32 %v4557, 0.0
        %v4590 = vmax.f32 %v4558, 0.0
        %v4591 = vmax.f32 %v4559, 0.0
        %v4592 = vmax.f32 %v4560, 0.0
        %v4593 = vmax.f32 %v4561, 0.0
        %v4594 = vmax.f32 %v4562, 0.0
        %v4595 = vmax.f32 %v4563, 0.0
        %v4596 = vmax.f32 %v4564, 0.0
        %v4597 = vmax.f32 %v4565, 0.0
        %v4598 = vmax.f32 %v4566, 0.0
        %v4599 = vmax.f32 %v4567, 0.0
        %v4600 = vmax.f32 %v4568, 0.0
        %v4601 = vmax.f32 %v4569, 0.0
        %v4602 = vmax.f32 %v4570, 0.0
        %v4603 = vmax.f32 %v4571, 0.0
        %v4604 = vmax.f32 %v4572, 0.0
        %v4605 = vmax.f32 %v4573, 0.0
        %v4606 = vmax.f32 %v4574, 0.0
        %4607 = vst [vmem:[%s474] sm:$0xff] %v4575
        %4608 = vst [vmem:[%s474 + $0x8] sm:$0xff] %v4576
        %4609 = vst [vmem:[%s474 + $0x10] sm:$0xff] %v4577
        %4610 = vst [vmem:[%s474 + $0x18] sm:$0xff] %v4578
        %4611 = vst [vmem:[%s474 + $0x20] sm:$0xff] %v4579
        %4612 = vst [vmem:[%s474 + $0x28] sm:$0xff] %v4580
        %4613 = vst [vmem:[%s474 + $0x30] sm:$0xff] %v4581
        %4614 = vst [vmem:[%s474 + $0x38] sm:$0xff] %v4582
        %4615 = vst [vmem:[%s474 + $0x40] sm:$0xff] %v4583
        %4616 = vst [vmem:[%s474 + $0x48] sm:$0xff] %v4584
        %4617 = vst [vmem:[%s474 + $0x50] sm:$0xff] %v4585
        %4618 = vst [vmem:[%s474 + $0x58] sm:$0xff] %v4586
        %4619 = vst [vmem:[%s474 + $0x60] sm:$0xff] %v4587
        %4620 = vst [vmem:[%s474 + $0x68] sm:$0xff] %v4588
        %4621 = vst [vmem:[%s474 + $0x70] sm:$0xff] %v4589
        %4622 = vst [vmem:[%s474 + $0x78] sm:$0xff] %v4590
        %4623 = vst [vmem:[%s474 + $0x80] sm:$0xff] %v4591
        %4624 = vst [vmem:[%s474 + $0x88] sm:$0xff] %v4592
        %4625 = vst [vmem:[%s474 + $0x90] sm:$0xff] %v4593
        %4626 = vst [vmem:[%s474 + $0x98] sm:$0xff] %v4594
        %4627 = vst [vmem:[%s474 + $0xa0] sm:$0xff] %v4595
        %4628 = vst [vmem:[%s474 + $0xa8] sm:$0xff] %v4596
        %4629 = vst [vmem:[%s474 + $0xb0] sm:$0xff] %v4597
        %4630 = vst [vmem:[%s474 + $0xb8] sm:$0xff] %v4598
        %4631 = vst [vmem:[%s474 + $0xc0] sm:$0xff] %v4599
        %4632 = vst [vmem:[%s474 + $0xc8] sm:$0xff] %v4600
        %4633 = vst [vmem:[%s474 + $0xd0] sm:$0xff] %v4601
        %4634 = vst [vmem:[%s474 + $0xd8] sm:$0xff] %v4602
        %4635 = vst [vmem:[%s474 + $0xe0] sm:$0xff] %v4603
        %4636 = vst [vmem:[%s474 + $0xe8] sm:$0xff] %v4604
        %4637 = vst [vmem:[%s474 + $0xf0] sm:$0xff] %v4605
        %4638 = vst [vmem:[%s474 + $0xf8] sm:$0xff] %v4606
        %s4639 = sand.u32 %s336, 1
        %s4640 = scalar_lea.sflag [#allocation4], %s4639
        %s4641 = sand.u32 %s336, 1
        %s4642 = smul.addr %s4641, 256
        %s4643 = scalar_lea.vmem [#allocation6], %s4642
        // Predicated region
        $region81: #{tpu_custom_call.1} parent=75 // pred_check
          %p4644 = pneg %p346
        $region82: #{tpu_custom_call.1} parent=75 // pred_check_branch
          %4646 = sbr.rel (%p4644) target = $region84
        $region83: #{tpu_custom_call.1} parent=75 // pred_region
          %s4648 = ssub.s32 4096, 4096
          %4649 = vsyncadd %s4640, %s4648
          %s4650 = smul.addr %s29, 32
          %s4651 = smul.addr %s4650, 128
          %s4652 = scalar_lea.hbm %s14, %s4651
          %s4653 = sshll.u32 %s4643, 4
          %s4654 = int_to_ptr.vmem [resolvable:$true] %s4653
          %4659 = dma.vmem_to_hbm [thread:$0]  %s4654, 4096, %s4652, %s4640, 128, 128, 8
        $region84: #{tpu_custom_call.1} parent=75 // pred_fallthru
          _
      $region76: #{tpu_custom_call.1} parent=5 // pred_fallthru
        _
      %p4660 = scmp.le.s32.totalorder 2, %s24
      // Predicated region
      $region85: #{tpu_custom_call.1} parent=5 // pred_check
        %p4661 = pneg %p4660
      $region86: #{tpu_custom_call.1} parent=5 // pred_check_branch
        %4663 = sbr.rel (%p4661) target = $region88
      $region87: #{tpu_custom_call.1} parent=5 // pred_region
        %s4664 = ssub.s32 %s24, 2
        // Predicated region
        $region89: #{tpu_custom_call.1} parent=87 // pred_check
          %p4665 = pneg %p352
        $region90: #{tpu_custom_call.1} parent=87 // pred_check_branch
          %4667 = sbr.rel (%p4665) target = $region92
        $region91: #{tpu_custom_call.1} parent=87 // pred_region
          %s4668 = sand.u32 %s337, 1
          %s4669 = scalar_lea.sflag [#allocation4], %s4668
          %s4670 = sand.u32 %s337, 1
          %s4671 = smul.addr %s4670, 256
          %s4672 = scalar_lea.vmem [#allocation6], %s4671
          %4673 = dma.done %s4669, 4096
        $region92: #{tpu_custom_call.1} parent=87 // pred_fallthru
          _
      $region88: #{tpu_custom_call.1} parent=5 // pred_fallthru
        _
    $region6: #{tpu_custom_call.1} parent=1 // loop_footer
      %s28 = sadd.s32 1, %s24
    $region7: #{tpu_custom_call.1} parent=1 // loop_footer_branch
      %23 = sbr.rel target = $region3
    $region8: #{tpu_custom_call.1} parent=1 // loop_exit
      _
    %4674 = vsyncpa [#allocation4], 1
    %s4675 = scalar_lea.sflag [#allocation4], 1
    %4676 = vsyncpa %s4675, 1
    %4677 = vsyncpa [#allocation5], 1
    %s4678 = scalar_lea.sflag [#allocation5], 1
    %4679 = vsyncpa %s4678, 1

</llo_original>
